<compile_context>
chip_gen: v7x
topology: tpu7x:2x2x1
jax: 0.10.0
libtpu: 0.0.40
codegen_flags: <defaults>
</compile_context>

<pallas_src>
import functools

import jax
import jax.numpy as jnp
from jax import lax
from jax.experimental import pallas as pl
from jax.experimental.pallas import tpu as pltpu

EPS = 1e-5
_VMEM_LIMIT = 32 * 1024 * 1024  # safe on v5e / v6e / v7x (v7x physical = 64 MiB)


# ----------------------------- kernel helpers --------------------------------
def _conv_taps(pad_ref, w_ref, Q, Wp):
    """3x3 conv over the flattened zero-padded image held in `pad_ref`.

    pad_ref : (Cin, R) bf16 VMEM scratch, canonical padded-flat layout
              (padded pixel (i, j) at column i*Wp + j, R = (H+2)*Wp + 2).
    w_ref   : (9, Cout, Cin) bf16 taps, tap = ky*3 + kx.
    Returns a (Cout, Q) f32 accumulator in "q-layout": output pixel (h, w) at
    column h*Wp + w; the last 2 columns of every row are junk (masked later).
    Every tap operand is a contiguous lane-window slice of the scratch ref, so
    there is no per-tap reshape / relayout.
    """
    cout = w_ref.shape[1]
    acc = jnp.zeros((cout, Q), jnp.float32)
    for tap in range(9):
        dy, dx = divmod(tap, 3)
        off = dy * Wp + dx
        acc = acc + jnp.dot(w_ref[tap], pad_ref[:, off:off + Q],
                            preferred_element_type=jnp.float32)
    return acc


def _accum_stats(acc, mask, ssum_ref, ssq_ref):
    """One-pass BN statistics: accumulate sum and sum-of-squares (junk masked)."""
    accv = acc * mask
    ssum_ref[...] += jnp.sum(accv, axis=1, keepdims=True)
    ssq_ref[...] += jnp.sum(accv * accv, axis=1, keepdims=True)


# --------------------------------- kernels ------------------------------------
def _conv1_kernel(x_ref, w_ref, mask_ref, h_ref, ssum_ref, ssq_ref, pad_ref,
                  *, H, W):
    """conv1 + per-channel sum / sum-of-squares (pass 1 of BN1)."""
    Wp = W + 2
    Q = H * Wp
    n = pl.program_id(0)

    @pl.when(n == 0)
    def _init():
        pad_ref[...] = jnp.zeros_like(pad_ref)      # halo stays zero afterwards
        ssum_ref[...] = jnp.zeros_like(ssum_ref)
        ssq_ref[...] = jnp.zeros_like(ssq_ref)

    # Stage this image into the padded flat buffer: halo handled in-kernel,
    # no jnp.pad round trip through HBM for the conv input.
    for h in range(H):
        dst = (h + 1) * Wp + 1
        pad_ref[:, dst:dst + W] = x_ref[:, h * W:(h + 1) * W]

    acc = _conv_taps(pad_ref, w_ref, Q, Wp)          # (C, Q) f32
    h_ref[...] = acc
    _accum_stats(acc, mask_ref[...], ssum_ref, ssq_ref)


def _mid_kernel(h1_ref, sc_ref, sh_ref, w_ref, mask_ref,
                h2_ref, ssum_ref, ssq_ref, pad_ref, *, H, W):
    """bn1 + relu (from pass-1 batch stats) fused with conv2 + BN2 statistics."""
    Wp = W + 2
    Q = H * Wp
    n = pl.program_id(0)

    @pl.when(n == 0)
    def _init():
        pad_ref[...] = jnp.zeros_like(pad_ref)
        ssum_ref[...] = jnp.zeros_like(ssum_ref)
        ssq_ref[...] = jnp.zeros_like(ssq_ref)

    # bn1 + relu in f32; junk columns forced to zero so they double as the
    # left/right zero padding when dropped into conv2's padded flat buffer.
    a1 = jnp.maximum(h1_ref[...] * sc_ref[...] + sh_ref[...], 0.0)
    a1 = a1 * mask_ref[...]
    pad_ref[:, Wp + 1:Wp + 1 + Q] = a1.astype(pad_ref.dtype)   # single slab store

    acc = _conv_taps(pad_ref, w_ref, Q, Wp)          # (C, Q) f32
    h2_ref[...] = acc
    _accum_stats(acc, mask_ref[...], ssum_ref, ssq_ref)


def _final_kernel(h2_ref, sc_ref, sh_ref, res_ref, out_ref, *, H, W):
    """bn2 + relu + residual add + relu, stored lane-dense directly in NCHW order."""
    Wp = W + 2
    y = jnp.maximum(h2_ref[...] * sc_ref[...] + sh_ref[...], 0.0)   # (C, Q)
    for h in range(H):                       # drop the 2 junk columns per row
        out_ref[:, h * W:(h + 1) * W] = jnp.maximum(
            y[:, h * Wp:h * Wp + W] + res_ref[:, h * W:(h + 1) * W], 0.0)


# ----------------------------- pallas_call wrappers ---------------------------
def _conv1_call(x_bf, w_t, mask, *, N, C, H, W):
    Wp = W + 2
    Q = H * Wp
    R = (H + 2) * Wp + 2
    grid_spec = pltpu.PrefetchScalarGridSpec(
        num_scalar_prefetch=0,
        grid=(N,),
        in_specs=[
            pl.BlockSpec((None, C, H * W), lambda n: (n, 0, 0)),   # x (bf16)
            pl.BlockSpec((9, C, C), lambda n: (0, 0, 0)),          # conv1 taps
            pl.BlockSpec((1, Q), lambda n: (0, 0)),                # valid mask
        ],
        out_specs=[
            pl.BlockSpec((None, C, Q), lambda n: (n, 0, 0)),       # raw conv out
            pl.BlockSpec((C, 1), lambda n: (0, 0)),                # sum accum
            pl.BlockSpec((C, 1), lambda n: (0, 0)),                # sumsq accum
        ],
        scratch_shapes=[pltpu.VMEM((C, R), jnp.bfloat16)],
    )
    return pl.pallas_call(
        functools.partial(_conv1_kernel, H=H, W=W),
        out_shape=(
            jax.ShapeDtypeStruct((N, C, Q), jnp.float32),
            jax.ShapeDtypeStruct((C, 1), jnp.float32),
            jax.ShapeDtypeStruct((C, 1), jnp.float32),
        ),
        grid_spec=grid_spec,
        compiler_params=pltpu.CompilerParams(
            dimension_semantics=("arbitrary",),     # stats reduce across batch
            vmem_limit_bytes=_VMEM_LIMIT,
        ),
    )(x_bf, w_t, mask)


def _mid_call(h1, scale1, shift1, w_t, mask, *, N, C, H, W):
    Wp = W + 2
    Q = H * Wp
    R = (H + 2) * Wp + 2
    grid_spec = pltpu.PrefetchScalarGridSpec(
        num_scalar_prefetch=0,
        grid=(N,),
        in_specs=[
            pl.BlockSpec((None, C, Q), lambda n: (n, 0, 0)),       # conv1 out
            pl.BlockSpec((C, 1), lambda n: (0, 0)),                # bn1 scale
            pl.BlockSpec((C, 1), lambda n: (0, 0)),                # bn1 shift
            pl.BlockSpec((9, C, C), lambda n: (0, 0, 0)),          # conv2 taps
            pl.BlockSpec((1, Q), lambda n: (0, 0)),                # valid mask
        ],
        out_specs=[
            pl.BlockSpec((None, C, Q), lambda n: (n, 0, 0)),       # conv2 out
            pl.BlockSpec((C, 1), lambda n: (0, 0)),
            pl.BlockSpec((C, 1), lambda n: (0, 0)),
        ],
        scratch_shapes=[pltpu.VMEM((C, R), jnp.bfloat16)],
    )
    return pl.pallas_call(
        functools.partial(_mid_kernel, H=H, W=W),
        out_shape=(
            jax.ShapeDtypeStruct((N, C, Q), jnp.float32),
            jax.ShapeDtypeStruct((C, 1), jnp.float32),
            jax.ShapeDtypeStruct((C, 1), jnp.float32),
        ),
        grid_spec=grid_spec,
        compiler_params=pltpu.CompilerParams(
            dimension_semantics=("arbitrary",),
            vmem_limit_bytes=_VMEM_LIMIT,
        ),
    )(h1, scale1, shift1, w_t, mask)


def _final_call(h2, scale2, shift2, x32, *, N, C, H, W):
    Wp = W + 2
    Q = H * Wp
    grid_spec = pltpu.PrefetchScalarGridSpec(
        num_scalar_prefetch=0,
        grid=(N,),
        in_specs=[
            pl.BlockSpec((None, C, Q), lambda n: (n, 0, 0)),       # conv2 out
            pl.BlockSpec((C, 1), lambda n: (0, 0)),                # bn2 scale
            pl.BlockSpec((C, 1), lambda n: (0, 0)),                # bn2 shift
            pl.BlockSpec((None, C, H * W), lambda n: (n, 0, 0)),   # residual (f32)
        ],
        out_specs=pl.BlockSpec((None, C, H * W), lambda n: (n, 0, 0)),
    )
    return pl.pallas_call(
        functools.partial(_final_kernel, H=H, W=W),
        out_shape=jax.ShapeDtypeStruct((N, C, H * W), jnp.float32),
        grid_spec=grid_spec,
        compiler_params=pltpu.CompilerParams(
            dimension_semantics=("parallel",),      # independent per image
            vmem_limit_bytes=_VMEM_LIMIT,
        ),
    )(h2, scale2, shift2, x32)


# ------------------------------- forward pass ---------------------------------
def _bn_scale_shift(ssum, ssq, gamma, beta, count):
    """Fold batch statistics + affine params into a per-channel scale/shift."""
    mean = ssum[:, 0] / count
    var = jnp.maximum(ssq[:, 0] / count - mean * mean, 0.0)   # biased (training)
    inv = lax.rsqrt(var + EPS)
    scale = gamma.astype(jnp.float32) * inv
    shift = beta.astype(jnp.float32) - mean * scale
    return scale.reshape(-1, 1), shift.reshape(-1, 1)


def residual_block_forward(x_nchw, params):
    """Forward of residual_block (stride=1, downsample=None, Cin==Cout)."""
    # TODO(synk): the training-time side effect of updating BatchNorm
    # running_mean / running_var buffers is not reproduced (output only).
    w1, g1, b1, w2, g2, b2 = params
    N, C, H, W = x_nchw.shape
    Wp = W + 2
    Q = H * Wp

    x32 = x_nchw.astype(jnp.float32).reshape(N, C, H * W)     # free reshape
    x_bf = x32.astype(jnp.bfloat16)                           # MXU operand
    # OIHW -> (tap = ky*3+kx, Cout, Cin), bf16 for the MXU.
    w1_t = jnp.transpose(w1, (2, 3, 0, 1)).reshape(9, C, C).astype(jnp.bfloat16)
    w2_t = jnp.transpose(w2, (2, 3, 0, 1)).reshape(9, C, C).astype(jnp.bfloat16)
    # q-layout valid-column mask (last 2 columns of every row are junk).
    mask = ((jnp.arange(Q, dtype=jnp.int32) % Wp) < W).astype(jnp.float32)
    mask = mask.reshape(1, Q)

    count = N * H * W
    h1, s1, sq1 = _conv1_call(x_bf, w1_t, mask, N=N, C=C, H=H, W=W)
    scale1, shift1 = _bn_scale_shift(s1, sq1, g1, b1, count)
    h2, s2, sq2 = _mid_call(h1, scale1, shift1, w2_t, mask, N=N, C=C, H=H, W=W)
    scale2, shift2 = _bn_scale_shift(s2, sq2, g2, b2, count)
    out = _final_call(h2, scale2, shift2, x32, N=N, C=C, H=H, W=W)
    return out.reshape(N, C, H, W)


# ----------------------------- pure-JAX reference -----------------------------
def _reference_forward(x_nchw, params):
    w1, g1, b1, w2, g2, b2 = params

    def conv(x, w):
        return lax.conv_general_dilated(
            x, w, window_strides=(1, 1), padding=((1, 1), (1, 1)),
            dimension_numbers=("NCHW", "OIHW", "NCHW"))

    def bn(x, g, b):
        mean = jnp.mean(x, axis=(0, 2, 3), keepdims=True)
        var = jnp.mean((x - mean) ** 2, axis=(0, 2, 3), keepdims=True)
        xn = (x - mean) * lax.rsqrt(var + EPS)
        return xn * g.reshape(1, -1, 1, 1) + b.reshape(1, -1, 1, 1)

    out = jax.nn.relu(bn(conv(x_nchw, w1), g1, b1))
    out = jax.nn.relu(bn(conv(out, w2), g2, b2))
    return jax.nn.relu(out + x_nchw)


if __name__ == "__main__":
    # Small shapes implied by the module: NCHW input, Cin == Cout (downsample=None).
    N, C, H, W = 2, 8, 16, 16

    key = jax.random.PRNGKey(0)
    kx, kw1, kw2, kg1, kb1, kg2, kb2 = jax.random.split(key, 7)

    x = jax.random.normal(kx, (N, C, H, W), jnp.float32)
    w1 = 0.1 * jax.random.normal(kw1, (C, C, 3, 3), jnp.float32)   # conv1.weight
    w2 = 0.1 * jax.random.normal(kw2, (C, C, 3, 3), jnp.float32)   # conv2.weight
    g1 = 1.0 + 0.1 * jax.random.normal(kg1, (C,), jnp.float32)     # bn1.weight
    b1 = 0.1 * jax.random.normal(kb1, (C,), jnp.float32)           # bn1.bias
    g2 = 1.0 + 0.1 * jax.random.normal(kg2, (C,), jnp.float32)     # bn2.weight
    b2 = 0.1 * jax.random.normal(kb2, (C,), jnp.float32)           # bn2.bias
    params = (w1, g1, b1, w2, g2, b2)

    out = jax.jit(residual_block_forward)(x, params)
    out = jax.block_until_ready(out)

    ref = jax.block_until_ready(_reference_forward(x, params))
    assert out.shape == (N, C, H, W)
    if not jnp.allclose(out, ref, rtol=3e-2, atol=3e-2):   # bf16 MXU operands
        err = jnp.max(jnp.abs(out - ref))
        raise AssertionError(
            f"Pallas residual_block mismatch vs JAX reference (max abs err {err})")

    print("KERNEL_OK")
</pallas_src>

<mosaic_0001>
module attributes {stable_mosaic.version = 11 : i64} {
  func.func @_mid_kernel(%arg0: i32, %arg1: memref<1x8x288xf32, #tpu.memory_space<vmem>>, %arg2: memref<8x1xf32, #tpu.memory_space<vmem>>, %arg3: memref<8x1xf32, #tpu.memory_space<vmem>>, %arg4: memref<9x8x8xbf16, #tpu.memory_space<vmem>>, %arg5: memref<1x288xf32, #tpu.memory_space<vmem>>, %arg6: memref<1x8x288xf32, #tpu.memory_space<vmem>>, %arg7: memref<8x1xf32, #tpu.memory_space<vmem>>, %arg8: memref<8x1xf32, #tpu.memory_space<vmem>>, %arg9: memref<8x326xbf16, #tpu.memory_space<vmem>>) attributes {dimension_semantics = [#tpu.dimension_semantics<arbitrary>], iteration_bounds = array<i64: 2>, scalar_prefetch = 0 : i64, scratch_operands = 1 : i64, tpu.core_type = #tpu.core_type<tc>, window_params = [{transform_indices = @transform_0, window_bounds = array<i64: 1, 8, 288>}, {pipeline_mode = #tpu.pipeline_mode<synchronous>, transform_indices = @transform_1, window_bounds = array<i64: 8, 1>}, {pipeline_mode = #tpu.pipeline_mode<synchronous>, transform_indices = @transform_2, window_bounds = array<i64: 8, 1>}, {pipeline_mode = #tpu.pipeline_mode<synchronous>, transform_indices = @transform_3, window_bounds = array<i64: 9, 8, 8>}, {pipeline_mode = #tpu.pipeline_mode<synchronous>, transform_indices = @transform_4, window_bounds = array<i64: 1, 288>}, {transform_indices = @transform_5, window_bounds = array<i64: 1, 8, 288>}, {pipeline_mode = #tpu.pipeline_mode<synchronous>, transform_indices = @transform_6, window_bounds = array<i64: 8, 1>}, {pipeline_mode = #tpu.pipeline_mode<synchronous>, transform_indices = @transform_7, window_bounds = array<i64: 8, 1>}]} {
    %c0_i32 = arith.constant 0 : i32
    %0 = arith.cmpi eq, %arg0, %c0_i32 : i32
    %1 = arith.extui %0 : i1 to i32
    %c0_i32_0 = arith.constant 0 : i32
    %2 = arith.cmpi ne, %1, %c0_i32_0 : i32
    scf.if %2 {
      %cst_67 = arith.constant 0.000000e+00 : bf16
      %81 = vector.broadcast %cst_67 : bf16 to vector<8x326xbf16>
      %c0_68 = arith.constant 0 : index
      %c0_69 = arith.constant 0 : index
      %82 = vector.load %arg9[%c0_68, %c0_69] : memref<8x326xbf16, #tpu.memory_space<vmem>>, vector<8x326xbf16>
      tpu.vector_store %arg9[%c0_68, %c0_69], %81 {strides = array<i32>} : memref<8x326xbf16, #tpu.memory_space<vmem>>, vector<8x326xbf16>,
      %cst_70 = arith.constant 0.000000e+00 : f32
      %83 = vector.broadcast %cst_70 : f32 to vector<8x1xf32>
      %c0_71 = arith.constant 0 : index
      %c0_72 = arith.constant 0 : index
      %84 = vector.load %arg7[%c0_71, %c0_72] : memref<8x1xf32, #tpu.memory_space<vmem>>, vector<8x1xf32>
      tpu.vector_store %arg7[%c0_71, %c0_72], %83 {strides = array<i32>} : memref<8x1xf32, #tpu.memory_space<vmem>>, vector<8x1xf32>,
      %cst_73 = arith.constant 0.000000e+00 : f32
      %85 = vector.broadcast %cst_73 : f32 to vector<8x1xf32>
      %c0_74 = arith.constant 0 : index
      %c0_75 = arith.constant 0 : index
      %86 = vector.load %arg8[%c0_74, %c0_75] : memref<8x1xf32, #tpu.memory_space<vmem>>, vector<8x1xf32>
      tpu.vector_store %arg8[%c0_74, %c0_75], %85 {strides = array<i32>} : memref<8x1xf32, #tpu.memory_space<vmem>>, vector<8x1xf32>,
    } else {
    }
    %c0 = arith.constant 0 : index
    %c0_1 = arith.constant 0 : index
    %c0_2 = arith.constant 0 : index
    %3 = vector.load %arg1[%c0, %c0_1, %c0_2] : memref<1x8x288xf32, #tpu.memory_space<vmem>>, vector<1x8x288xf32>
    %4 = vector.shape_cast %3 : vector<1x8x288xf32> to vector<8x288xf32>
    %c0_3 = arith.constant 0 : index
    %c0_4 = arith.constant 0 : index
    %5 = vector.load %arg2[%c0_3, %c0_4] : memref<8x1xf32, #tpu.memory_space<vmem>>, vector<8x1xf32>
    %6 = vector.broadcast %5 : vector<8x1xf32> to vector<8x288xf32>
    %7 = arith.mulf %4, %6 : vector<8x288xf32>
    %c0_5 = arith.constant 0 : index
    %c0_6 = arith.constant 0 : index
    %8 = vector.load %arg3[%c0_5, %c0_6] : memref<8x1xf32, #tpu.memory_space<vmem>>, vector<8x1xf32>
    %9 = vector.broadcast %8 : vector<8x1xf32> to vector<8x288xf32>
    %10 = arith.addf %7, %9 : vector<8x288xf32>
    %cst = arith.constant 0.000000e+00 : f32
    %11 = vector.broadcast %cst : f32 to vector<8x288xf32>
    %12 = arith.maximumf %10, %11 : vector<8x288xf32>
    %c0_7 = arith.constant 0 : index
    %c0_8 = arith.constant 0 : index
    %13 = vector.load %arg5[%c0_7, %c0_8] : memref<1x288xf32, #tpu.memory_space<vmem>>, vector<1x288xf32>
    %14 = vector.broadcast %13 : vector<1x288xf32> to vector<8x288xf32>
    %15 = arith.mulf %12, %14 : vector<8x288xf32>
    %16 = arith.truncf %15 : vector<8x288xf32> to vector<8x288xbf16>
    %c0_9 = arith.constant 0 : index
    %c19 = arith.constant 19 : index
    %17 = vector.load %arg9[%c0_9, %c19] : memref<8x326xbf16, #tpu.memory_space<vmem>>, vector<8x288xbf16>
    tpu.vector_store %arg9[%c0_9, %c19], %16 {strides = array<i32>} : memref<8x326xbf16, #tpu.memory_space<vmem>>, vector<8x288xbf16>,
    %cst_10 = arith.constant 0.000000e+00 : f32
    %18 = vector.broadcast %cst_10 : f32 to vector<8x288xf32>
    %c0_11 = arith.constant 0 : index
    %c0_12 = arith.constant 0 : index
    %c0_13 = arith.constant 0 : index
    %19 = vector.load %arg4[%c0_11, %c0_12, %c0_13] : memref<9x8x8xbf16, #tpu.memory_space<vmem>>, vector<1x8x8xbf16>
    %20 = vector.shape_cast %19 : vector<1x8x8xbf16> to vector<8x8xbf16>
    %c0_14 = arith.constant 0 : index
    %c0_15 = arith.constant 0 : index
    %21 = vector.load %arg9[%c0_14, %c0_15] : memref<8x326xbf16, #tpu.memory_space<vmem>>, vector<8x288xbf16>
    %cst_16 = arith.constant dense<0.000000e+00> : vector<8x288xf32>
    %22 = tpu.matmul %20, %21, %cst_16 {dimension_numbers = #tpu.dot_dimension_numbers<[1], [0], [0], [1], [0, 0, 1, 1], [], []>} : vector<8x8xbf16>, vector<8x288xbf16>, vector<8x288xf32> -> vector<8x288xf32>
    %23 = arith.addf %18, %22 : vector<8x288xf32>
    %c1 = arith.constant 1 : index
    %c0_17 = arith.constant 0 : index
    %c0_18 = arith.constant 0 : index
    %24 = vector.load %arg4[%c1, %c0_17, %c0_18] : memref<9x8x8xbf16, #tpu.memory_space<vmem>>, vector<1x8x8xbf16>
    %25 = vector.shape_cast %24 : vector<1x8x8xbf16> to vector<8x8xbf16>
    %c0_19 = arith.constant 0 : index
    %c1_20 = arith.constant 1 : index
    %26 = vector.load %arg9[%c0_19, %c1_20] : memref<8x326xbf16, #tpu.memory_space<vmem>>, vector<8x288xbf16>
    %cst_21 = arith.constant dense<0.000000e+00> : vector<8x288xf32>
    %27 = tpu.matmul %25, %26, %cst_21 {dimension_numbers = #tpu.dot_dimension_numbers<[1], [0], [0], [1], [0, 0, 1, 1], [], []>} : vector<8x8xbf16>, vector<8x288xbf16>, vector<8x288xf32> -> vector<8x288xf32>
    %28 = arith.addf %23, %27 : vector<8x288xf32>
    %c2 = arith.constant 2 : index
    %c0_22 = arith.constant 0 : index
    %c0_23 = arith.constant 0 : index
    %29 = vector.load %arg4[%c2, %c0_22, %c0_23] : memref<9x8x8xbf16, #tpu.memory_space<vmem>>, vector<1x8x8xbf16>
    %30 = vector.shape_cast %29 : vector<1x8x8xbf16> to vector<8x8xbf16>
    %c0_24 = arith.constant 0 : index
    %c2_25 = arith.constant 2 : index
    %31 = vector.load %arg9[%c0_24, %c2_25] : memref<8x326xbf16, #tpu.memory_space<vmem>>, vector<8x288xbf16>
    %cst_26 = arith.constant dense<0.000000e+00> : vector<8x288xf32>
    %32 = tpu.matmul %30, %31, %cst_26 {dimension_numbers = #tpu.dot_dimension_numbers<[1], [0], [0], [1], [0, 0, 1, 1], [], []>} : vector<8x8xbf16>, vector<8x288xbf16>, vector<8x288xf32> -> vector<8x288xf32>
    %33 = arith.addf %28, %32 : vector<8x288xf32>
    %c3 = arith.constant 3 : index
    %c0_27 = arith.constant 0 : index
    %c0_28 = arith.constant 0 : index
    %34 = vector.load %arg4[%c3, %c0_27, %c0_28] : memref<9x8x8xbf16, #tpu.memory_space<vmem>>, vector<1x8x8xbf16>
    %35 = vector.shape_cast %34 : vector<1x8x8xbf16> to vector<8x8xbf16>
    %c0_29 = arith.constant 0 : index
    %c18 = arith.constant 18 : index
    %36 = vector.load %arg9[%c0_29, %c18] : memref<8x326xbf16, #tpu.memory_space<vmem>>, vector<8x288xbf16>
    %cst_30 = arith.constant dense<0.000000e+00> : vector<8x288xf32>
    %37 = tpu.matmul %35, %36, %cst_30 {dimension_numbers = #tpu.dot_dimension_numbers<[1], [0], [0], [1], [0, 0, 1, 1], [], []>} : vector<8x8xbf16>, vector<8x288xbf16>, vector<8x288xf32> -> vector<8x288xf32>
    %38 = arith.addf %33, %37 : vector<8x288xf32>
    %c4 = arith.constant 4 : index
    %c0_31 = arith.constant 0 : index
    %c0_32 = arith.constant 0 : index
    %39 = vector.load %arg4[%c4, %c0_31, %c0_32] : memref<9x8x8xbf16, #tpu.memory_space<vmem>>, vector<1x8x8xbf16>
    %40 = vector.shape_cast %39 : vector<1x8x8xbf16> to vector<8x8xbf16>
    %c0_33 = arith.constant 0 : index
    %c19_34 = arith.constant 19 : index
    %41 = vector.load %arg9[%c0_33, %c19_34] : memref<8x326xbf16, #tpu.memory_space<vmem>>, vector<8x288xbf16>
    %cst_35 = arith.constant dense<0.000000e+00> : vector<8x288xf32>
    %42 = tpu.matmul %40, %41, %cst_35 {dimension_numbers = #tpu.dot_dimension_numbers<[1], [0], [0], [1], [0, 0, 1, 1], [], []>} : vector<8x8xbf16>, vector<8x288xbf16>, vector<8x288xf32> -> vector<8x288xf32>
    %43 = arith.addf %38, %42 : vector<8x288xf32>
    %c5 = arith.constant 5 : index
    %c0_36 = arith.constant 0 : index
    %c0_37 = arith.constant 0 : index
    %44 = vector.load %arg4[%c5, %c0_36, %c0_37] : memref<9x8x8xbf16, #tpu.memory_space<vmem>>, vector<1x8x8xbf16>
    %45 = vector.shape_cast %44 : vector<1x8x8xbf16> to vector<8x8xbf16>
    %c0_38 = arith.constant 0 : index
    %c20 = arith.constant 20 : index
    %46 = vector.load %arg9[%c0_38, %c20] : memref<8x326xbf16, #tpu.memory_space<vmem>>, vector<8x288xbf16>
    %cst_39 = arith.constant dense<0.000000e+00> : vector<8x288xf32>
    %47 = tpu.matmul %45, %46, %cst_39 {dimension_numbers = #tpu.dot_dimension_numbers<[1], [0], [0], [1], [0, 0, 1, 1], [], []>} : vector<8x8xbf16>, vector<8x288xbf16>, vector<8x288xf32> -> vector<8x288xf32>
    %48 = arith.addf %43, %47 : vector<8x288xf32>
    %c6 = arith.constant 6 : index
    %c0_40 = arith.constant 0 : index
    %c0_41 = arith.constant 0 : index
    %49 = vector.load %arg4[%c6, %c0_40, %c0_41] : memref<9x8x8xbf16, #tpu.memory_space<vmem>>, vector<1x8x8xbf16>
    %50 = vector.shape_cast %49 : vector<1x8x8xbf16> to vector<8x8xbf16>
    %c0_42 = arith.constant 0 : index
    %c36 = arith.constant 36 : index
    %51 = vector.load %arg9[%c0_42, %c36] : memref<8x326xbf16, #tpu.memory_space<vmem>>, vector<8x288xbf16>
    %cst_43 = arith.constant dense<0.000000e+00> : vector<8x288xf32>
    %52 = tpu.matmul %50, %51, %cst_43 {dimension_numbers = #tpu.dot_dimension_numbers<[1], [0], [0], [1], [0, 0, 1, 1], [], []>} : vector<8x8xbf16>, vector<8x288xbf16>, vector<8x288xf32> -> vector<8x288xf32>
    %53 = arith.addf %48, %52 : vector<8x288xf32>
    %c7 = arith.constant 7 : index
    %c0_44 = arith.constant 0 : index
    %c0_45 = arith.constant 0 : index
    %54 = vector.load %arg4[%c7, %c0_44, %c0_45] : memref<9x8x8xbf16, #tpu.memory_space<vmem>>, vector<1x8x8xbf16>
    %55 = vector.shape_cast %54 : vector<1x8x8xbf16> to vector<8x8xbf16>
    %c0_46 = arith.constant 0 : index
    %c37 = arith.constant 37 : index
    %56 = vector.load %arg9[%c0_46, %c37] : memref<8x326xbf16, #tpu.memory_space<vmem>>, vector<8x288xbf16>
    %cst_47 = arith.constant dense<0.000000e+00> : vector<8x288xf32>
    %57 = tpu.matmul %55, %56, %cst_47 {dimension_numbers = #tpu.dot_dimension_numbers<[1], [0], [0], [1], [0, 0, 1, 1], [], []>} : vector<8x8xbf16>, vector<8x288xbf16>, vector<8x288xf32> -> vector<8x288xf32>
    %58 = arith.addf %53, %57 : vector<8x288xf32>
    %c8 = arith.constant 8 : index
    %c0_48 = arith.constant 0 : index
    %c0_49 = arith.constant 0 : index
    %59 = vector.load %arg4[%c8, %c0_48, %c0_49] : memref<9x8x8xbf16, #tpu.memory_space<vmem>>, vector<1x8x8xbf16>
    %60 = vector.shape_cast %59 : vector<1x8x8xbf16> to vector<8x8xbf16>
    %c0_50 = arith.constant 0 : index
    %c38 = arith.constant 38 : index
    %61 = vector.load %arg9[%c0_50, %c38] : memref<8x326xbf16, #tpu.memory_space<vmem>>, vector<8x288xbf16>
    %cst_51 = arith.constant dense<0.000000e+00> : vector<8x288xf32>
    %62 = tpu.matmul %60, %61, %cst_51 {dimension_numbers = #tpu.dot_dimension_numbers<[1], [0], [0], [1], [0, 0, 1, 1], [], []>} : vector<8x8xbf16>, vector<8x288xbf16>, vector<8x288xf32> -> vector<8x288xf32>
    %63 = arith.addf %58, %62 : vector<8x288xf32>
    %c0_52 = arith.constant 0 : index
    %c0_53 = arith.constant 0 : index
    %c0_54 = arith.constant 0 : index
    %64 = vector.load %arg6[%c0_52, %c0_53, %c0_54] : memref<1x8x288xf32, #tpu.memory_space<vmem>>, vector<1x8x288xf32>
    %65 = vector.shape_cast %64 : vector<1x8x288xf32> to vector<8x288xf32>
    %66 = vector.shape_cast %63 : vector<8x288xf32> to vector<1x8x288xf32>
    tpu.vector_store %arg6[%c0_52, %c0_53, %c0_54], %66 {strides = array<i32>} : memref<1x8x288xf32, #tpu.memory_space<vmem>>, vector<1x8x288xf32>,
    %c0_55 = arith.constant 0 : index
    %c0_56 = arith.constant 0 : index
    %67 = vector.load %arg5[%c0_55, %c0_56] : memref<1x288xf32, #tpu.memory_space<vmem>>, vector<1x288xf32>
    %68 = vector.broadcast %67 : vector<1x288xf32> to vector<8x288xf32>
    %69 = arith.mulf %63, %68 : vector<8x288xf32>
    %c0_57 = arith.constant 0 : index
    %c0_58 = arith.constant 0 : index
    %70 = vector.load %arg7[%c0_57, %c0_58] : memref<8x1xf32, #tpu.memory_space<vmem>>, vector<8x1xf32>
    %cst_59 = arith.constant dense<0.000000e+00> : vector<8xf32>
    %71 = vector.multi_reduction <add>, %69, %cst_59 [1] : vector<8x288xf32> to vector<8xf32>
    %72 = vector.shape_cast %71 : vector<8xf32> to vector<8x1xf32>
    %73 = arith.addf %70, %72 : vector<8x1xf32>
    %c0_60 = arith.constant 0 : index
    %c0_61 = arith.constant 0 : index
    %74 = vector.load %arg7[%c0_60, %c0_61] : memref<8x1xf32, #tpu.memory_space<vmem>>, vector<8x1xf32>
    tpu.vector_store %arg7[%c0_60, %c0_61], %73 {strides = array<i32>} : memref<8x1xf32, #tpu.memory_space<vmem>>, vector<8x1xf32>,
    %c0_62 = arith.constant 0 : index
    %c0_63 = arith.constant 0 : index
    %75 = vector.load %arg8[%c0_62, %c0_63] : memref<8x1xf32, #tpu.memory_space<vmem>>, vector<8x1xf32>
    %76 = arith.mulf %69, %69 : vector<8x288xf32>
    %cst_64 = arith.constant dense<0.000000e+00> : vector<8xf32>
    %77 = vector.multi_reduction <add>, %76, %cst_64 [1] : vector<8x288xf32> to vector<8xf32>
    %78 = vector.shape_cast %77 : vector<8xf32> to vector<8x1xf32>
    %79 = arith.addf %75, %78 : vector<8x1xf32>
    %c0_65 = arith.constant 0 : index
    %c0_66 = arith.constant 0 : index
    %80 = vector.load %arg8[%c0_65, %c0_66] : memref<8x1xf32, #tpu.memory_space<vmem>>, vector<8x1xf32>
    tpu.vector_store %arg8[%c0_65, %c0_66], %79 {strides = array<i32>} : memref<8x1xf32, #tpu.memory_space<vmem>>, vector<8x1xf32>,
    return
  }
  func.func @transform_0(%arg0: i32) -> (i32, i32, i32) {
    %c0_i32 = arith.constant 0 : i32
    %c0_i32_0 = arith.constant 0 : i32
    %c0_i32_1 = arith.constant 0 : i32
    return %arg0, %c0_i32, %c0_i32_0 : i32, i32, i32
  }
  func.func @transform_1(%arg0: i32) -> (i32, i32) {
    %c0_i32 = arith.constant 0 : i32
    %c0_i32_0 = arith.constant 0 : i32
    %c0_i32_1 = arith.constant 0 : i32
    return %c0_i32, %c0_i32_0 : i32, i32
  }
  func.func @transform_2(%arg0: i32) -> (i32, i32) {
    %c0_i32 = arith.constant 0 : i32
    %c0_i32_0 = arith.constant 0 : i32
    %c0_i32_1 = arith.constant 0 : i32
    return %c0_i32, %c0_i32_0 : i32, i32
  }
  func.func @transform_3(%arg0: i32) -> (i32, i32, i32) {
    %c0_i32 = arith.constant 0 : i32
    %c0_i32_0 = arith.constant 0 : i32
    %c0_i32_1 = arith.constant 0 : i32
    %c0_i32_2 = arith.constant 0 : i32
    return %c0_i32, %c0_i32_0, %c0_i32_1 : i32, i32, i32
  }
  func.func @transform_4(%arg0: i32) -> (i32, i32) {
    %c0_i32 = arith.constant 0 : i32
    %c0_i32_0 = arith.constant 0 : i32
    %c0_i32_1 = arith.constant 0 : i32
    return %c0_i32, %c0_i32_0 : i32, i32
  }
  func.func @transform_5(%arg0: i32) -> (i32, i32, i32) {
    %c0_i32 = arith.constant 0 : i32
    %c0_i32_0 = arith.constant 0 : i32
    %c0_i32_1 = arith.constant 0 : i32
    return %arg0, %c0_i32, %c0_i32_0 : i32, i32, i32
  }
  func.func @transform_6(%arg0: i32) -> (i32, i32) {
    %c0_i32 = arith.constant 0 : i32
    %c0_i32_0 = arith.constant 0 : i32
    %c0_i32_1 = arith.constant 0 : i32
    return %c0_i32, %c0_i32_0 : i32, i32
  }
  func.func @transform_7(%arg0: i32) -> (i32, i32) {
    %c0_i32 = arith.constant 0 : i32
    %c0_i32_0 = arith.constant 0 : i32
    %c0_i32_1 = arith.constant 0 : i32
    return %c0_i32, %c0_i32_0 : i32, i32
  }
}

module attributes {stable_mosaic.version = 11 : i64} {
  func.func @_conv1_kernel(%arg0: i32, %arg1: memref<1x8x256xbf16, #tpu.memory_space<vmem>>, %arg2: memref<9x8x8xbf16, #tpu.memory_space<vmem>>, %arg3: memref<1x288xf32, #tpu.memory_space<vmem>>, %arg4: memref<1x8x288xf32, #tpu.memory_space<vmem>>, %arg5: memref<8x1xf32, #tpu.memory_space<vmem>>, %arg6: memref<8x1xf32, #tpu.memory_space<vmem>>, %arg7: memref<8x326xbf16, #tpu.memory_space<vmem>>) attributes {dimension_semantics = [#tpu.dimension_semantics<arbitrary>], iteration_bounds = array<i64: 2>, scalar_prefetch = 0 : i64, scratch_operands = 1 : i64, tpu.core_type = #tpu.core_type<tc>, window_params = [{transform_indices = @transform_0, window_bounds = array<i64: 1, 8, 256>}, {pipeline_mode = #tpu.pipeline_mode<synchronous>, transform_indices = @transform_1, window_bounds = array<i64: 9, 8, 8>}, {pipeline_mode = #tpu.pipeline_mode<synchronous>, transform_indices = @transform_2, window_bounds = array<i64: 1, 288>}, {transform_indices = @transform_3, window_bounds = array<i64: 1, 8, 288>}, {pipeline_mode = #tpu.pipeline_mode<synchronous>, transform_indices = @transform_4, window_bounds = array<i64: 8, 1>}, {pipeline_mode = #tpu.pipeline_mode<synchronous>, transform_indices = @transform_5, window_bounds = array<i64: 8, 1>}]} {
    %c0_i32 = arith.constant 0 : i32
    %0 = arith.cmpi eq, %arg0, %c0_i32 : i32
    %1 = arith.extui %0 : i1 to i32
    %c0_i32_0 = arith.constant 0 : i32
    %2 = arith.cmpi ne, %1, %c0_i32_0 : i32
    scf.if %2 {
      %cst_106 = arith.constant 0.000000e+00 : bf16
      %114 = vector.broadcast %cst_106 : bf16 to vector<8x326xbf16>
      %c0_107 = arith.constant 0 : index
      %c0_108 = arith.constant 0 : index
      %115 = vector.load %arg7[%c0_107, %c0_108] : memref<8x326xbf16, #tpu.memory_space<vmem>>, vector<8x326xbf16>
      tpu.vector_store %arg7[%c0_107, %c0_108], %114 {strides = array<i32>} : memref<8x326xbf16, #tpu.memory_space<vmem>>, vector<8x326xbf16>,
      %cst_109 = arith.constant 0.000000e+00 : f32
      %116 = vector.broadcast %cst_109 : f32 to vector<8x1xf32>
      %c0_110 = arith.constant 0 : index
      %c0_111 = arith.constant 0 : index
      %117 = vector.load %arg5[%c0_110, %c0_111] : memref<8x1xf32, #tpu.memory_space<vmem>>, vector<8x1xf32>
      tpu.vector_store %arg5[%c0_110, %c0_111], %116 {strides = array<i32>} : memref<8x1xf32, #tpu.memory_space<vmem>>, vector<8x1xf32>,
      %cst_112 = arith.constant 0.000000e+00 : f32
      %118 = vector.broadcast %cst_112 : f32 to vector<8x1xf32>
      %c0_113 = arith.constant 0 : index
      %c0_114 = arith.constant 0 : index
      %119 = vector.load %arg6[%c0_113, %c0_114] : memref<8x1xf32, #tpu.memory_space<vmem>>, vector<8x1xf32>
      tpu.vector_store %arg6[%c0_113, %c0_114], %118 {strides = array<i32>} : memref<8x1xf32, #tpu.memory_space<vmem>>, vector<8x1xf32>,
    } else {
    }
    %c0 = arith.constant 0 : index
    %c0_1 = arith.constant 0 : index
    %c0_2 = arith.constant 0 : index
    %3 = vector.load %arg1[%c0, %c0_1, %c0_2] : memref<1x8x256xbf16, #tpu.memory_space<vmem>>, vector<1x8x16xbf16>
    %4 = vector.shape_cast %3 : vector<1x8x16xbf16> to vector<8x16xbf16>
    %c0_3 = arith.constant 0 : index
    %c19 = arith.constant 19 : index
    %5 = vector.load %arg7[%c0_3, %c19] : memref<8x326xbf16, #tpu.memory_space<vmem>>, vector<8x16xbf16>
    tpu.vector_store %arg7[%c0_3, %c19], %4 {strides = array<i32>} : memref<8x326xbf16, #tpu.memory_space<vmem>>, vector<8x16xbf16>,
    %c0_4 = arith.constant 0 : index
    %c0_5 = arith.constant 0 : index
    %c16 = arith.constant 16 : index
    %6 = vector.load %arg1[%c0_4, %c0_5, %c16] : memref<1x8x256xbf16, #tpu.memory_space<vmem>>, vector<1x8x16xbf16>
    %7 = vector.shape_cast %6 : vector<1x8x16xbf16> to vector<8x16xbf16>
    %c0_6 = arith.constant 0 : index
    %c37 = arith.constant 37 : index
    %8 = vector.load %arg7[%c0_6, %c37] : memref<8x326xbf16, #tpu.memory_space<vmem>>, vector<8x16xbf16>
    tpu.vector_store %arg7[%c0_6, %c37], %7 {strides = array<i32>} : memref<8x326xbf16, #tpu.memory_space<vmem>>, vector<8x16xbf16>,
    %c0_7 = arith.constant 0 : index
    %c0_8 = arith.constant 0 : index
    %c32 = arith.constant 32 : index
    %9 = vector.load %arg1[%c0_7, %c0_8, %c32] : memref<1x8x256xbf16, #tpu.memory_space<vmem>>, vector<1x8x16xbf16>
    %10 = vector.shape_cast %9 : vector<1x8x16xbf16> to vector<8x16xbf16>
    %c0_9 = arith.constant 0 : index
    %c55 = arith.constant 55 : index
    %11 = vector.load %arg7[%c0_9, %c55] : memref<8x326xbf16, #tpu.memory_space<vmem>>, vector<8x16xbf16>
    tpu.vector_store %arg7[%c0_9, %c55], %10 {strides = array<i32>} : memref<8x326xbf16, #tpu.memory_space<vmem>>, vector<8x16xbf16>,
    %c0_10 = arith.constant 0 : index
    %c0_11 = arith.constant 0 : index
    %c48 = arith.constant 48 : index
    %12 = vector.load %arg1[%c0_10, %c0_11, %c48] : memref<1x8x256xbf16, #tpu.memory_space<vmem>>, vector<1x8x16xbf16>
    %13 = vector.shape_cast %12 : vector<1x8x16xbf16> to vector<8x16xbf16>
    %c0_12 = arith.constant 0 : index
    %c73 = arith.constant 73 : index
    %14 = vector.load %arg7[%c0_12, %c73] : memref<8x326xbf16, #tpu.memory_space<vmem>>, vector<8x16xbf16>
    tpu.vector_store %arg7[%c0_12, %c73], %13 {strides = array<i32>} : memref<8x326xbf16, #tpu.memory_space<vmem>>, vector<8x16xbf16>,
    %c0_13 = arith.constant 0 : index
    %c0_14 = arith.constant 0 : index
    %c64 = arith.constant 64 : index
    %15 = vector.load %arg1[%c0_13, %c0_14, %c64] : memref<1x8x256xbf16, #tpu.memory_space<vmem>>, vector<1x8x16xbf16>
    %16 = vector.shape_cast %15 : vector<1x8x16xbf16> to vector<8x16xbf16>
    %c0_15 = arith.constant 0 : index
    %c91 = arith.constant 91 : index
    %17 = vector.load %arg7[%c0_15, %c91] : memref<8x326xbf16, #tpu.memory_space<vmem>>, vector<8x16xbf16>
    tpu.vector_store %arg7[%c0_15, %c91], %16 {strides = array<i32>} : memref<8x326xbf16, #tpu.memory_space<vmem>>, vector<8x16xbf16>,
    %c0_16 = arith.constant 0 : index
    %c0_17 = arith.constant 0 : index
    %c80 = arith.constant 80 : index
    %18 = vector.load %arg1[%c0_16, %c0_17, %c80] : memref<1x8x256xbf16, #tpu.memory_space<vmem>>, vector<1x8x16xbf16>
    %19 = vector.shape_cast %18 : vector<1x8x16xbf16> to vector<8x16xbf16>
    %c0_18 = arith.constant 0 : index
    %c109 = arith.constant 109 : index
    %20 = vector.load %arg7[%c0_18, %c109] : memref<8x326xbf16, #tpu.memory_space<vmem>>, vector<8x16xbf16>
    tpu.vector_store %arg7[%c0_18, %c109], %19 {strides = array<i32>} : memref<8x326xbf16, #tpu.memory_space<vmem>>, vector<8x16xbf16>,
    %c0_19 = arith.constant 0 : index
    %c0_20 = arith.constant 0 : index
    %c96 = arith.constant 96 : index
    %21 = vector.load %arg1[%c0_19, %c0_20, %c96] : memref<1x8x256xbf16, #tpu.memory_space<vmem>>, vector<1x8x16xbf16>
    %22 = vector.shape_cast %21 : vector<1x8x16xbf16> to vector<8x16xbf16>
    %c0_21 = arith.constant 0 : index
    %c127 = arith.constant 127 : index
    %23 = vector.load %arg7[%c0_21, %c127] : memref<8x326xbf16, #tpu.memory_space<vmem>>, vector<8x16xbf16>
    tpu.vector_store %arg7[%c0_21, %c127], %22 {strides = array<i32>} : memref<8x326xbf16, #tpu.memory_space<vmem>>, vector<8x16xbf16>,
    %c0_22 = arith.constant 0 : index
    %c0_23 = arith.constant 0 : index
    %c112 = arith.constant 112 : index
    %24 = vector.load %arg1[%c0_22, %c0_23, %c112] : memref<1x8x256xbf16, #tpu.memory_space<vmem>>, vector<1x8x16xbf16>
    %25 = vector.shape_cast %24 : vector<1x8x16xbf16> to vector<8x16xbf16>
    %c0_24 = arith.constant 0 : index
    %c145 = arith.constant 145 : index
    %26 = vector.load %arg7[%c0_24, %c145] : memref<8x326xbf16, #tpu.memory_space<vmem>>, vector<8x16xbf16>
    tpu.vector_store %arg7[%c0_24, %c145], %25 {strides = array<i32>} : memref<8x326xbf16, #tpu.memory_space<vmem>>, vector<8x16xbf16>,
    %c0_25 = arith.constant 0 : index
    %c0_26 = arith.constant 0 : index
    %c128 = arith.constant 128 : index
    %27 = vector.load %arg1[%c0_25, %c0_26, %c128] : memref<1x8x256xbf16, #tpu.memory_space<vmem>>, vector<1x8x16xbf16>
    %28 = vector.shape_cast %27 : vector<1x8x16xbf16> to vector<8x16xbf16>
    %c0_27 = arith.constant 0 : index
    %c163 = arith.constant 163 : index
    %29 = vector.load %arg7[%c0_27, %c163] : memref<8x326xbf16, #tpu.memory_space<vmem>>, vector<8x16xbf16>
    tpu.vector_store %arg7[%c0_27, %c163], %28 {strides = array<i32>} : memref<8x326xbf16, #tpu.memory_space<vmem>>, vector<8x16xbf16>,
    %c0_28 = arith.constant 0 : index
    %c0_29 = arith.constant 0 : index
    %c144 = arith.constant 144 : index
    %30 = vector.load %arg1[%c0_28, %c0_29, %c144] : memref<1x8x256xbf16, #tpu.memory_space<vmem>>, vector<1x8x16xbf16>
    %31 = vector.shape_cast %30 : vector<1x8x16xbf16> to vector<8x16xbf16>
    %c0_30 = arith.constant 0 : index
    %c181 = arith.constant 181 : index
    %32 = vector.load %arg7[%c0_30, %c181] : memref<8x326xbf16, #tpu.memory_space<vmem>>, vector<8x16xbf16>
    tpu.vector_store %arg7[%c0_30, %c181], %31 {strides = array<i32>} : memref<8x326xbf16, #tpu.memory_space<vmem>>, vector<8x16xbf16>,
    %c0_31 = arith.constant 0 : index
    %c0_32 = arith.constant 0 : index
    %c160 = arith.constant 160 : index
    %33 = vector.load %arg1[%c0_31, %c0_32, %c160] : memref<1x8x256xbf16, #tpu.memory_space<vmem>>, vector<1x8x16xbf16>
    %34 = vector.shape_cast %33 : vector<1x8x16xbf16> to vector<8x16xbf16>
    %c0_33 = arith.constant 0 : index
    %c199 = arith.constant 199 : index
    %35 = vector.load %arg7[%c0_33, %c199] : memref<8x326xbf16, #tpu.memory_space<vmem>>, vector<8x16xbf16>
    tpu.vector_store %arg7[%c0_33, %c199], %34 {strides = array<i32>} : memref<8x326xbf16, #tpu.memory_space<vmem>>, vector<8x16xbf16>,
    %c0_34 = arith.constant 0 : index
    %c0_35 = arith.constant 0 : index
    %c176 = arith.constant 176 : index
    %36 = vector.load %arg1[%c0_34, %c0_35, %c176] : memref<1x8x256xbf16, #tpu.memory_space<vmem>>, vector<1x8x16xbf16>
    %37 = vector.shape_cast %36 : vector<1x8x16xbf16> to vector<8x16xbf16>
    %c0_36 = arith.constant 0 : index
    %c217 = arith.constant 217 : index
    %38 = vector.load %arg7[%c0_36, %c217] : memref<8x326xbf16, #tpu.memory_space<vmem>>, vector<8x16xbf16>
    tpu.vector_store %arg7[%c0_36, %c217], %37 {strides = array<i32>} : memref<8x326xbf16, #tpu.memory_space<vmem>>, vector<8x16xbf16>,
    %c0_37 = arith.constant 0 : index
    %c0_38 = arith.constant 0 : index
    %c192 = arith.constant 192 : index
    %39 = vector.load %arg1[%c0_37, %c0_38, %c192] : memref<1x8x256xbf16, #tpu.memory_space<vmem>>, vector<1x8x16xbf16>
    %40 = vector.shape_cast %39 : vector<1x8x16xbf16> to vector<8x16xbf16>
    %c0_39 = arith.constant 0 : index
    %c235 = arith.constant 235 : index
    %41 = vector.load %arg7[%c0_39, %c235] : memref<8x326xbf16, #tpu.memory_space<vmem>>, vector<8x16xbf16>
    tpu.vector_store %arg7[%c0_39, %c235], %40 {strides = array<i32>} : memref<8x326xbf16, #tpu.memory_space<vmem>>, vector<8x16xbf16>,
    %c0_40 = arith.constant 0 : index
    %c0_41 = arith.constant 0 : index
    %c208 = arith.constant 208 : index
    %42 = vector.load %arg1[%c0_40, %c0_41, %c208] : memref<1x8x256xbf16, #tpu.memory_space<vmem>>, vector<1x8x16xbf16>
    %43 = vector.shape_cast %42 : vector<1x8x16xbf16> to vector<8x16xbf16>
    %c0_42 = arith.constant 0 : index
    %c253 = arith.constant 253 : index
    %44 = vector.load %arg7[%c0_42, %c253] : memref<8x326xbf16, #tpu.memory_space<vmem>>, vector<8x16xbf16>
    tpu.vector_store %arg7[%c0_42, %c253], %43 {strides = array<i32>} : memref<8x326xbf16, #tpu.memory_space<vmem>>, vector<8x16xbf16>,
    %c0_43 = arith.constant 0 : index
    %c0_44 = arith.constant 0 : index
    %c224 = arith.constant 224 : index
    %45 = vector.load %arg1[%c0_43, %c0_44, %c224] : memref<1x8x256xbf16, #tpu.memory_space<vmem>>, vector<1x8x16xbf16>
    %46 = vector.shape_cast %45 : vector<1x8x16xbf16> to vector<8x16xbf16>
    %c0_45 = arith.constant 0 : index
    %c271 = arith.constant 271 : index
    %47 = vector.load %arg7[%c0_45, %c271] : memref<8x326xbf16, #tpu.memory_space<vmem>>, vector<8x16xbf16>
    tpu.vector_store %arg7[%c0_45, %c271], %46 {strides = array<i32>} : memref<8x326xbf16, #tpu.memory_space<vmem>>, vector<8x16xbf16>,
    %c0_46 = arith.constant 0 : index
    %c0_47 = arith.constant 0 : index
    %c240 = arith.constant 240 : index
    %48 = vector.load %arg1[%c0_46, %c0_47, %c240] : memref<1x8x256xbf16, #tpu.memory_space<vmem>>, vector<1x8x16xbf16>
    %49 = vector.shape_cast %48 : vector<1x8x16xbf16> to vector<8x16xbf16>
    %c0_48 = arith.constant 0 : index
    %c289 = arith.constant 289 : index
    %50 = vector.load %arg7[%c0_48, %c289] : memref<8x326xbf16, #tpu.memory_space<vmem>>, vector<8x16xbf16>
    tpu.vector_store %arg7[%c0_48, %c289], %49 {strides = array<i32>} : memref<8x326xbf16, #tpu.memory_space<vmem>>, vector<8x16xbf16>,
    %cst = arith.constant 0.000000e+00 : f32
    %51 = vector.broadcast %cst : f32 to vector<8x288xf32>
    %c0_49 = arith.constant 0 : index
    %c0_50 = arith.constant 0 : index
    %c0_51 = arith.constant 0 : index
    %52 = vector.load %arg2[%c0_49, %c0_50, %c0_51] : memref<9x8x8xbf16, #tpu.memory_space<vmem>>, vector<1x8x8xbf16>
    %53 = vector.shape_cast %52 : vector<1x8x8xbf16> to vector<8x8xbf16>
    %c0_52 = arith.constant 0 : index
    %c0_53 = arith.constant 0 : index
    %54 = vector.load %arg7[%c0_52, %c0_53] : memref<8x326xbf16, #tpu.memory_space<vmem>>, vector<8x288xbf16>
    %cst_54 = arith.constant dense<0.000000e+00> : vector<8x288xf32>
    %55 = tpu.matmul %53, %54, %cst_54 {dimension_numbers = #tpu.dot_dimension_numbers<[1], [0], [0], [1], [0, 0, 1, 1], [], []>} : vector<8x8xbf16>, vector<8x288xbf16>, vector<8x288xf32> -> vector<8x288xf32>
    %56 = arith.addf %51, %55 : vector<8x288xf32>
    %c1 = arith.constant 1 : index
    %c0_55 = arith.constant 0 : index
    %c0_56 = arith.constant 0 : index
    %57 = vector.load %arg2[%c1, %c0_55, %c0_56] : memref<9x8x8xbf16, #tpu.memory_space<vmem>>, vector<1x8x8xbf16>
    %58 = vector.shape_cast %57 : vector<1x8x8xbf16> to vector<8x8xbf16>
    %c0_57 = arith.constant 0 : index
    %c1_58 = arith.constant 1 : index
    %59 = vector.load %arg7[%c0_57, %c1_58] : memref<8x326xbf16, #tpu.memory_space<vmem>>, vector<8x288xbf16>
    %cst_59 = arith.constant dense<0.000000e+00> : vector<8x288xf32>
    %60 = tpu.matmul %58, %59, %cst_59 {dimension_numbers = #tpu.dot_dimension_numbers<[1], [0], [0], [1], [0, 0, 1, 1], [], []>} : vector<8x8xbf16>, vector<8x288xbf16>, vector<8x288xf32> -> vector<8x288xf32>
    %61 = arith.addf %56, %60 : vector<8x288xf32>
    %c2 = arith.constant 2 : index
    %c0_60 = arith.constant 0 : index
    %c0_61 = arith.constant 0 : index
    %62 = vector.load %arg2[%c2, %c0_60, %c0_61] : memref<9x8x8xbf16, #tpu.memory_space<vmem>>, vector<1x8x8xbf16>
    %63 = vector.shape_cast %62 : vector<1x8x8xbf16> to vector<8x8xbf16>
    %c0_62 = arith.constant 0 : index
    %c2_63 = arith.constant 2 : index
    %64 = vector.load %arg7[%c0_62, %c2_63] : memref<8x326xbf16, #tpu.memory_space<vmem>>, vector<8x288xbf16>
    %cst_64 = arith.constant dense<0.000000e+00> : vector<8x288xf32>
    %65 = tpu.matmul %63, %64, %cst_64 {dimension_numbers = #tpu.dot_dimension_numbers<[1], [0], [0], [1], [0, 0, 1, 1], [], []>} : vector<8x8xbf16>, vector<8x288xbf16>, vector<8x288xf32> -> vector<8x288xf32>
    %66 = arith.addf %61, %65 : vector<8x288xf32>
    %c3 = arith.constant 3 : index
    %c0_65 = arith.constant 0 : index
    %c0_66 = arith.constant 0 : index
    %67 = vector.load %arg2[%c3, %c0_65, %c0_66] : memref<9x8x8xbf16, #tpu.memory_space<vmem>>, vector<1x8x8xbf16>
    %68 = vector.shape_cast %67 : vector<1x8x8xbf16> to vector<8x8xbf16>
    %c0_67 = arith.constant 0 : index
    %c18 = arith.constant 18 : index
    %69 = vector.load %arg7[%c0_67, %c18] : memref<8x326xbf16, #tpu.memory_space<vmem>>, vector<8x288xbf16>
    %cst_68 = arith.constant dense<0.000000e+00> : vector<8x288xf32>
    %70 = tpu.matmul %68, %69, %cst_68 {dimension_numbers = #tpu.dot_dimension_numbers<[1], [0], [0], [1], [0, 0, 1, 1], [], []>} : vector<8x8xbf16>, vector<8x288xbf16>, vector<8x288xf32> -> vector<8x288xf32>
    %71 = arith.addf %66, %70 : vector<8x288xf32>
    %c4 = arith.constant 4 : index
    %c0_69 = arith.constant 0 : index
    %c0_70 = arith.constant 0 : index
    %72 = vector.load %arg2[%c4, %c0_69, %c0_70] : memref<9x8x8xbf16, #tpu.memory_space<vmem>>, vector<1x8x8xbf16>
    %73 = vector.shape_cast %72 : vector<1x8x8xbf16> to vector<8x8xbf16>
    %c0_71 = arith.constant 0 : index
    %c19_72 = arith.constant 19 : index
    %74 = vector.load %arg7[%c0_71, %c19_72] : memref<8x326xbf16, #tpu.memory_space<vmem>>, vector<8x288xbf16>
    %cst_73 = arith.constant dense<0.000000e+00> : vector<8x288xf32>
    %75 = tpu.matmul %73, %74, %cst_73 {dimension_numbers = #tpu.dot_dimension_numbers<[1], [0], [0], [1], [0, 0, 1, 1], [], []>} : vector<8x8xbf16>, vector<8x288xbf16>, vector<8x288xf32> -> vector<8x288xf32>
    %76 = arith.addf %71, %75 : vector<8x288xf32>
    %c5 = arith.constant 5 : index
    %c0_74 = arith.constant 0 : index
    %c0_75 = arith.constant 0 : index
    %77 = vector.load %arg2[%c5, %c0_74, %c0_75] : memref<9x8x8xbf16, #tpu.memory_space<vmem>>, vector<1x8x8xbf16>
    %78 = vector.shape_cast %77 : vector<1x8x8xbf16> to vector<8x8xbf16>
    %c0_76 = arith.constant 0 : index
    %c20 = arith.constant 20 : index
    %79 = vector.load %arg7[%c0_76, %c20] : memref<8x326xbf16, #tpu.memory_space<vmem>>, vector<8x288xbf16>
    %cst_77 = arith.constant dense<0.000000e+00> : vector<8x288xf32>
    %80 = tpu.matmul %78, %79, %cst_77 {dimension_numbers = #tpu.dot_dimension_numbers<[1], [0], [0], [1], [0, 0, 1, 1], [], []>} : vector<8x8xbf16>, vector<8x288xbf16>, vector<8x288xf32> -> vector<8x288xf32>
    %81 = arith.addf %76, %80 : vector<8x288xf32>
    %c6 = arith.constant 6 : index
    %c0_78 = arith.constant 0 : index
    %c0_79 = arith.constant 0 : index
    %82 = vector.load %arg2[%c6, %c0_78, %c0_79] : memref<9x8x8xbf16, #tpu.memory_space<vmem>>, vector<1x8x8xbf16>
    %83 = vector.shape_cast %82 : vector<1x8x8xbf16> to vector<8x8xbf16>
    %c0_80 = arith.constant 0 : index
    %c36 = arith.constant 36 : index
    %84 = vector.load %arg7[%c0_80, %c36] : memref<8x326xbf16, #tpu.memory_space<vmem>>, vector<8x288xbf16>
    %cst_81 = arith.constant dense<0.000000e+00> : vector<8x288xf32>
    %85 = tpu.matmul %83, %84, %cst_81 {dimension_numbers = #tpu.dot_dimension_numbers<[1], [0], [0], [1], [0, 0, 1, 1], [], []>} : vector<8x8xbf16>, vector<8x288xbf16>, vector<8x288xf32> -> vector<8x288xf32>
    %86 = arith.addf %81, %85 : vector<8x288xf32>
    %c7 = arith.constant 7 : index
    %c0_82 = arith.constant 0 : index
    %c0_83 = arith.constant 0 : index
    %87 = vector.load %arg2[%c7, %c0_82, %c0_83] : memref<9x8x8xbf16, #tpu.memory_space<vmem>>, vector<1x8x8xbf16>
    %88 = vector.shape_cast %87 : vector<1x8x8xbf16> to vector<8x8xbf16>
    %c0_84 = arith.constant 0 : index
    %c37_85 = arith.constant 37 : index
    %89 = vector.load %arg7[%c0_84, %c37_85] : memref<8x326xbf16, #tpu.memory_space<vmem>>, vector<8x288xbf16>
    %cst_86 = arith.constant dense<0.000000e+00> : vector<8x288xf32>
    %90 = tpu.matmul %88, %89, %cst_86 {dimension_numbers = #tpu.dot_dimension_numbers<[1], [0], [0], [1], [0, 0, 1, 1], [], []>} : vector<8x8xbf16>, vector<8x288xbf16>, vector<8x288xf32> -> vector<8x288xf32>
    %91 = arith.addf %86, %90 : vector<8x288xf32>
    %c8 = arith.constant 8 : index
    %c0_87 = arith.constant 0 : index
    %c0_88 = arith.constant 0 : index
    %92 = vector.load %arg2[%c8, %c0_87, %c0_88] : memref<9x8x8xbf16, #tpu.memory_space<vmem>>, vector<1x8x8xbf16>
    %93 = vector.shape_cast %92 : vector<1x8x8xbf16> to vector<8x8xbf16>
    %c0_89 = arith.constant 0 : index
    %c38 = arith.constant 38 : index
    %94 = vector.load %arg7[%c0_89, %c38] : memref<8x326xbf16, #tpu.memory_space<vmem>>, vector<8x288xbf16>
    %cst_90 = arith.constant dense<0.000000e+00> : vector<8x288xf32>
    %95 = tpu.matmul %93, %94, %cst_90 {dimension_numbers = #tpu.dot_dimension_numbers<[1], [0], [0], [1], [0, 0, 1, 1], [], []>} : vector<8x8xbf16>, vector<8x288xbf16>, vector<8x288xf32> -> vector<8x288xf32>
    %96 = arith.addf %91, %95 : vector<8x288xf32>
    %c0_91 = arith.constant 0 : index
    %c0_92 = arith.constant 0 : index
    %c0_93 = arith.constant 0 : index
    %97 = vector.load %arg4[%c0_91, %c0_92, %c0_93] : memref<1x8x288xf32, #tpu.memory_space<vmem>>, vector<1x8x288xf32>
    %98 = vector.shape_cast %97 : vector<1x8x288xf32> to vector<8x288xf32>
    %99 = vector.shape_cast %96 : vector<8x288xf32> to vector<1x8x288xf32>
    tpu.vector_store %arg4[%c0_91, %c0_92, %c0_93], %99 {strides = array<i32>} : memref<1x8x288xf32, #tpu.memory_space<vmem>>, vector<1x8x288xf32>,
    %c0_94 = arith.constant 0 : index
    %c0_95 = arith.constant 0 : index
    %100 = vector.load %arg3[%c0_94, %c0_95] : memref<1x288xf32, #tpu.memory_space<vmem>>, vector<1x288xf32>
    %101 = vector.broadcast %100 : vector<1x288xf32> to vector<8x288xf32>
    %102 = arith.mulf %96, %101 : vector<8x288xf32>
    %c0_96 = arith.constant 0 : index
    %c0_97 = arith.constant 0 : index
    %103 = vector.load %arg5[%c0_96, %c0_97] : memref<8x1xf32, #tpu.memory_space<vmem>>, vector<8x1xf32>
    %cst_98 = arith.constant dense<0.000000e+00> : vector<8xf32>
    %104 = vector.multi_reduction <add>, %102, %cst_98 [1] : vector<8x288xf32> to vector<8xf32>
    %105 = vector.shape_cast %104 : vector<8xf32> to vector<8x1xf32>
    %106 = arith.addf %103, %105 : vector<8x1xf32>
    %c0_99 = arith.constant 0 : index
    %c0_100 = arith.constant 0 : index
    %107 = vector.load %arg5[%c0_99, %c0_100] : memref<8x1xf32, #tpu.memory_space<vmem>>, vector<8x1xf32>
    tpu.vector_store %arg5[%c0_99, %c0_100], %106 {strides = array<i32>} : memref<8x1xf32, #tpu.memory_space<vmem>>, vector<8x1xf32>,
    %c0_101 = arith.constant 0 : index
    %c0_102 = arith.constant 0 : index
    %108 = vector.load %arg6[%c0_101, %c0_102] : memref<8x1xf32, #tpu.memory_space<vmem>>, vector<8x1xf32>
    %109 = arith.mulf %102, %102 : vector<8x288xf32>
    %cst_103 = arith.constant dense<0.000000e+00> : vector<8xf32>
    %110 = vector.multi_reduction <add>, %109, %cst_103 [1] : vector<8x288xf32> to vector<8xf32>
    %111 = vector.shape_cast %110 : vector<8xf32> to vector<8x1xf32>
    %112 = arith.addf %108, %111 : vector<8x1xf32>
    %c0_104 = arith.constant 0 : index
    %c0_105 = arith.constant 0 : index
    %113 = vector.load %arg6[%c0_104, %c0_105] : memref<8x1xf32, #tpu.memory_space<vmem>>, vector<8x1xf32>
    tpu.vector_store %arg6[%c0_104, %c0_105], %112 {strides = array<i32>} : memref<8x1xf32, #tpu.memory_space<vmem>>, vector<8x1xf32>,
    return
  }
  func.func @transform_0(%arg0: i32) -> (i32, i32, i32) {
    %c0_i32 = arith.constant 0 : i32
    %c0_i32_0 = arith.constant 0 : i32
    %c0_i32_1 = arith.constant 0 : i32
    return %arg0, %c0_i32, %c0_i32_0 : i32, i32, i32
  }
  func.func @transform_1(%arg0: i32) -> (i32, i32, i32) {
    %c0_i32 = arith.constant 0 : i32
    %c0_i32_0 = arith.constant 0 : i32
    %c0_i32_1 = arith.constant 0 : i32
    %c0_i32_2 = arith.constant 0 : i32
    return %c0_i32, %c0_i32_0, %c0_i32_1 : i32, i32, i32
  }
  func.func @transform_2(%arg0: i32) -> (i32, i32) {
    %c0_i32 = arith.constant 0 : i32
    %c0_i32_0 = arith.constant 0 : i32
    %c0_i32_1 = arith.constant 0 : i32
    return %c0_i32, %c0_i32_0 : i32, i32
  }
  func.func @transform_3(%arg0: i32) -> (i32, i32, i32) {
    %c0_i32 = arith.constant 0 : i32
    %c0_i32_0 = arith.constant 0 : i32
    %c0_i32_1 = arith.constant 0 : i32
    return %arg0, %c0_i32, %c0_i32_0 : i32, i32, i32
  }
  func.func @transform_4(%arg0: i32) -> (i32, i32) {
    %c0_i32 = arith.constant 0 : i32
    %c0_i32_0 = arith.constant 0 : i32
    %c0_i32_1 = arith.constant 0 : i32
    return %c0_i32, %c0_i32_0 : i32, i32
  }
  func.func @transform_5(%arg0: i32) -> (i32, i32) {
    %c0_i32 = arith.constant 0 : i32
    %c0_i32_0 = arith.constant 0 : i32
    %c0_i32_1 = arith.constant 0 : i32
    return %c0_i32, %c0_i32_0 : i32, i32
  }
}

module attributes {stable_mosaic.version = 11 : i64} {
  func.func @_final_kernel(%arg0: i32, %arg1: memref<1x8x288xf32, #tpu.memory_space<vmem>>, %arg2: memref<8x1xf32, #tpu.memory_space<vmem>>, %arg3: memref<8x1xf32, #tpu.memory_space<vmem>>, %arg4: memref<1x8x256xf32, #tpu.memory_space<vmem>>, %arg5: memref<1x8x256xf32, #tpu.memory_space<vmem>>) attributes {dimension_semantics = [#tpu.dimension_semantics<parallel>], iteration_bounds = array<i64: 2>, scalar_prefetch = 0 : i64, scratch_operands = 0 : i64, tpu.core_type = #tpu.core_type<tc>, window_params = [{transform_indices = @transform_0, window_bounds = array<i64: 1, 8, 288>}, {pipeline_mode = #tpu.pipeline_mode<synchronous>, transform_indices = @transform_1, window_bounds = array<i64: 8, 1>}, {pipeline_mode = #tpu.pipeline_mode<synchronous>, transform_indices = @transform_2, window_bounds = array<i64: 8, 1>}, {transform_indices = @transform_3, window_bounds = array<i64: 1, 8, 256>}, {transform_indices = @transform_4, window_bounds = array<i64: 1, 8, 256>}]} {
    %c0 = arith.constant 0 : index
    %c0_0 = arith.constant 0 : index
    %c0_1 = arith.constant 0 : index
    %0 = vector.load %arg1[%c0, %c0_0, %c0_1] : memref<1x8x288xf32, #tpu.memory_space<vmem>>, vector<1x8x288xf32>
    %1 = vector.shape_cast %0 : vector<1x8x288xf32> to vector<8x288xf32>
    %c0_2 = arith.constant 0 : index
    %c0_3 = arith.constant 0 : index
    %2 = vector.load %arg2[%c0_2, %c0_3] : memref<8x1xf32, #tpu.memory_space<vmem>>, vector<8x1xf32>
    %3 = vector.broadcast %2 : vector<8x1xf32> to vector<8x288xf32>
    %4 = arith.mulf %1, %3 : vector<8x288xf32>
    %c0_4 = arith.constant 0 : index
    %c0_5 = arith.constant 0 : index
    %5 = vector.load %arg3[%c0_4, %c0_5] : memref<8x1xf32, #tpu.memory_space<vmem>>, vector<8x1xf32>
    %6 = vector.broadcast %5 : vector<8x1xf32> to vector<8x288xf32>
    %7 = arith.addf %4, %6 : vector<8x288xf32>
    %cst = arith.constant 0.000000e+00 : f32
    %8 = vector.broadcast %cst : f32 to vector<8x288xf32>
    %9 = arith.maximumf %7, %8 : vector<8x288xf32>
    %10 = vector.extract_strided_slice %9 {offsets = [0, 0], sizes = [8, 16], strides = [1, 1]} : vector<8x288xf32> to vector<8x16xf32>
    %c0_6 = arith.constant 0 : index
    %c0_7 = arith.constant 0 : index
    %c0_8 = arith.constant 0 : index
    %11 = vector.load %arg4[%c0_6, %c0_7, %c0_8] : memref<1x8x256xf32, #tpu.memory_space<vmem>>, vector<1x8x16xf32>
    %12 = vector.shape_cast %11 : vector<1x8x16xf32> to vector<8x16xf32>
    %13 = arith.addf %10, %12 : vector<8x16xf32>
    %cst_9 = arith.constant 0.000000e+00 : f32
    %14 = vector.broadcast %cst_9 : f32 to vector<8x16xf32>
    %15 = arith.maximumf %13, %14 : vector<8x16xf32>
    %c0_10 = arith.constant 0 : index
    %c0_11 = arith.constant 0 : index
    %c0_12 = arith.constant 0 : index
    %16 = vector.load %arg5[%c0_10, %c0_11, %c0_12] : memref<1x8x256xf32, #tpu.memory_space<vmem>>, vector<1x8x16xf32>
    %17 = vector.shape_cast %16 : vector<1x8x16xf32> to vector<8x16xf32>
    %18 = vector.shape_cast %15 : vector<8x16xf32> to vector<1x8x16xf32>
    tpu.vector_store %arg5[%c0_10, %c0_11, %c0_12], %18 {strides = array<i32>} : memref<1x8x256xf32, #tpu.memory_space<vmem>>, vector<1x8x16xf32>,
    %19 = vector.extract_strided_slice %9 {offsets = [0, 18], sizes = [8, 16], strides = [1, 1]} : vector<8x288xf32> to vector<8x16xf32>
    %c0_13 = arith.constant 0 : index
    %c0_14 = arith.constant 0 : index
    %c16 = arith.constant 16 : index
    %20 = vector.load %arg4[%c0_13, %c0_14, %c16] : memref<1x8x256xf32, #tpu.memory_space<vmem>>, vector<1x8x16xf32>
    %21 = vector.shape_cast %20 : vector<1x8x16xf32> to vector<8x16xf32>
    %22 = arith.addf %19, %21 : vector<8x16xf32>
    %cst_15 = arith.constant 0.000000e+00 : f32
    %23 = vector.broadcast %cst_15 : f32 to vector<8x16xf32>
    %24 = arith.maximumf %22, %23 : vector<8x16xf32>
    %c0_16 = arith.constant 0 : index
    %c0_17 = arith.constant 0 : index
    %c16_18 = arith.constant 16 : index
    %25 = vector.load %arg5[%c0_16, %c0_17, %c16_18] : memref<1x8x256xf32, #tpu.memory_space<vmem>>, vector<1x8x16xf32>
    %26 = vector.shape_cast %25 : vector<1x8x16xf32> to vector<8x16xf32>
    %27 = vector.shape_cast %24 : vector<8x16xf32> to vector<1x8x16xf32>
    tpu.vector_store %arg5[%c0_16, %c0_17, %c16_18], %27 {strides = array<i32>} : memref<1x8x256xf32, #tpu.memory_space<vmem>>, vector<1x8x16xf32>,
    %28 = vector.extract_strided_slice %9 {offsets = [0, 36], sizes = [8, 16], strides = [1, 1]} : vector<8x288xf32> to vector<8x16xf32>
    %c0_19 = arith.constant 0 : index
    %c0_20 = arith.constant 0 : index
    %c32 = arith.constant 32 : index
    %29 = vector.load %arg4[%c0_19, %c0_20, %c32] : memref<1x8x256xf32, #tpu.memory_space<vmem>>, vector<1x8x16xf32>
    %30 = vector.shape_cast %29 : vector<1x8x16xf32> to vector<8x16xf32>
    %31 = arith.addf %28, %30 : vector<8x16xf32>
    %cst_21 = arith.constant 0.000000e+00 : f32
    %32 = vector.broadcast %cst_21 : f32 to vector<8x16xf32>
    %33 = arith.maximumf %31, %32 : vector<8x16xf32>
    %c0_22 = arith.constant 0 : index
    %c0_23 = arith.constant 0 : index
    %c32_24 = arith.constant 32 : index
    %34 = vector.load %arg5[%c0_22, %c0_23, %c32_24] : memref<1x8x256xf32, #tpu.memory_space<vmem>>, vector<1x8x16xf32>
    %35 = vector.shape_cast %34 : vector<1x8x16xf32> to vector<8x16xf32>
    %36 = vector.shape_cast %33 : vector<8x16xf32> to vector<1x8x16xf32>
    tpu.vector_store %arg5[%c0_22, %c0_23, %c32_24], %36 {strides = array<i32>} : memref<1x8x256xf32, #tpu.memory_space<vmem>>, vector<1x8x16xf32>,
    %37 = vector.extract_strided_slice %9 {offsets = [0, 54], sizes = [8, 16], strides = [1, 1]} : vector<8x288xf32> to vector<8x16xf32>
    %c0_25 = arith.constant 0 : index
    %c0_26 = arith.constant 0 : index
    %c48 = arith.constant 48 : index
    %38 = vector.load %arg4[%c0_25, %c0_26, %c48] : memref<1x8x256xf32, #tpu.memory_space<vmem>>, vector<1x8x16xf32>
    %39 = vector.shape_cast %38 : vector<1x8x16xf32> to vector<8x16xf32>
    %40 = arith.addf %37, %39 : vector<8x16xf32>
    %cst_27 = arith.constant 0.000000e+00 : f32
    %41 = vector.broadcast %cst_27 : f32 to vector<8x16xf32>
    %42 = arith.maximumf %40, %41 : vector<8x16xf32>
    %c0_28 = arith.constant 0 : index
    %c0_29 = arith.constant 0 : index
    %c48_30 = arith.constant 48 : index
    %43 = vector.load %arg5[%c0_28, %c0_29, %c48_30] : memref<1x8x256xf32, #tpu.memory_space<vmem>>, vector<1x8x16xf32>
    %44 = vector.shape_cast %43 : vector<1x8x16xf32> to vector<8x16xf32>
    %45 = vector.shape_cast %42 : vector<8x16xf32> to vector<1x8x16xf32>
    tpu.vector_store %arg5[%c0_28, %c0_29, %c48_30], %45 {strides = array<i32>} : memref<1x8x256xf32, #tpu.memory_space<vmem>>, vector<1x8x16xf32>,
    %46 = vector.extract_strided_slice %9 {offsets = [0, 72], sizes = [8, 16], strides = [1, 1]} : vector<8x288xf32> to vector<8x16xf32>
    %c0_31 = arith.constant 0 : index
    %c0_32 = arith.constant 0 : index
    %c64 = arith.constant 64 : index
    %47 = vector.load %arg4[%c0_31, %c0_32, %c64] : memref<1x8x256xf32, #tpu.memory_space<vmem>>, vector<1x8x16xf32>
    %48 = vector.shape_cast %47 : vector<1x8x16xf32> to vector<8x16xf32>
    %49 = arith.addf %46, %48 : vector<8x16xf32>
    %cst_33 = arith.constant 0.000000e+00 : f32
    %50 = vector.broadcast %cst_33 : f32 to vector<8x16xf32>
    %51 = arith.maximumf %49, %50 : vector<8x16xf32>
    %c0_34 = arith.constant 0 : index
    %c0_35 = arith.constant 0 : index
    %c64_36 = arith.constant 64 : index
    %52 = vector.load %arg5[%c0_34, %c0_35, %c64_36] : memref<1x8x256xf32, #tpu.memory_space<vmem>>, vector<1x8x16xf32>
    %53 = vector.shape_cast %52 : vector<1x8x16xf32> to vector<8x16xf32>
    %54 = vector.shape_cast %51 : vector<8x16xf32> to vector<1x8x16xf32>
    tpu.vector_store %arg5[%c0_34, %c0_35, %c64_36], %54 {strides = array<i32>} : memref<1x8x256xf32, #tpu.memory_space<vmem>>, vector<1x8x16xf32>,
    %55 = vector.extract_strided_slice %9 {offsets = [0, 90], sizes = [8, 16], strides = [1, 1]} : vector<8x288xf32> to vector<8x16xf32>
    %c0_37 = arith.constant 0 : index
    %c0_38 = arith.constant 0 : index
    %c80 = arith.constant 80 : index
    %56 = vector.load %arg4[%c0_37, %c0_38, %c80] : memref<1x8x256xf32, #tpu.memory_space<vmem>>, vector<1x8x16xf32>
    %57 = vector.shape_cast %56 : vector<1x8x16xf32> to vector<8x16xf32>
    %58 = arith.addf %55, %57 : vector<8x16xf32>
    %cst_39 = arith.constant 0.000000e+00 : f32
    %59 = vector.broadcast %cst_39 : f32 to vector<8x16xf32>
    %60 = arith.maximumf %58, %59 : vector<8x16xf32>
    %c0_40 = arith.constant 0 : index
    %c0_41 = arith.constant 0 : index
    %c80_42 = arith.constant 80 : index
    %61 = vector.load %arg5[%c0_40, %c0_41, %c80_42] : memref<1x8x256xf32, #tpu.memory_space<vmem>>, vector<1x8x16xf32>
    %62 = vector.shape_cast %61 : vector<1x8x16xf32> to vector<8x16xf32>
    %63 = vector.shape_cast %60 : vector<8x16xf32> to vector<1x8x16xf32>
    tpu.vector_store %arg5[%c0_40, %c0_41, %c80_42], %63 {strides = array<i32>} : memref<1x8x256xf32, #tpu.memory_space<vmem>>, vector<1x8x16xf32>,
    %64 = vector.extract_strided_slice %9 {offsets = [0, 108], sizes = [8, 16], strides = [1, 1]} : vector<8x288xf32> to vector<8x16xf32>
    %c0_43 = arith.constant 0 : index
    %c0_44 = arith.constant 0 : index
    %c96 = arith.constant 96 : index
    %65 = vector.load %arg4[%c0_43, %c0_44, %c96] : memref<1x8x256xf32, #tpu.memory_space<vmem>>, vector<1x8x16xf32>
    %66 = vector.shape_cast %65 : vector<1x8x16xf32> to vector<8x16xf32>
    %67 = arith.addf %64, %66 : vector<8x16xf32>
    %cst_45 = arith.constant 0.000000e+00 : f32
    %68 = vector.broadcast %cst_45 : f32 to vector<8x16xf32>
    %69 = arith.maximumf %67, %68 : vector<8x16xf32>
    %c0_46 = arith.constant 0 : index
    %c0_47 = arith.constant 0 : index
    %c96_48 = arith.constant 96 : index
    %70 = vector.load %arg5[%c0_46, %c0_47, %c96_48] : memref<1x8x256xf32, #tpu.memory_space<vmem>>, vector<1x8x16xf32>
    %71 = vector.shape_cast %70 : vector<1x8x16xf32> to vector<8x16xf32>
    %72 = vector.shape_cast %69 : vector<8x16xf32> to vector<1x8x16xf32>
    tpu.vector_store %arg5[%c0_46, %c0_47, %c96_48], %72 {strides = array<i32>} : memref<1x8x256xf32, #tpu.memory_space<vmem>>, vector<1x8x16xf32>,
    %73 = vector.extract_strided_slice %9 {offsets = [0, 126], sizes = [8, 16], strides = [1, 1]} : vector<8x288xf32> to vector<8x16xf32>
    %c0_49 = arith.constant 0 : index
    %c0_50 = arith.constant 0 : index
    %c112 = arith.constant 112 : index
    %74 = vector.load %arg4[%c0_49, %c0_50, %c112] : memref<1x8x256xf32, #tpu.memory_space<vmem>>, vector<1x8x16xf32>
    %75 = vector.shape_cast %74 : vector<1x8x16xf32> to vector<8x16xf32>
    %76 = arith.addf %73, %75 : vector<8x16xf32>
    %cst_51 = arith.constant 0.000000e+00 : f32
    %77 = vector.broadcast %cst_51 : f32 to vector<8x16xf32>
    %78 = arith.maximumf %76, %77 : vector<8x16xf32>
    %c0_52 = arith.constant 0 : index
    %c0_53 = arith.constant 0 : index
    %c112_54 = arith.constant 112 : index
    %79 = vector.load %arg5[%c0_52, %c0_53, %c112_54] : memref<1x8x256xf32, #tpu.memory_space<vmem>>, vector<1x8x16xf32>
    %80 = vector.shape_cast %79 : vector<1x8x16xf32> to vector<8x16xf32>
    %81 = vector.shape_cast %78 : vector<8x16xf32> to vector<1x8x16xf32>
    tpu.vector_store %arg5[%c0_52, %c0_53, %c112_54], %81 {strides = array<i32>} : memref<1x8x256xf32, #tpu.memory_space<vmem>>, vector<1x8x16xf32>,
    %82 = vector.extract_strided_slice %9 {offsets = [0, 144], sizes = [8, 16], strides = [1, 1]} : vector<8x288xf32> to vector<8x16xf32>
    %c0_55 = arith.constant 0 : index
    %c0_56 = arith.constant 0 : index
    %c128 = arith.constant 128 : index
    %83 = vector.load %arg4[%c0_55, %c0_56, %c128] : memref<1x8x256xf32, #tpu.memory_space<vmem>>, vector<1x8x16xf32>
    %84 = vector.shape_cast %83 : vector<1x8x16xf32> to vector<8x16xf32>
    %85 = arith.addf %82, %84 : vector<8x16xf32>
    %cst_57 = arith.constant 0.000000e+00 : f32
    %86 = vector.broadcast %cst_57 : f32 to vector<8x16xf32>
    %87 = arith.maximumf %85, %86 : vector<8x16xf32>
    %c0_58 = arith.constant 0 : index
    %c0_59 = arith.constant 0 : index
    %c128_60 = arith.constant 128 : index
    %88 = vector.load %arg5[%c0_58, %c0_59, %c128_60] : memref<1x8x256xf32, #tpu.memory_space<vmem>>, vector<1x8x16xf32>
    %89 = vector.shape_cast %88 : vector<1x8x16xf32> to vector<8x16xf32>
    %90 = vector.shape_cast %87 : vector<8x16xf32> to vector<1x8x16xf32>
    tpu.vector_store %arg5[%c0_58, %c0_59, %c128_60], %90 {strides = array<i32>} : memref<1x8x256xf32, #tpu.memory_space<vmem>>, vector<1x8x16xf32>,
    %91 = vector.extract_strided_slice %9 {offsets = [0, 162], sizes = [8, 16], strides = [1, 1]} : vector<8x288xf32> to vector<8x16xf32>
    %c0_61 = arith.constant 0 : index
    %c0_62 = arith.constant 0 : index
    %c144 = arith.constant 144 : index
    %92 = vector.load %arg4[%c0_61, %c0_62, %c144] : memref<1x8x256xf32, #tpu.memory_space<vmem>>, vector<1x8x16xf32>
    %93 = vector.shape_cast %92 : vector<1x8x16xf32> to vector<8x16xf32>
    %94 = arith.addf %91, %93 : vector<8x16xf32>
    %cst_63 = arith.constant 0.000000e+00 : f32
    %95 = vector.broadcast %cst_63 : f32 to vector<8x16xf32>
    %96 = arith.maximumf %94, %95 : vector<8x16xf32>
    %c0_64 = arith.constant 0 : index
    %c0_65 = arith.constant 0 : index
    %c144_66 = arith.constant 144 : index
    %97 = vector.load %arg5[%c0_64, %c0_65, %c144_66] : memref<1x8x256xf32, #tpu.memory_space<vmem>>, vector<1x8x16xf32>
    %98 = vector.shape_cast %97 : vector<1x8x16xf32> to vector<8x16xf32>
    %99 = vector.shape_cast %96 : vector<8x16xf32> to vector<1x8x16xf32>
    tpu.vector_store %arg5[%c0_64, %c0_65, %c144_66], %99 {strides = array<i32>} : memref<1x8x256xf32, #tpu.memory_space<vmem>>, vector<1x8x16xf32>,
    %100 = vector.extract_strided_slice %9 {offsets = [0, 180], sizes = [8, 16], strides = [1, 1]} : vector<8x288xf32> to vector<8x16xf32>
    %c0_67 = arith.constant 0 : index
    %c0_68 = arith.constant 0 : index
    %c160 = arith.constant 160 : index
    %101 = vector.load %arg4[%c0_67, %c0_68, %c160] : memref<1x8x256xf32, #tpu.memory_space<vmem>>, vector<1x8x16xf32>
    %102 = vector.shape_cast %101 : vector<1x8x16xf32> to vector<8x16xf32>
    %103 = arith.addf %100, %102 : vector<8x16xf32>
    %cst_69 = arith.constant 0.000000e+00 : f32
    %104 = vector.broadcast %cst_69 : f32 to vector<8x16xf32>
    %105 = arith.maximumf %103, %104 : vector<8x16xf32>
    %c0_70 = arith.constant 0 : index
    %c0_71 = arith.constant 0 : index
    %c160_72 = arith.constant 160 : index
    %106 = vector.load %arg5[%c0_70, %c0_71, %c160_72] : memref<1x8x256xf32, #tpu.memory_space<vmem>>, vector<1x8x16xf32>
    %107 = vector.shape_cast %106 : vector<1x8x16xf32> to vector<8x16xf32>
    %108 = vector.shape_cast %105 : vector<8x16xf32> to vector<1x8x16xf32>
    tpu.vector_store %arg5[%c0_70, %c0_71, %c160_72], %108 {strides = array<i32>} : memref<1x8x256xf32, #tpu.memory_space<vmem>>, vector<1x8x16xf32>,
    %109 = vector.extract_strided_slice %9 {offsets = [0, 198], sizes = [8, 16], strides = [1, 1]} : vector<8x288xf32> to vector<8x16xf32>
    %c0_73 = arith.constant 0 : index
    %c0_74 = arith.constant 0 : index
    %c176 = arith.constant 176 : index
    %110 = vector.load %arg4[%c0_73, %c0_74, %c176] : memref<1x8x256xf32, #tpu.memory_space<vmem>>, vector<1x8x16xf32>
    %111 = vector.shape_cast %110 : vector<1x8x16xf32> to vector<8x16xf32>
    %112 = arith.addf %109, %111 : vector<8x16xf32>
    %cst_75 = arith.constant 0.000000e+00 : f32
    %113 = vector.broadcast %cst_75 : f32 to vector<8x16xf32>
    %114 = arith.maximumf %112, %113 : vector<8x16xf32>
    %c0_76 = arith.constant 0 : index
    %c0_77 = arith.constant 0 : index
    %c176_78 = arith.constant 176 : index
    %115 = vector.load %arg5[%c0_76, %c0_77, %c176_78] : memref<1x8x256xf32, #tpu.memory_space<vmem>>, vector<1x8x16xf32>
    %116 = vector.shape_cast %115 : vector<1x8x16xf32> to vector<8x16xf32>
    %117 = vector.shape_cast %114 : vector<8x16xf32> to vector<1x8x16xf32>
    tpu.vector_store %arg5[%c0_76, %c0_77, %c176_78], %117 {strides = array<i32>} : memref<1x8x256xf32, #tpu.memory_space<vmem>>, vector<1x8x16xf32>,
    %118 = vector.extract_strided_slice %9 {offsets = [0, 216], sizes = [8, 16], strides = [1, 1]} : vector<8x288xf32> to vector<8x16xf32>
    %c0_79 = arith.constant 0 : index
    %c0_80 = arith.constant 0 : index
    %c192 = arith.constant 192 : index
    %119 = vector.load %arg4[%c0_79, %c0_80, %c192] : memref<1x8x256xf32, #tpu.memory_space<vmem>>, vector<1x8x16xf32>
    %120 = vector.shape_cast %119 : vector<1x8x16xf32> to vector<8x16xf32>
    %121 = arith.addf %118, %120 : vector<8x16xf32>
    %cst_81 = arith.constant 0.000000e+00 : f32
    %122 = vector.broadcast %cst_81 : f32 to vector<8x16xf32>
    %123 = arith.maximumf %121, %122 : vector<8x16xf32>
    %c0_82 = arith.constant 0 : index
    %c0_83 = arith.constant 0 : index
    %c192_84 = arith.constant 192 : index
    %124 = vector.load %arg5[%c0_82, %c0_83, %c192_84] : memref<1x8x256xf32, #tpu.memory_space<vmem>>, vector<1x8x16xf32>
    %125 = vector.shape_cast %124 : vector<1x8x16xf32> to vector<8x16xf32>
    %126 = vector.shape_cast %123 : vector<8x16xf32> to vector<1x8x16xf32>
    tpu.vector_store %arg5[%c0_82, %c0_83, %c192_84], %126 {strides = array<i32>} : memref<1x8x256xf32, #tpu.memory_space<vmem>>, vector<1x8x16xf32>,
    %127 = vector.extract_strided_slice %9 {offsets = [0, 234], sizes = [8, 16], strides = [1, 1]} : vector<8x288xf32> to vector<8x16xf32>
    %c0_85 = arith.constant 0 : index
    %c0_86 = arith.constant 0 : index
    %c208 = arith.constant 208 : index
    %128 = vector.load %arg4[%c0_85, %c0_86, %c208] : memref<1x8x256xf32, #tpu.memory_space<vmem>>, vector<1x8x16xf32>
    %129 = vector.shape_cast %128 : vector<1x8x16xf32> to vector<8x16xf32>
    %130 = arith.addf %127, %129 : vector<8x16xf32>
    %cst_87 = arith.constant 0.000000e+00 : f32
    %131 = vector.broadcast %cst_87 : f32 to vector<8x16xf32>
    %132 = arith.maximumf %130, %131 : vector<8x16xf32>
    %c0_88 = arith.constant 0 : index
    %c0_89 = arith.constant 0 : index
    %c208_90 = arith.constant 208 : index
    %133 = vector.load %arg5[%c0_88, %c0_89, %c208_90] : memref<1x8x256xf32, #tpu.memory_space<vmem>>, vector<1x8x16xf32>
    %134 = vector.shape_cast %133 : vector<1x8x16xf32> to vector<8x16xf32>
    %135 = vector.shape_cast %132 : vector<8x16xf32> to vector<1x8x16xf32>
    tpu.vector_store %arg5[%c0_88, %c0_89, %c208_90], %135 {strides = array<i32>} : memref<1x8x256xf32, #tpu.memory_space<vmem>>, vector<1x8x16xf32>,
    %136 = vector.extract_strided_slice %9 {offsets = [0, 252], sizes = [8, 16], strides = [1, 1]} : vector<8x288xf32> to vector<8x16xf32>
    %c0_91 = arith.constant 0 : index
    %c0_92 = arith.constant 0 : index
    %c224 = arith.constant 224 : index
    %137 = vector.load %arg4[%c0_91, %c0_92, %c224] : memref<1x8x256xf32, #tpu.memory_space<vmem>>, vector<1x8x16xf32>
    %138 = vector.shape_cast %137 : vector<1x8x16xf32> to vector<8x16xf32>
    %139 = arith.addf %136, %138 : vector<8x16xf32>
    %cst_93 = arith.constant 0.000000e+00 : f32
    %140 = vector.broadcast %cst_93 : f32 to vector<8x16xf32>
    %141 = arith.maximumf %139, %140 : vector<8x16xf32>
    %c0_94 = arith.constant 0 : index
    %c0_95 = arith.constant 0 : index
    %c224_96 = arith.constant 224 : index
    %142 = vector.load %arg5[%c0_94, %c0_95, %c224_96] : memref<1x8x256xf32, #tpu.memory_space<vmem>>, vector<1x8x16xf32>
    %143 = vector.shape_cast %142 : vector<1x8x16xf32> to vector<8x16xf32>
    %144 = vector.shape_cast %141 : vector<8x16xf32> to vector<1x8x16xf32>
    tpu.vector_store %arg5[%c0_94, %c0_95, %c224_96], %144 {strides = array<i32>} : memref<1x8x256xf32, #tpu.memory_space<vmem>>, vector<1x8x16xf32>,
    %145 = vector.extract_strided_slice %9 {offsets = [0, 270], sizes = [8, 16], strides = [1, 1]} : vector<8x288xf32> to vector<8x16xf32>
    %c0_97 = arith.constant 0 : index
    %c0_98 = arith.constant 0 : index
    %c240 = arith.constant 240 : index
    %146 = vector.load %arg4[%c0_97, %c0_98, %c240] : memref<1x8x256xf32, #tpu.memory_space<vmem>>, vector<1x8x16xf32>
    %147 = vector.shape_cast %146 : vector<1x8x16xf32> to vector<8x16xf32>
    %148 = arith.addf %145, %147 : vector<8x16xf32>
    %cst_99 = arith.constant 0.000000e+00 : f32
    %149 = vector.broadcast %cst_99 : f32 to vector<8x16xf32>
    %150 = arith.maximumf %148, %149 : vector<8x16xf32>
    %c0_100 = arith.constant 0 : index
    %c0_101 = arith.constant 0 : index
    %c240_102 = arith.constant 240 : index
    %151 = vector.load %arg5[%c0_100, %c0_101, %c240_102] : memref<1x8x256xf32, #tpu.memory_space<vmem>>, vector<1x8x16xf32>
    %152 = vector.shape_cast %151 : vector<1x8x16xf32> to vector<8x16xf32>
    %153 = vector.shape_cast %150 : vector<8x16xf32> to vector<1x8x16xf32>
    tpu.vector_store %arg5[%c0_100, %c0_101, %c240_102], %153 {strides = array<i32>} : memref<1x8x256xf32, #tpu.memory_space<vmem>>, vector<1x8x16xf32>,
    return
  }
  func.func @transform_0(%arg0: i32) -> (i32, i32, i32) {
    %c0_i32 = arith.constant 0 : i32
    %c0_i32_0 = arith.constant 0 : i32
    %c0_i32_1 = arith.constant 0 : i32
    return %arg0, %c0_i32, %c0_i32_0 : i32, i32, i32
  }
  func.func @transform_1(%arg0: i32) -> (i32, i32) {
    %c0_i32 = arith.constant 0 : i32
    %c0_i32_0 = arith.constant 0 : i32
    %c0_i32_1 = arith.constant 0 : i32
    return %c0_i32, %c0_i32_0 : i32, i32
  }
  func.func @transform_2(%arg0: i32) -> (i32, i32) {
    %c0_i32 = arith.constant 0 : i32
    %c0_i32_0 = arith.constant 0 : i32
    %c0_i32_1 = arith.constant 0 : i32
    return %c0_i32, %c0_i32_0 : i32, i32
  }
  func.func @transform_3(%arg0: i32) -> (i32, i32, i32) {
    %c0_i32 = arith.constant 0 : i32
    %c0_i32_0 = arith.constant 0 : i32
    %c0_i32_1 = arith.constant 0 : i32
    return %arg0, %c0_i32, %c0_i32_0 : i32, i32, i32
  }
  func.func @transform_4(%arg0: i32) -> (i32, i32, i32) {
    %c0_i32 = arith.constant 0 : i32
    %c0_i32_0 = arith.constant 0 : i32
    %c0_i32_1 = arith.constant 0 : i32
    return %arg0, %c0_i32, %c0_i32_0 : i32, i32, i32
  }
}

</mosaic_0001>

<llo_original>
// kernel: residual_block_forward.5
$region0: #{residual_block_forward.5}
  #allocation0 [shape = 'u32[]', space=smem, size = 0x4, offset = 0x4, fixed_abs, tag = 'smem constant byte address 0x4 - core index']
  #allocation1 [shape = 'u32[144,128]{1,0:T(1,128)}', space=vmem, size = 0x12000, scoped, tag = 'internal scratch']
  %s0 = inlined_call_operand.vmem [shape: f32[2,8,288], index: 0, kind: input, shape index: {}]
  %s1 = inlined_call_operand.vmem [shape: f32[8,1], index: 1, kind: input, shape index: {}]
  %s2 = inlined_call_operand.vmem [shape: f32[8,1], index: 2, kind: input, shape index: {}]
  %s3 = inlined_call_operand.vmem [shape: f32[2,8,256], index: 3, kind: input, shape index: {}]
  %s4 = inlined_call_operand.vmem [shape: f32[2,8,256], index: 4, kind: output, shape index: {}]
  %s5 = sld [smem:[#allocation0]]
  $region49: #{residual_block_forward.5} parent=0
    _
  %s7 = ssub.s32 1, %s5
  %s8 = scalar_select 0, %s7, %s5
  loop: start=0, step=1, limit=4
  $region2: #{residual_block_forward.5} parent=0 // loop_pre_header
    _
  $region3: #{residual_block_forward.5} parent=0 // loop_header
    %s10 = sphi 0, %s14
    %p11 = scmp.ge.s32.totalorder %s10, 4
    %s20 = sphi 0, %s22
    %s23 = sphi 0, %s20
    %s24 = sphi 0, %s23
    %s40 = sphi 0, %s24
    %s44 = sphi 0, %s44
    %s46 = sphi 0, %s44
    %s47 = sphi 0, %s46
    %s61 = sphi 0, %s47
    %s65 = sphi 0, %s65
    %s67 = sphi 0, %s65
    %s68 = sphi 0, %s67
    %s82 = sphi 0, %s68
    %s88 = sphi 0, %s90
    %s91 = sphi 0, %s88
    %s92 = sphi 0, %s91
    %s108 = sphi 0, %s92
    %s114 = sphi 0, %s116
    %s117 = sphi 0, %s114
    %s118 = sphi 0, %s117
    %s134 = sphi 0, %s118
  $region4: #{residual_block_forward.5} parent=0 // loop_header_branch
    %13 = sbr.rel (%p11) target = $region8
  $region5: #{residual_block_forward.5} parent=0 // loop_body
    %s15 = ssub.s32 %s10, 1
    %s16 = ssub.s32 %s10, 2
    %s17 = sadd.s32 %s10, 1
    %s18 = ssub.s32 %s10, %s17
    %p19 = scmp.eq.s32.totalorder %s18, 0
    %s21 = sadd.s32 %s20, 1
    %s22 = scalar_select %p19, %s20, %s21
    %p25 = pneg %p19
    %p26 = scmp.eq.s32.totalorder %s10, 1
    %p27 = por %p25, %p26
    %p28 = scmp.ne.s32.totalorder %s20, %s23
    %p29 = scmp.eq.s32.totalorder %s10, 0
    %p30 = por %p28, %p29
    %p31 = scmp.ne.s32.totalorder %s20, %s23
    %p32 = scmp.eq.s32.totalorder %s15, 1
    %p33 = por %p31, %p32
    %p34 = scmp.ne.s32.totalorder %s23, %s24
    %p35 = scmp.eq.s32.totalorder %s15, 0
    %p36 = por %p34, %p35
    %p37 = scmp.ne.s32.totalorder %s23, %s24
    %p38 = scmp.eq.s32.totalorder %s16, 1
    %p39 = por %p37, %p38
    %p41 = scmp.ne.s32.totalorder %s24, %s40
    %p42 = scmp.eq.s32.totalorder %s16, 0
    %p43 = por %p41, %p42
    %s45 = sadd.s32 %s44, 1
    %p48 = scmp.eq.s32.totalorder %s10, 1
    %p49 = scmp.ne.s32.totalorder %s44, %s46
    %p50 = scmp.eq.s32.totalorder %s10, 0
    %p51 = por %p49, %p50
    %p52 = scmp.ne.s32.totalorder %s44, %s46
    %p53 = scmp.eq.s32.totalorder %s15, 1
    %p54 = por %p52, %p53
    %p55 = scmp.ne.s32.totalorder %s46, %s47
    %p56 = scmp.eq.s32.totalorder %s15, 0
    %p57 = por %p55, %p56
    %p58 = scmp.ne.s32.totalorder %s46, %s47
    %p59 = scmp.eq.s32.totalorder %s16, 1
    %p60 = por %p58, %p59
    %p62 = scmp.ne.s32.totalorder %s47, %s61
    %p63 = scmp.eq.s32.totalorder %s16, 0
    %p64 = por %p62, %p63
    %s66 = sadd.s32 %s65, 1
    %p69 = scmp.eq.s32.totalorder %s10, 1
    %p70 = scmp.ne.s32.totalorder %s65, %s67
    %p71 = scmp.eq.s32.totalorder %s10, 0
    %p72 = por %p70, %p71
    %p73 = scmp.ne.s32.totalorder %s65, %s67
    %p74 = scmp.eq.s32.totalorder %s15, 1
    %p75 = por %p73, %p74
    %p76 = scmp.ne.s32.totalorder %s67, %s68
    %p77 = scmp.eq.s32.totalorder %s15, 0
    %p78 = por %p76, %p77
    %p79 = scmp.ne.s32.totalorder %s67, %s68
    %p80 = scmp.eq.s32.totalorder %s16, 1
    %p81 = por %p79, %p80
    %p83 = scmp.ne.s32.totalorder %s68, %s82
    %p84 = scmp.eq.s32.totalorder %s16, 0
    %p85 = por %p83, %p84
    %s86 = ssub.s32 %s10, %s17
    %p87 = scmp.eq.s32.totalorder %s86, 0
    %s89 = sadd.s32 %s88, 1
    %s90 = scalar_select %p87, %s88, %s89
    %p93 = pneg %p87
    %p94 = scmp.eq.s32.totalorder %s10, 1
    %p95 = por %p93, %p94
    %p96 = scmp.ne.s32.totalorder %s88, %s91
    %p97 = scmp.eq.s32.totalorder %s10, 0
    %p98 = por %p96, %p97
    %p99 = scmp.ne.s32.totalorder %s88, %s91
    %p100 = scmp.eq.s32.totalorder %s15, 1
    %p101 = por %p99, %p100
    %p102 = scmp.ne.s32.totalorder %s91, %s92
    %p103 = scmp.eq.s32.totalorder %s15, 0
    %p104 = por %p102, %p103
    %p105 = scmp.ne.s32.totalorder %s91, %s92
    %p106 = scmp.eq.s32.totalorder %s16, 1
    %p107 = por %p105, %p106
    %p109 = scmp.ne.s32.totalorder %s92, %s108
    %p110 = scmp.eq.s32.totalorder %s16, 0
    %p111 = por %p109, %p110
    %s112 = ssub.s32 %s10, %s17
    %p113 = scmp.eq.s32.totalorder %s112, 0
    %s115 = sadd.s32 %s114, 1
    %s116 = scalar_select %p113, %s114, %s115
    %p119 = pneg %p113
    %p120 = scmp.eq.s32.totalorder %s10, 1
    %p121 = por %p119, %p120
    %p122 = scmp.ne.s32.totalorder %s114, %s117
    %p123 = scmp.eq.s32.totalorder %s10, 0
    %p124 = por %p122, %p123
    %p125 = scmp.ne.s32.totalorder %s114, %s117
    %p126 = scmp.eq.s32.totalorder %s15, 1
    %p127 = por %p125, %p126
    %p128 = scmp.ne.s32.totalorder %s117, %s118
    %p129 = scmp.eq.s32.totalorder %s15, 0
    %p130 = por %p128, %p129
    %p131 = scmp.ne.s32.totalorder %s117, %s118
    %p132 = scmp.eq.s32.totalorder %s16, 1
    %p133 = por %p131, %p132
    %p135 = scmp.ne.s32.totalorder %s118, %s134
    %p136 = scmp.eq.s32.totalorder %s16, 0
    %p137 = por %p135, %p136
    %p138 = scmp.le.s32.totalorder 1, %s10
    %p139 = scmp.lt.s32.totalorder %s10, 3
    %p140 = pnand %p138, %p139
    %p141 = pneg %p140
    // Predicated region
    $region9: #{residual_block_forward.5} parent=5 // pred_check
      _
    $region10: #{residual_block_forward.5} parent=5 // pred_check_branch
      %143 = sbr.rel (%p140) target = $region12
    $region11: #{residual_block_forward.5} parent=5 // pred_region
      %s144 = ssub.s32 %s10, 1
      // Predicated region
      $region13: #{residual_block_forward.5} parent=11 // pred_check
        %p145 = pneg %p57
      $region14: #{residual_block_forward.5} parent=11 // pred_check_branch
        %147 = sbr.rel (%p145) target = $region16
      $region15: #{residual_block_forward.5} parent=11 // pred_region
        _
      $region16: #{residual_block_forward.5} parent=11 // pred_fallthru
        _
      // Predicated region
      $region17: #{residual_block_forward.5} parent=11 // pred_check
        %p148 = pneg %p78
      $region18: #{residual_block_forward.5} parent=11 // pred_check_branch
        %150 = sbr.rel (%p148) target = $region20
      $region19: #{residual_block_forward.5} parent=11 // pred_region
        _
      $region20: #{residual_block_forward.5} parent=11 // pred_fallthru
        _
    $region12: #{residual_block_forward.5} parent=5 // pred_fallthru
      _
    %p151 = scmp.lt.s32.totalorder %s10, 2
    // Predicated region
    $region21: #{residual_block_forward.5} parent=5 // pred_check
      %p152 = pneg %p151
    $region22: #{residual_block_forward.5} parent=5 // pred_check_branch
      %154 = sbr.rel (%p152) target = $region24
    $region23: #{residual_block_forward.5} parent=5 // pred_region
      // Predicated region
      $region25: #{residual_block_forward.5} parent=23 // pred_check
        %p155 = pneg %p30
      $region26: #{residual_block_forward.5} parent=23 // pred_check_branch
        %157 = sbr.rel (%p155) target = $region28
      $region27: #{residual_block_forward.5} parent=23 // pred_region
        %p158 = scmp.lt.s32.totalorder %s10, 1
        %s159 = scalar_select %p158, %s10, 1
        %s160 = smul.addr %s159, 3
        %s161 = smul.addr %s160, 8
        %s162 = scalar_lea.vmem %s0, %s161
      $region28: #{residual_block_forward.5} parent=23 // pred_fallthru
        _
      // Predicated region
      $region29: #{residual_block_forward.5} parent=23 // pred_check
        %p163 = pneg %p98
      $region30: #{residual_block_forward.5} parent=23 // pred_check_branch
        %165 = sbr.rel (%p163) target = $region32
      $region31: #{residual_block_forward.5} parent=23 // pred_region
        %p166 = scmp.lt.s32.totalorder %s10, 1
        %s167 = scalar_select %p166, %s10, 1
        %s168 = smul.addr %s167, 2
        %s169 = smul.addr %s168, 8
        %s170 = scalar_lea.vmem %s3, %s169
      $region32: #{residual_block_forward.5} parent=23 // pred_fallthru
        _
    $region24: #{residual_block_forward.5} parent=5 // pred_fallthru
      _
    %p171 = scmp.le.s32.totalorder 1, %s10
    %p172 = scmp.lt.s32.totalorder %s10, 3
    %p173 = pnand %p171, %p172
    %p174 = pneg %p173
    // Predicated region
    $region33: #{residual_block_forward.5} parent=5 // pred_check
      _
    $region34: #{residual_block_forward.5} parent=5 // pred_check_branch
      %176 = sbr.rel (%p173) target = $region36
    $region35: #{residual_block_forward.5} parent=5 // pred_region
      %s177 = ssub.s32 %s10, 1
      %p178 = scmp.lt.s32.totalorder %s15, 1
      %s179 = scalar_select %p178, %s15, 1
      %s180 = smul.addr %s179, 3
      %s181 = smul.addr %s180, 8
      %s182 = scalar_lea.vmem %s0, %s181
      %p183 = pneg %p36
      %p184 = pneg %p33
      %p185 = pneg %p57
      %p186 = pneg %p54
      %p187 = pneg %p78
      %p188 = pneg %p75
      %p189 = scmp.lt.s32.totalorder %s15, 1
      %s190 = scalar_select %p189, %s15, 1
      %s191 = smul.addr %s190, 2
      %s192 = smul.addr %s191, 8
      %s193 = scalar_lea.vmem %s3, %s192
      %p194 = pneg %p104
      %p195 = pneg %p101
      %p196 = pneg %p130
      %p197 = pneg %p127
      %p198 = scmp.lt.s32.totalorder %s15, 1
      %s199 = scalar_select %p198, %s15, 1
      %s200 = smul.addr %s199, 2
      %s201 = smul.addr %s200, 8
      %s202 = scalar_lea.vmem %s4, %s201
      %p203 = scmp.lt.s32.totalorder %s15, 1
      %s204 = scalar_select %p203, %s15, 1
      %s205 = smul.addr %s204, 3
      %s206 = smul.addr %s205, 8
      %s207 = scalar_lea.vmem %s0, %s206
      %p208 = scmp.lt.s32.totalorder %s15, 1
      %s209 = scalar_select %p208, %s15, 1
      %s210 = smul.addr %s209, 2
      %s211 = smul.addr %s210, 8
      %s212 = scalar_lea.vmem %s3, %s211
      %p213 = scmp.lt.s32.totalorder %s15, 1
      %s214 = scalar_select %p213, %s15, 1
      %s215 = smul.addr %s214, 2
      %s216 = smul.addr %s215, 8
      %s217 = scalar_lea.vmem %s4, %s216
      %v218 = vld [vmem:[%s207] sm:$0xff]
      %v219 = vld [vmem:[%s207 + $0x8] sm:$0xff]
      %v220 = vld [vmem:[%s207 + $0x10] sm:$0xff]
      %v221 = vld [vmem:[%s1] sm:$0xff]
      %223 = vset.pattern.permute.xlu0 0
      %224 = vperm.xlu0 %223, %v221
      %v225 = vpop.permute.xlu0 %224
      %v227 = vmul.f32 %v218, %v225
      %v228 = vmul.f32 %v219, %v225
      %v229 = vmul.f32 %v220, %v225
      %v230 = vld [vmem:[%s2] sm:$0xff]
      %232 = vset.pattern.permute.xlu0 0
      %233 = vperm.xlu0 %232, %v230
      %v234 = vpop.permute.xlu0 %233
      %v236 = vadd.f32 %v227, %v234
      %v237 = vadd.f32 %v228, %v234
      %v238 = vadd.f32 %v229, %v234
      %v239 = vmax.f32 %v236, 0.0
      %v240 = vmax.f32 %v237, 0.0
      %v241 = vmax.f32 %v238, 0.0
      %v242 = vld [vmem:[%s212] sm:$0xff]
      %v243 = vadd.f32 %v239, %v242
      %v244 = vmax.f32 %v243, 0.0
      %vm245 = vcmask 130048
      %246 = vst.msk [vmem:[%s217] sm:$0xff] %vm245, %v244
      %v247 = vld [vmem:[%s212] sm:$0xff]
      %249 = vrot.lane.b32.xlu0 %v247, 2
      %v250 = vpop.permute.xlu0 %249
      %v252 = vadd.f32 %v239, %v250
      %v253 = vmax.f32 %v252, 0.0
      %255 = vrot.lane.b32.xlu0 %v253, 126
      %v256 = vpop.permute.xlu0 %255
      %vm258 = vcmask 261248
      %259 = vst.msk [vmem:[%s217] sm:$0xff] %vm258, %v256
      %v260 = vld [vmem:[%s212] sm:$0xff]
      %262 = vrot.lane.b32.xlu0 %v260, 4
      %v263 = vpop.permute.xlu0 %262
      %v265 = vadd.f32 %v239, %v263
      %v266 = vmax.f32 %v265, 0.0
      %268 = vrot.lane.b32.xlu0 %v266, 124
      %v269 = vpop.permute.xlu0 %268
      %vm271 = vcmask 392448
      %272 = vst.msk [vmem:[%s217] sm:$0xff] %vm271, %v269
      %v273 = vld [vmem:[%s212] sm:$0xff]
      %275 = vrot.lane.b32.xlu0 %v273, 6
      %v276 = vpop.permute.xlu0 %275
      %v278 = vadd.f32 %v239, %v276
      %v279 = vmax.f32 %v278, 0.0
      %281 = vrot.lane.b32.xlu0 %v279, 122
      %v282 = vpop.permute.xlu0 %281
      %vm284 = vcmask 523648
      %285 = vst.msk [vmem:[%s217] sm:$0xff] %vm284, %v282
      %v286 = vld [vmem:[%s212] sm:$0xff]
      %288 = vrot.lane.b32.xlu0 %v286, 8
      %v289 = vpop.permute.xlu0 %288
      %v291 = vadd.f32 %v239, %v289
      %v292 = vmax.f32 %v291, 0.0
      %294 = vrot.lane.b32.xlu0 %v292, 120
      %v295 = vpop.permute.xlu0 %294
      %vm297 = vcmask 654848
      %298 = vst.msk [vmem:[%s217] sm:$0xff] %vm297, %v295
      %v299 = vld [vmem:[%s212] sm:$0xff]
      %301 = vrot.lane.b32.xlu0 %v299, 10
      %v302 = vpop.permute.xlu0 %301
      %v304 = vadd.f32 %v239, %v302
      %v305 = vmax.f32 %v304, 0.0
      %307 = vrot.lane.b32.xlu0 %v305, 118
      %v308 = vpop.permute.xlu0 %307
      %vm310 = vcmask 786048
      %311 = vst.msk [vmem:[%s217] sm:$0xff] %vm310, %v308
      %v312 = vld [vmem:[%s212] sm:$0xff]
      %314 = vrot.lane.b32.xlu0 %v312, 12
      %v315 = vpop.permute.xlu0 %314
      %v317 = vadd.f32 %v239, %v315
      %v318 = vmax.f32 %v317, 0.0
      %320 = vrot.lane.b32.xlu0 %v318, 116
      %v321 = vpop.permute.xlu0 %320
      %vm323 = vcmask 917248
      %324 = vst.msk [vmem:[%s217] sm:$0xff] %vm323, %v321
      %v325 = vld [vmem:[%s212] sm:$0xff]
      %327 = vrot.lane.b32.xlu0 %v325, 14
      %v328 = vpop.permute.xlu0 %327
      %v330 = vadd.f32 %v239, %v328
      %v331 = vadd.f32 %v240, %v328
      %v332 = vmax.f32 %v330, 0.0
      %v333 = vmax.f32 %v331, 0.0
      %336 = vrot.lane.b32.xlu0 %v332, 114
      %v337 = vpop.permute.xlu0 %336
      %338 = vrot.lane.b32.xlu0 %v333, 114
      %v339 = vpop.permute.xlu0 %338
      %vm340 = vcmask 932864
      %v341 = vsel %vm340, %v337, %v339
      %vm343 = vcmask 1048448
      %344 = vst.msk [vmem:[%s217] sm:$0xff] %vm343, %v341
      %v345 = vld [vmem:[%s212 + $0x8] sm:$0xff]
      %347 = vrot.lane.b32.xlu0 %v345, 16
      %v348 = vpop.permute.xlu0 %347
      %v350 = vadd.f32 %v240, %v348
      %v351 = vmax.f32 %v350, 0.0
      %353 = vrot.lane.b32.xlu0 %v351, 112
      %v354 = vpop.permute.xlu0 %353
      %356 = vst.msk [vmem:[%s217 + $0x8] sm:$0xff] %vm245, %v354
      %v357 = vld [vmem:[%s212 + $0x8] sm:$0xff]
      %359 = vrot.lane.b32.xlu0 %v357, 18
      %v360 = vpop.permute.xlu0 %359
      %v362 = vadd.f32 %v240, %v360
      %v363 = vmax.f32 %v362, 0.0
      %365 = vrot.lane.b32.xlu0 %v363, 110
      %v366 = vpop.permute.xlu0 %365
      %368 = vst.msk [vmem:[%s217 + $0x8] sm:$0xff] %vm258, %v366
      %v369 = vld [vmem:[%s212 + $0x8] sm:$0xff]
      %371 = vrot.lane.b32.xlu0 %v369, 20
      %v372 = vpop.permute.xlu0 %371
      %v374 = vadd.f32 %v240, %v372
      %v375 = vmax.f32 %v374, 0.0
      %377 = vrot.lane.b32.xlu0 %v375, 108
      %v378 = vpop.permute.xlu0 %377
      %380 = vst.msk [vmem:[%s217 + $0x8] sm:$0xff] %vm271, %v378
      %v381 = vld [vmem:[%s212 + $0x8] sm:$0xff]
      %383 = vrot.lane.b32.xlu0 %v381, 22
      %v384 = vpop.permute.xlu0 %383
      %v386 = vadd.f32 %v240, %v384
      %v387 = vmax.f32 %v386, 0.0
      %389 = vrot.lane.b32.xlu0 %v387, 106
      %v390 = vpop.permute.xlu0 %389
      %392 = vst.msk [vmem:[%s217 + $0x8] sm:$0xff] %vm284, %v390
      %v393 = vld [vmem:[%s212 + $0x8] sm:$0xff]
      %395 = vrot.lane.b32.xlu0 %v393, 24
      %v396 = vpop.permute.xlu0 %395
      %v398 = vadd.f32 %v240, %v396
      %v399 = vmax.f32 %v398, 0.0
      %401 = vrot.lane.b32.xlu0 %v399, 104
      %v402 = vpop.permute.xlu0 %401
      %404 = vst.msk [vmem:[%s217 + $0x8] sm:$0xff] %vm297, %v402
      %v405 = vld [vmem:[%s212 + $0x8] sm:$0xff]
      %407 = vrot.lane.b32.xlu0 %v405, 26
      %v408 = vpop.permute.xlu0 %407
      %v410 = vadd.f32 %v240, %v408
      %v411 = vmax.f32 %v410, 0.0
      %413 = vrot.lane.b32.xlu0 %v411, 102
      %v414 = vpop.permute.xlu0 %413
      %416 = vst.msk [vmem:[%s217 + $0x8] sm:$0xff] %vm310, %v414
      %v417 = vld [vmem:[%s212 + $0x8] sm:$0xff]
      %419 = vrot.lane.b32.xlu0 %v417, 28
      %v420 = vpop.permute.xlu0 %419
      %v422 = vadd.f32 %v240, %v420
      %v423 = vadd.f32 %v241, %v420
      %v424 = vmax.f32 %v422, 0.0
      %v425 = vmax.f32 %v423, 0.0
      %428 = vrot.lane.b32.xlu0 %v424, 100
      %v429 = vpop.permute.xlu0 %428
      %430 = vrot.lane.b32.xlu0 %v425, 100
      %v431 = vpop.permute.xlu0 %430
      %vm432 = vcmask 818176
      %v433 = vsel %vm432, %v429, %v431
      %435 = vst.msk [vmem:[%s217 + $0x8] sm:$0xff] %vm323, %v433
      %v436 = vld [vmem:[%s212 + $0x8] sm:$0xff]
      %438 = vrot.lane.b32.xlu0 %v436, 30
      %v439 = vpop.permute.xlu0 %438
      %v441 = vadd.f32 %v241, %v439
      %v442 = vmax.f32 %v441, 0.0
      %444 = vrot.lane.b32.xlu0 %v442, 98
      %v445 = vpop.permute.xlu0 %444
      %447 = vst.msk [vmem:[%s217 + $0x8] sm:$0xff] %vm343, %v445
      %p448 = scmp.lt.s32.totalorder %s15, 1
      %s449 = scalar_select %p448, %s15, 1
      %s450 = smul.addr %s449, 2
      %s451 = smul.addr %s450, 8
      %s452 = scalar_lea.vmem %s4, %s451
      // Predicated region
      $region37: #{residual_block_forward.5} parent=35 // pred_check
        %p453 = pneg %p127
      $region38: #{residual_block_forward.5} parent=35 // pred_check_branch
        %455 = sbr.rel (%p453) target = $region40
      $region39: #{residual_block_forward.5} parent=35 // pred_region
        _
      $region40: #{residual_block_forward.5} parent=35 // pred_fallthru
        _
    $region36: #{residual_block_forward.5} parent=5 // pred_fallthru
      _
    %p456 = scmp.le.s32.totalorder 2, %s10
    // Predicated region
    $region41: #{residual_block_forward.5} parent=5 // pred_check
      %p457 = pneg %p456
    $region42: #{residual_block_forward.5} parent=5 // pred_check_branch
      %459 = sbr.rel (%p457) target = $region44
    $region43: #{residual_block_forward.5} parent=5 // pred_region
      %s460 = ssub.s32 %s10, 2
      // Predicated region
      $region45: #{residual_block_forward.5} parent=43 // pred_check
        %p461 = pneg %p133
      $region46: #{residual_block_forward.5} parent=43 // pred_check_branch
        %463 = sbr.rel (%p461) target = $region48
      $region47: #{residual_block_forward.5} parent=43 // pred_region
        %p464 = scmp.lt.s32.totalorder %s16, 1
        %s465 = scalar_select %p464, %s16, 1
        %s466 = smul.addr %s465, 2
        %s467 = smul.addr %s466, 8
        %s468 = scalar_lea.vmem %s4, %s467
      $region48: #{residual_block_forward.5} parent=43 // pred_fallthru
        _
    $region44: #{residual_block_forward.5} parent=5 // pred_fallthru
      _
  $region6: #{residual_block_forward.5} parent=0 // loop_footer
    %s14 = sadd.s32 1, %s10
  $region7: #{residual_block_forward.5} parent=0 // loop_footer_branch
    %9 = sbr.rel target = $region3
  $region8: #{residual_block_forward.5} parent=0 // loop_exit
    _

// kernel: residual_block_forward.4
$region0: #{residual_block_forward.4}
  #allocation0 [shape = 'u32[]', space=smem, size = 0x4, offset = 0x4, fixed_abs, tag = 'smem constant byte address 0x4 - core index']
  #allocation1 [shape = 'u32[144,128]{1,0:T(1,128)}', space=vmem, size = 0x12000, scoped, tag = 'internal scratch']
  #allocation2 [shape = 'bf16[8,326]{1,0:T(8,128)(2,1)}', space=vmem, size = 0x1800, scoped, tag = 'scratch operand']
  %s0 = inlined_call_operand.vmem [shape: f32[2,8,288], index: 0, kind: input, shape index: {}]
  %s1 = inlined_call_operand.vmem [shape: f32[8,1], index: 1, kind: input, shape index: {}]
  %s2 = inlined_call_operand.vmem [shape: f32[8,1], index: 2, kind: input, shape index: {}]
  %s3 = inlined_call_operand.vmem [shape: bf16[9,8,8], index: 3, kind: input, shape index: {}]
  %s4 = inlined_call_operand.vmem [shape: f32[1,288], index: 4, kind: input, shape index: {}]
  %s5 = inlined_call_operand.vmem [shape: f32[2,8,288], index: 5, kind: output, shape index: {0}]
  %s6 = inlined_call_operand.vmem [shape: f32[8,1], index: 6, kind: output, shape index: {1}]
  %s7 = inlined_call_operand.vmem [shape: f32[8,1], index: 7, kind: output, shape index: {2}]
  %8 = xla_tuple %s5, %s6, %s7
  %s9 = sld [smem:[#allocation0]]
  $region73: #{residual_block_forward.4} parent=0
    _
  %s11 = ssub.s32 1, %s9
  %s12 = scalar_select 0, %s11, %s9
  loop: start=0, step=1, limit=4
  $region2: #{residual_block_forward.4} parent=0 // loop_pre_header
    _
  $region3: #{residual_block_forward.4} parent=0 // loop_header
    %s14 = sphi 0, %s18
    %p15 = scmp.ge.s32.totalorder %s14, 4
    %s24 = sphi 0, %s26
    %s27 = sphi 0, %s24
    %s28 = sphi 0, %s27
    %s44 = sphi 0, %s28
    %s48 = sphi 0, %s48
    %s50 = sphi 0, %s48
    %s51 = sphi 0, %s50
    %s65 = sphi 0, %s51
    %s69 = sphi 0, %s69
    %s71 = sphi 0, %s69
    %s72 = sphi 0, %s71
    %s86 = sphi 0, %s72
    %s90 = sphi 0, %s90
    %s92 = sphi 0, %s90
    %s93 = sphi 0, %s92
    %s107 = sphi 0, %s93
    %s111 = sphi 0, %s111
    %s113 = sphi 0, %s111
    %s114 = sphi 0, %s113
    %s128 = sphi 0, %s114
    %s134 = sphi 0, %s136
    %s137 = sphi 0, %s134
    %s138 = sphi 0, %s137
    %s154 = sphi 0, %s138
    %s158 = sphi 0, %s158
    %s160 = sphi 0, %s158
    %s161 = sphi 0, %s160
    %s175 = sphi 0, %s161
    %s179 = sphi 0, %s179
    %s181 = sphi 0, %s179
    %s182 = sphi 0, %s181
    %s196 = sphi 0, %s182
  $region4: #{residual_block_forward.4} parent=0 // loop_header_branch
    %17 = sbr.rel (%p15) target = $region8
  $region5: #{residual_block_forward.4} parent=0 // loop_body
    %s19 = ssub.s32 %s14, 1
    %s20 = ssub.s32 %s14, 2
    %s21 = sadd.s32 %s14, 1
    %s22 = ssub.s32 %s14, %s21
    %p23 = scmp.eq.s32.totalorder %s22, 0
    %s25 = sadd.s32 %s24, 1
    %s26 = scalar_select %p23, %s24, %s25
    %p29 = pneg %p23
    %p30 = scmp.eq.s32.totalorder %s14, 1
    %p31 = por %p29, %p30
    %p32 = scmp.ne.s32.totalorder %s24, %s27
    %p33 = scmp.eq.s32.totalorder %s14, 0
    %p34 = por %p32, %p33
    %p35 = scmp.ne.s32.totalorder %s24, %s27
    %p36 = scmp.eq.s32.totalorder %s19, 1
    %p37 = por %p35, %p36
    %p38 = scmp.ne.s32.totalorder %s27, %s28
    %p39 = scmp.eq.s32.totalorder %s19, 0
    %p40 = por %p38, %p39
    %p41 = scmp.ne.s32.totalorder %s27, %s28
    %p42 = scmp.eq.s32.totalorder %s20, 1
    %p43 = por %p41, %p42
    %p45 = scmp.ne.s32.totalorder %s28, %s44
    %p46 = scmp.eq.s32.totalorder %s20, 0
    %p47 = por %p45, %p46
    %s49 = sadd.s32 %s48, 1
    %p52 = scmp.eq.s32.totalorder %s14, 1
    %p53 = scmp.ne.s32.totalorder %s48, %s50
    %p54 = scmp.eq.s32.totalorder %s14, 0
    %p55 = por %p53, %p54
    %p56 = scmp.ne.s32.totalorder %s48, %s50
    %p57 = scmp.eq.s32.totalorder %s19, 1
    %p58 = por %p56, %p57
    %p59 = scmp.ne.s32.totalorder %s50, %s51
    %p60 = scmp.eq.s32.totalorder %s19, 0
    %p61 = por %p59, %p60
    %p62 = scmp.ne.s32.totalorder %s50, %s51
    %p63 = scmp.eq.s32.totalorder %s20, 1
    %p64 = por %p62, %p63
    %p66 = scmp.ne.s32.totalorder %s51, %s65
    %p67 = scmp.eq.s32.totalorder %s20, 0
    %p68 = por %p66, %p67
    %s70 = sadd.s32 %s69, 1
    %p73 = scmp.eq.s32.totalorder %s14, 1
    %p74 = scmp.ne.s32.totalorder %s69, %s71
    %p75 = scmp.eq.s32.totalorder %s14, 0
    %p76 = por %p74, %p75
    %p77 = scmp.ne.s32.totalorder %s69, %s71
    %p78 = scmp.eq.s32.totalorder %s19, 1
    %p79 = por %p77, %p78
    %p80 = scmp.ne.s32.totalorder %s71, %s72
    %p81 = scmp.eq.s32.totalorder %s19, 0
    %p82 = por %p80, %p81
    %p83 = scmp.ne.s32.totalorder %s71, %s72
    %p84 = scmp.eq.s32.totalorder %s20, 1
    %p85 = por %p83, %p84
    %p87 = scmp.ne.s32.totalorder %s72, %s86
    %p88 = scmp.eq.s32.totalorder %s20, 0
    %p89 = por %p87, %p88
    %s91 = sadd.s32 %s90, 1
    %p94 = scmp.eq.s32.totalorder %s14, 1
    %p95 = scmp.ne.s32.totalorder %s90, %s92
    %p96 = scmp.eq.s32.totalorder %s14, 0
    %p97 = por %p95, %p96
    %p98 = scmp.ne.s32.totalorder %s90, %s92
    %p99 = scmp.eq.s32.totalorder %s19, 1
    %p100 = por %p98, %p99
    %p101 = scmp.ne.s32.totalorder %s92, %s93
    %p102 = scmp.eq.s32.totalorder %s19, 0
    %p103 = por %p101, %p102
    %p104 = scmp.ne.s32.totalorder %s92, %s93
    %p105 = scmp.eq.s32.totalorder %s20, 1
    %p106 = por %p104, %p105
    %p108 = scmp.ne.s32.totalorder %s93, %s107
    %p109 = scmp.eq.s32.totalorder %s20, 0
    %p110 = por %p108, %p109
    %s112 = sadd.s32 %s111, 1
    %p115 = scmp.eq.s32.totalorder %s14, 1
    %p116 = scmp.ne.s32.totalorder %s111, %s113
    %p117 = scmp.eq.s32.totalorder %s14, 0
    %p118 = por %p116, %p117
    %p119 = scmp.ne.s32.totalorder %s111, %s113
    %p120 = scmp.eq.s32.totalorder %s19, 1
    %p121 = por %p119, %p120
    %p122 = scmp.ne.s32.totalorder %s113, %s114
    %p123 = scmp.eq.s32.totalorder %s19, 0
    %p124 = por %p122, %p123
    %p125 = scmp.ne.s32.totalorder %s113, %s114
    %p126 = scmp.eq.s32.totalorder %s20, 1
    %p127 = por %p125, %p126
    %p129 = scmp.ne.s32.totalorder %s114, %s128
    %p130 = scmp.eq.s32.totalorder %s20, 0
    %p131 = por %p129, %p130
    %s132 = ssub.s32 %s14, %s21
    %p133 = scmp.eq.s32.totalorder %s132, 0
    %s135 = sadd.s32 %s134, 1
    %s136 = scalar_select %p133, %s134, %s135
    %p139 = pneg %p133
    %p140 = scmp.eq.s32.totalorder %s14, 1
    %p141 = por %p139, %p140
    %p142 = scmp.ne.s32.totalorder %s134, %s137
    %p143 = scmp.eq.s32.totalorder %s14, 0
    %p144 = por %p142, %p143
    %p145 = scmp.ne.s32.totalorder %s134, %s137
    %p146 = scmp.eq.s32.totalorder %s19, 1
    %p147 = por %p145, %p146
    %p148 = scmp.ne.s32.totalorder %s137, %s138
    %p149 = scmp.eq.s32.totalorder %s19, 0
    %p150 = por %p148, %p149
    %p151 = scmp.ne.s32.totalorder %s137, %s138
    %p152 = scmp.eq.s32.totalorder %s20, 1
    %p153 = por %p151, %p152
    %p155 = scmp.ne.s32.totalorder %s138, %s154
    %p156 = scmp.eq.s32.totalorder %s20, 0
    %p157 = por %p155, %p156
    %s159 = sadd.s32 %s158, 1
    %p162 = scmp.eq.s32.totalorder %s14, 1
    %p163 = scmp.ne.s32.totalorder %s158, %s160
    %p164 = scmp.eq.s32.totalorder %s14, 0
    %p165 = por %p163, %p164
    %p166 = scmp.ne.s32.totalorder %s158, %s160
    %p167 = scmp.eq.s32.totalorder %s19, 1
    %p168 = por %p166, %p167
    %p169 = scmp.ne.s32.totalorder %s160, %s161
    %p170 = scmp.eq.s32.totalorder %s19, 0
    %p171 = por %p169, %p170
    %p172 = scmp.ne.s32.totalorder %s160, %s161
    %p173 = scmp.eq.s32.totalorder %s20, 1
    %p174 = por %p172, %p173
    %p176 = scmp.ne.s32.totalorder %s161, %s175
    %p177 = scmp.eq.s32.totalorder %s20, 0
    %p178 = por %p176, %p177
    %s180 = sadd.s32 %s179, 1
    %p183 = scmp.eq.s32.totalorder %s14, 1
    %p184 = scmp.ne.s32.totalorder %s179, %s181
    %p185 = scmp.eq.s32.totalorder %s14, 0
    %p186 = por %p184, %p185
    %p187 = scmp.ne.s32.totalorder %s179, %s181
    %p188 = scmp.eq.s32.totalorder %s19, 1
    %p189 = por %p187, %p188
    %p190 = scmp.ne.s32.totalorder %s181, %s182
    %p191 = scmp.eq.s32.totalorder %s19, 0
    %p192 = por %p190, %p191
    %p193 = scmp.ne.s32.totalorder %s181, %s182
    %p194 = scmp.eq.s32.totalorder %s20, 1
    %p195 = por %p193, %p194
    %p197 = scmp.ne.s32.totalorder %s182, %s196
    %p198 = scmp.eq.s32.totalorder %s20, 0
    %p199 = por %p197, %p198
    %p200 = scmp.le.s32.totalorder 1, %s14
    %p201 = scmp.lt.s32.totalorder %s14, 3
    %p202 = pnand %p200, %p201
    %p203 = pneg %p202
    // Predicated region
    $region9: #{residual_block_forward.4} parent=5 // pred_check
      _
    $region10: #{residual_block_forward.4} parent=5 // pred_check_branch
      %205 = sbr.rel (%p202) target = $region12
    $region11: #{residual_block_forward.4} parent=5 // pred_region
      %s206 = ssub.s32 %s14, 1
      // Predicated region
      $region13: #{residual_block_forward.4} parent=11 // pred_check
        %p207 = pneg %p61
      $region14: #{residual_block_forward.4} parent=11 // pred_check_branch
        %209 = sbr.rel (%p207) target = $region16
      $region15: #{residual_block_forward.4} parent=11 // pred_region
        _
      $region16: #{residual_block_forward.4} parent=11 // pred_fallthru
        _
      // Predicated region
      $region17: #{residual_block_forward.4} parent=11 // pred_check
        %p210 = pneg %p82
      $region18: #{residual_block_forward.4} parent=11 // pred_check_branch
        %212 = sbr.rel (%p210) target = $region20
      $region19: #{residual_block_forward.4} parent=11 // pred_region
        _
      $region20: #{residual_block_forward.4} parent=11 // pred_fallthru
        _
      // Predicated region
      $region21: #{residual_block_forward.4} parent=11 // pred_check
        %p213 = pneg %p103
      $region22: #{residual_block_forward.4} parent=11 // pred_check_branch
        %215 = sbr.rel (%p213) target = $region24
      $region23: #{residual_block_forward.4} parent=11 // pred_region
        _
      $region24: #{residual_block_forward.4} parent=11 // pred_fallthru
        _
      // Predicated region
      $region25: #{residual_block_forward.4} parent=11 // pred_check
        %p216 = pneg %p124
      $region26: #{residual_block_forward.4} parent=11 // pred_check_branch
        %218 = sbr.rel (%p216) target = $region28
      $region27: #{residual_block_forward.4} parent=11 // pred_region
        _
      $region28: #{residual_block_forward.4} parent=11 // pred_fallthru
        _
    $region12: #{residual_block_forward.4} parent=5 // pred_fallthru
      _
    %p219 = scmp.lt.s32.totalorder %s14, 2
    // Predicated region
    $region29: #{residual_block_forward.4} parent=5 // pred_check
      %p220 = pneg %p219
    $region30: #{residual_block_forward.4} parent=5 // pred_check_branch
      %222 = sbr.rel (%p220) target = $region32
    $region31: #{residual_block_forward.4} parent=5 // pred_region
      // Predicated region
      $region33: #{residual_block_forward.4} parent=31 // pred_check
        %p223 = pneg %p34
      $region34: #{residual_block_forward.4} parent=31 // pred_check_branch
        %225 = sbr.rel (%p223) target = $region36
      $region35: #{residual_block_forward.4} parent=31 // pred_region
        %p226 = scmp.lt.s32.totalorder %s14, 1
        %s227 = scalar_select %p226, %s14, 1
        %s228 = smul.addr %s227, 3
        %s229 = smul.addr %s228, 8
        %s230 = scalar_lea.vmem %s0, %s229
      $region36: #{residual_block_forward.4} parent=31 // pred_fallthru
        _
    $region32: #{residual_block_forward.4} parent=5 // pred_fallthru
      _
    %p231 = scmp.le.s32.totalorder 1, %s14
    %p232 = scmp.lt.s32.totalorder %s14, 3
    %p233 = pnand %p231, %p232
    %p234 = pneg %p233
    // Predicated region
    $region37: #{residual_block_forward.4} parent=5 // pred_check
      _
    $region38: #{residual_block_forward.4} parent=5 // pred_check_branch
      %236 = sbr.rel (%p233) target = $region40
    $region39: #{residual_block_forward.4} parent=5 // pred_region
      %s237 = ssub.s32 %s14, 1
      %p238 = scmp.lt.s32.totalorder %s19, 1
      %s239 = scalar_select %p238, %s19, 1
      %s240 = smul.addr %s239, 3
      %s241 = smul.addr %s240, 8
      %s242 = scalar_lea.vmem %s0, %s241
      %p243 = pneg %p40
      %p244 = pneg %p37
      %p245 = pneg %p61
      %p246 = pneg %p58
      %p247 = pneg %p82
      %p248 = pneg %p79
      %p249 = pneg %p103
      %p250 = pneg %p100
      %p251 = pneg %p124
      %p252 = pneg %p121
      %p253 = pneg %p150
      %p254 = pneg %p147
      %p255 = scmp.lt.s32.totalorder %s19, 1
      %s256 = scalar_select %p255, %s19, 1
      %s257 = smul.addr %s256, 3
      %s258 = smul.addr %s257, 8
      %s259 = scalar_lea.vmem %s5, %s258
      %p260 = pneg %p171
      %p261 = pneg %p168
      %p262 = pneg %p192
      %p263 = pneg %p189
      %p264 = scmp.lt.s32.totalorder %s19, 1
      %s265 = scalar_select %p264, %s19, 1
      %s266 = smul.addr %s265, 3
      %s267 = smul.addr %s266, 8
      %s268 = scalar_lea.vmem %s0, %s267
      %p269 = scmp.lt.s32.totalorder %s19, 1
      %s270 = scalar_select %p269, %s19, 1
      %s271 = smul.addr %s270, 3
      %s272 = smul.addr %s271, 8
      %s273 = scalar_lea.vmem %s5, %s272
      %p275 = scmp.eq.s32.totalorder %s19, 0
      // Predicated region
      $region41: #{residual_block_forward.4} parent=39 // pred_check
        %p276 = pneg %p275
      $region42: #{residual_block_forward.4} parent=39 // pred_check_branch
        %278 = sbr.rel (%p276) target = $region44
      $region43: #{residual_block_forward.4} parent=39 // pred_region
        %279 = vst [vmem:[#allocation2] sm:$0xff] 0
        %vm280 = vcmask 568320
        %281 = vst.msk [vmem:[#allocation2 + $0x8] sm:$0xf] %vm280, 0
        %vm282 = vcmask 7168
        %283 = vst.msk [vmem:[%s6] sm:$0xff] %vm282, 0.0
        %284 = vst.msk [vmem:[%s7] sm:$0xff] %vm282, 0.0
      $region44: #{residual_block_forward.4} parent=39 // pred_fallthru
        _
      %v285 = vld [vmem:[%s268] sm:$0xff]
      %v286 = vld [vmem:[%s268 + $0x8] sm:$0xff]
      %v287 = vld [vmem:[%s268 + $0x10] sm:$0xff]
      %v288 = vld [vmem:[%s1] sm:$0xff]
      %290 = vset.pattern.permute.xlu0 0
      %291 = vperm.xlu0 %290, %v288
      %v292 = vpop.permute.xlu0 %291
      %v294 = vmul.f32 %v285, %v292
      %v295 = vmul.f32 %v286, %v292
      %v296 = vmul.f32 %v287, %v292
      %v297 = vld [vmem:[%s2] sm:$0xff]
      %299 = vset.pattern.permute.xlu0 0
      %300 = vperm.xlu0 %299, %v297
      %v301 = vpop.permute.xlu0 %300
      %v303 = vadd.f32 %v294, %v301
      %v304 = vadd.f32 %v295, %v301
      %v305 = vadd.f32 %v296, %v301
      %v306 = vmax.f32 %v303, 0.0
      %v307 = vmax.f32 %v304, 0.0
      %v308 = vmax.f32 %v305, 0.0
      %v309 = vld [vmem:[%s4] sm:$0x7]
      %v311 = vlaneseq
      %v312 = vshrl.u32 %v311, 7
      %v313 = vsub.s32 0, %v312
      %v314 = vrot.slane %v309, %v313
      %v315 = vlaneseq
      %v316 = vshrl.u32 %v315, 7
      %v317 = vsub.s32 1, %v316
      %v318 = vrot.slane %v309, %v317
      %v319 = vlaneseq
      %v320 = vshrl.u32 %v319, 7
      %v321 = vsub.s32 2, %v320
      %v322 = vrot.slane %v309, %v321
      %v326 = vmul.f32 %v306, %v314
      %v327 = vmul.f32 %v307, %v318
      %v328 = vmul.f32 %v308, %v322
      %v329 = vpack.c.bf16 %v326, %v326
      %v330 = vpack.c.bf16 %v327, %v327
      %v331 = vpack.c.bf16 %v328, %v328
      %v335 = vunpack.c.l.b16 %v329
      %v336 = vunpack.c.l.b16 %v330
      %v337 = vunpack.c.l.b16 %v331
      %v338 = vpack.c.b16 %v336, %v335
      %v339 = vpack.c.b16 %v337, %v337
      %340 = vrot.lane.b32.xlu0 %v338, 19
      %v341 = vpop.permute.xlu0 %340
      %342 = vrot.lane.b32.xlu0 %v339, 19
      %v343 = vpop.permute.xlu0 %342
      %v344 = vrot.slane %v341, 4
      %vm345 = vcmask 154624
      %v346 = vsel %vm345, %v344, %v341
      %v347 = vsel %vm345, %v344, %v343
      %vm350 = vcmask 1043608
      %vm351 = vcmask 1047556
      %vm352 = vmor %vm351, %vm350
      %353 = vst.msk [vmem:[#allocation2] sm:$0xff] %vm352, %v346
      %vm354 = vcmask 412672
      %355 = vst.msk [vmem:[#allocation2 + $0x8] sm:$0xf] %vm354, %v347
      %v356 = vld [vmem:[%s3] sm:$0xf]
      %v357 = vld [vmem:[#allocation2] sm:$0xff]
      %v358 = vld [vmem:[#allocation2 + $0x8] sm:$0xf]
      %s359 = scalar_lea.vmem %s3, 4
      %v360 = vld [vmem:[%s359] sm:$0xf]
      %v363 = vunpack.c.l.b16 %v357
      %v364 = vunpack.c.h.b16 %v357
      %v365 = vunpack.c.l.b16 %v358
      %v366 = vpack.c.b16 %v363, %v363
      %v367 = vpack.c.b16 %v364, %v364
      %v368 = vpack.c.b16 %v365, %v365
      %369 = vrot.lane.b32.xlu0 %v366, 127
      %v370 = vpop.permute.xlu0 %369
      %371 = vrot.lane.b32.xlu0 %v367, 127
      %v372 = vpop.permute.xlu0 %371
      %373 = vrot.lane.b32.xlu0 %v368, 127
      %v374 = vpop.permute.xlu0 %373
      %vm375 = vcmask 1039360
      %v376 = vsel %vm375, %v370, %v372
      %v377 = vsel %vm375, %v372, %v374
      %vm378 = vcmask 64512
      %v380 = vsel %vm378, %v360, 0
      %vm382 = vcmask 1043456
      %v384 = vsel %vm382, %v376, 0
      %v387 = vsel %vm382, %v377, 0
      %v390 = vsel %vm382, %v374, 0
      %392 = vmatprep.subr.bf16.mxu0 %v387
      %393 = vmatpush1.bf16.msra.mxu0 %v384
      %394 = vmatprep.subr.bf16.mxu0 0
      %395 = vmatpush1.bf16.msra.mxu0 0
      %396 = vmatprep.subr.bf16.mxu0 0
      %397 = vmatpush1.bf16.msra.mxu0 0
      %398 = vmatprep.subr.bf16.mxu0 0
      %399 = vmatpush1.bf16.msra.mxu0 0
      %400 = vmatprep.subr.bf16.mxu0 0
      %401 = vmatpush1.bf16.msra.mxu0 0
      %402 = vmatprep.subr.bf16.mxu0 0
      %403 = vmatpush1.bf16.msra.mxu0 0
      %404 = vmatprep.subr.bf16.mxu0 0
      %405 = vmatpush1.bf16.msra.mxu0 0
      %406 = vmatprep.subr.bf16.mxu0 0
      %407 = vmatpush1.bf16.msra.mxu0 0
      %408 = vmatprep.subr.bf16.mxu0 0
      %409 = vmatpush1.bf16.msra.mxu0 0
      %410 = vmatprep.subr.bf16.mxu0 0
      %411 = vmatpush1.bf16.msra.mxu0 0
      %412 = vmatprep.subr.bf16.mxu0 0
      %413 = vmatpush1.bf16.msra.mxu0 0
      %414 = vmatprep.subr.bf16.mxu0 0
      %415 = vmatpush1.bf16.msra.mxu0 0
      %416 = vmatprep.subr.bf16.mxu0 0
      %417 = vmatpush1.bf16.msra.mxu0 0
      %418 = vmatprep.subr.bf16.mxu0 0
      %419 = vmatpush1.bf16.msra.mxu0 0
      %420 = vmatprep.subr.bf16.mxu0 0
      %421 = vmatpush1.bf16.msra.mxu0 0
      %422 = vmatprep.subr.bf16.mxu0 0
      %423 = vmatpush1.bf16.msra.mxu0 0
      %424 = vmatprep.mubr.bf16.mxu0 0
      %425 = vmatmul.mubr.bf16.gmra.mrb[0].mxu0 %v380
      %v426 = vpop.f32.mrb[0].mxu0
      %v427 = vadd.f32 0.0, %v426
      %v428 = vpop.f32.mrb[0].mxu0
      %v429 = vadd.f32 0.0, %v428
      %v430 = vpop.f32.mrb[0].mxu0
      %v431 = vpop.f32.mrb[0].mxu0
      %432 = vdwg.mxu0
      %433 = vmatprep.subr.bf16.mxu0 0
      %434 = vmatpush1.bf16.msra.mxu0 %v390
      %435 = vmatprep.subr.bf16.mxu0 0
      %436 = vmatpush1.bf16.msra.mxu0 0
      %437 = vmatprep.subr.bf16.mxu0 0
      %438 = vmatpush1.bf16.msra.mxu0 0
      %439 = vmatprep.subr.bf16.mxu0 0
      %440 = vmatpush1.bf16.msra.mxu0 0
      %441 = vmatprep.subr.bf16.mxu0 0
      %442 = vmatpush1.bf16.msra.mxu0 0
      %443 = vmatprep.subr.bf16.mxu0 0
      %444 = vmatpush1.bf16.msra.mxu0 0
      %445 = vmatprep.subr.bf16.mxu0 0
      %446 = vmatpush1.bf16.msra.mxu0 0
      %447 = vmatprep.subr.bf16.mxu0 0
      %448 = vmatpush1.bf16.msra.mxu0 0
      %449 = vmatprep.subr.bf16.mxu0 0
      %450 = vmatpush1.bf16.msra.mxu0 0
      %451 = vmatprep.subr.bf16.mxu0 0
      %452 = vmatpush1.bf16.msra.mxu0 0
      %453 = vmatprep.subr.bf16.mxu0 0
      %454 = vmatpush1.bf16.msra.mxu0 0
      %455 = vmatprep.subr.bf16.mxu0 0
      %456 = vmatpush1.bf16.msra.mxu0 0
      %457 = vmatprep.subr.bf16.mxu0 0
      %458 = vmatpush1.bf16.msra.mxu0 0
      %459 = vmatprep.subr.bf16.mxu0 0
      %460 = vmatpush1.bf16.msra.mxu0 0
      %461 = vmatprep.subr.bf16.mxu0 0
      %462 = vmatpush1.bf16.msra.mxu0 0
      %463 = vmatprep.subr.bf16.mxu0 0
      %464 = vmatpush1.bf16.msra.mxu0 0
      %465 = vmatprep.mubr.bf16.mxu0 0
      %466 = vmatmul.mubr.bf16.gmra.mrb[0].mxu0 %v380
      %v467 = vpop.f32.mrb[0].mxu0
      %v468 = vadd.f32 0.0, %v467
      %v469 = vpop.f32.mrb[0].mxu0
      %v470 = vpop.f32.mrb[0].mxu0
      %v471 = vpop.f32.mrb[0].mxu0
      %472 = vdwg.mxu0
      %v474 = vsel %vm378, %v356, 0
      %v477 = vsel %vm382, %v366, 0
      %v480 = vsel %vm382, %v367, 0
      %v483 = vsel %vm382, %v368, 0
      %485 = vmatprep.subr.bf16.mxu0 %v480
      %486 = vmatpush1.bf16.msra.mxu0 %v477
      %487 = vmatprep.subr.bf16.mxu0 0
      %488 = vmatpush1.bf16.msra.mxu0 0
      %489 = vmatprep.subr.bf16.mxu0 0
      %490 = vmatpush1.bf16.msra.mxu0 0
      %491 = vmatprep.subr.bf16.mxu0 0
      %492 = vmatpush1.bf16.msra.mxu0 0
      %493 = vmatprep.subr.bf16.mxu0 0
      %494 = vmatpush1.bf16.msra.mxu0 0
      %495 = vmatprep.subr.bf16.mxu0 0
      %496 = vmatpush1.bf16.msra.mxu0 0
      %497 = vmatprep.subr.bf16.mxu0 0
      %498 = vmatpush1.bf16.msra.mxu0 0
      %499 = vmatprep.subr.bf16.mxu0 0
      %500 = vmatpush1.bf16.msra.mxu0 0
      %501 = vmatprep.subr.bf16.mxu0 0
      %502 = vmatpush1.bf16.msra.mxu0 0
      %503 = vmatprep.subr.bf16.mxu0 0
      %504 = vmatpush1.bf16.msra.mxu0 0
      %505 = vmatprep.subr.bf16.mxu0 0
      %506 = vmatpush1.bf16.msra.mxu0 0
      %507 = vmatprep.subr.bf16.mxu0 0
      %508 = vmatpush1.bf16.msra.mxu0 0
      %509 = vmatprep.subr.bf16.mxu0 0
      %510 = vmatpush1.bf16.msra.mxu0 0
      %511 = vmatprep.subr.bf16.mxu0 0
      %512 = vmatpush1.bf16.msra.mxu0 0
      %513 = vmatprep.subr.bf16.mxu0 0
      %514 = vmatpush1.bf16.msra.mxu0 0
      %515 = vmatprep.subr.bf16.mxu0 0
      %516 = vmatpush1.bf16.msra.mxu0 0
      %517 = vmatprep.mubr.bf16.mxu0 0
      %518 = vmatmul.mubr.bf16.gmra.mrb[0].mxu0 %v474
      %v519 = vpop.f32.mrb[0].mxu0
      %v520 = vadd.f32 %v427, %v519
      %v521 = vpop.f32.mrb[0].mxu0
      %v522 = vadd.f32 %v429, %v521
      %v523 = vpop.f32.mrb[0].mxu0
      %v524 = vpop.f32.mrb[0].mxu0
      %525 = vdwg.mxu0
      %526 = vmatprep.subr.bf16.mxu0 0
      %527 = vmatpush1.bf16.msra.mxu0 %v483
      %528 = vmatprep.subr.bf16.mxu0 0
      %529 = vmatpush1.bf16.msra.mxu0 0
      %530 = vmatprep.subr.bf16.mxu0 0
      %531 = vmatpush1.bf16.msra.mxu0 0
      %532 = vmatprep.subr.bf16.mxu0 0
      %533 = vmatpush1.bf16.msra.mxu0 0
      %534 = vmatprep.subr.bf16.mxu0 0
      %535 = vmatpush1.bf16.msra.mxu0 0
      %536 = vmatprep.subr.bf16.mxu0 0
      %537 = vmatpush1.bf16.msra.mxu0 0
      %538 = vmatprep.subr.bf16.mxu0 0
      %539 = vmatpush1.bf16.msra.mxu0 0
      %540 = vmatprep.subr.bf16.mxu0 0
      %541 = vmatpush1.bf16.msra.mxu0 0
      %542 = vmatprep.subr.bf16.mxu0 0
      %543 = vmatpush1.bf16.msra.mxu0 0
      %544 = vmatprep.subr.bf16.mxu0 0
      %545 = vmatpush1.bf16.msra.mxu0 0
      %546 = vmatprep.subr.bf16.mxu0 0
      %547 = vmatpush1.bf16.msra.mxu0 0
      %548 = vmatprep.subr.bf16.mxu0 0
      %549 = vmatpush1.bf16.msra.mxu0 0
      %550 = vmatprep.subr.bf16.mxu0 0
      %551 = vmatpush1.bf16.msra.mxu0 0
      %552 = vmatprep.subr.bf16.mxu0 0
      %553 = vmatpush1.bf16.msra.mxu0 0
      %554 = vmatprep.subr.bf16.mxu0 0
      %555 = vmatpush1.bf16.msra.mxu0 0
      %556 = vmatprep.subr.bf16.mxu0 0
      %557 = vmatpush1.bf16.msra.mxu0 0
      %558 = vmatprep.mubr.bf16.mxu0 0
      %559 = vmatmul.mubr.bf16.gmra.mrb[0].mxu0 %v474
      %v560 = vpop.f32.mrb[0].mxu0
      %v561 = vadd.f32 %v468, %v560
      %v562 = vpop.f32.mrb[0].mxu0
      %v563 = vpop.f32.mrb[0].mxu0
      %v564 = vpop.f32.mrb[0].mxu0
      %565 = vdwg.mxu0
      %s566 = scalar_lea.vmem %s3, 8
      %v567 = vld [vmem:[%s566] sm:$0xf]
      %568 = vrot.lane.b32.xlu0 %v366, 126
      %v569 = vpop.permute.xlu0 %568
      %570 = vrot.lane.b32.xlu0 %v367, 126
      %v571 = vpop.permute.xlu0 %570
      %572 = vrot.lane.b32.xlu0 %v368, 126
      %v573 = vpop.permute.xlu0 %572
      %vm574 = vcmask 1031168
      %v575 = vsel %vm574, %v569, %v571
      %v576 = vsel %vm574, %v571, %v573
      %v578 = vsel %vm378, %v567, 0
      %v581 = vsel %vm382, %v575, 0
      %v584 = vsel %vm382, %v576, 0
      %v587 = vsel %vm382, %v573, 0
      %589 = vmatprep.subr.bf16.mxu0 %v584
      %590 = vmatpush1.bf16.msra.mxu0 %v581
      %591 = vmatprep.subr.bf16.mxu0 0
      %592 = vmatpush1.bf16.msra.mxu0 0
      %593 = vmatprep.subr.bf16.mxu0 0
      %594 = vmatpush1.bf16.msra.mxu0 0
      %595 = vmatprep.subr.bf16.mxu0 0
      %596 = vmatpush1.bf16.msra.mxu0 0
      %597 = vmatprep.subr.bf16.mxu0 0
      %598 = vmatpush1.bf16.msra.mxu0 0
      %599 = vmatprep.subr.bf16.mxu0 0
      %600 = vmatpush1.bf16.msra.mxu0 0
      %601 = vmatprep.subr.bf16.mxu0 0
      %602 = vmatpush1.bf16.msra.mxu0 0
      %603 = vmatprep.subr.bf16.mxu0 0
      %604 = vmatpush1.bf16.msra.mxu0 0
      %605 = vmatprep.subr.bf16.mxu0 0
      %606 = vmatpush1.bf16.msra.mxu0 0
      %607 = vmatprep.subr.bf16.mxu0 0
      %608 = vmatpush1.bf16.msra.mxu0 0
      %609 = vmatprep.subr.bf16.mxu0 0
      %610 = vmatpush1.bf16.msra.mxu0 0
      %611 = vmatprep.subr.bf16.mxu0 0
      %612 = vmatpush1.bf16.msra.mxu0 0
      %613 = vmatprep.subr.bf16.mxu0 0
      %614 = vmatpush1.bf16.msra.mxu0 0
      %615 = vmatprep.subr.bf16.mxu0 0
      %616 = vmatpush1.bf16.msra.mxu0 0
      %617 = vmatprep.subr.bf16.mxu0 0
      %618 = vmatpush1.bf16.msra.mxu0 0
      %619 = vmatprep.subr.bf16.mxu0 0
      %620 = vmatpush1.bf16.msra.mxu0 0
      %621 = vmatprep.mubr.bf16.mxu0 0
      %622 = vmatmul.mubr.bf16.gmra.mrb[0].mxu0 %v578
      %v623 = vpop.f32.mrb[0].mxu0
      %v624 = vadd.f32 0.0, %v623
      %v625 = vpop.f32.mrb[0].mxu0
      %v626 = vadd.f32 0.0, %v625
      %v627 = vpop.f32.mrb[0].mxu0
      %v628 = vpop.f32.mrb[0].mxu0
      %629 = vdwg.mxu0
      %630 = vmatprep.subr.bf16.mxu0 0
      %631 = vmatpush1.bf16.msra.mxu0 %v587
      %632 = vmatprep.subr.bf16.mxu0 0
      %633 = vmatpush1.bf16.msra.mxu0 0
      %634 = vmatprep.subr.bf16.mxu0 0
      %635 = vmatpush1.bf16.msra.mxu0 0
      %636 = vmatprep.subr.bf16.mxu0 0
      %637 = vmatpush1.bf16.msra.mxu0 0
      %638 = vmatprep.subr.bf16.mxu0 0
      %639 = vmatpush1.bf16.msra.mxu0 0
      %640 = vmatprep.subr.bf16.mxu0 0
      %641 = vmatpush1.bf16.msra.mxu0 0
      %642 = vmatprep.subr.bf16.mxu0 0
      %643 = vmatpush1.bf16.msra.mxu0 0
      %644 = vmatprep.subr.bf16.mxu0 0
      %645 = vmatpush1.bf16.msra.mxu0 0
      %646 = vmatprep.subr.bf16.mxu0 0
      %647 = vmatpush1.bf16.msra.mxu0 0
      %648 = vmatprep.subr.bf16.mxu0 0
      %649 = vmatpush1.bf16.msra.mxu0 0
      %650 = vmatprep.subr.bf16.mxu0 0
      %651 = vmatpush1.bf16.msra.mxu0 0
      %652 = vmatprep.subr.bf16.mxu0 0
      %653 = vmatpush1.bf16.msra.mxu0 0
      %654 = vmatprep.subr.bf16.mxu0 0
      %655 = vmatpush1.bf16.msra.mxu0 0
      %656 = vmatprep.subr.bf16.mxu0 0
      %657 = vmatpush1.bf16.msra.mxu0 0
      %658 = vmatprep.subr.bf16.mxu0 0
      %659 = vmatpush1.bf16.msra.mxu0 0
      %660 = vmatprep.subr.bf16.mxu0 0
      %661 = vmatpush1.bf16.msra.mxu0 0
      %662 = vmatprep.mubr.bf16.mxu0 0
      %663 = vmatmul.mubr.bf16.gmra.mrb[0].mxu0 %v578
      %v664 = vpop.f32.mrb[0].mxu0
      %v665 = vadd.f32 0.0, %v664
      %v666 = vpop.f32.mrb[0].mxu0
      %v667 = vpop.f32.mrb[0].mxu0
      %v668 = vpop.f32.mrb[0].mxu0
      %669 = vdwg.mxu0
      %v670 = vadd.f32 %v520, %v624
      %v671 = vadd.f32 %v522, %v626
      %v672 = vadd.f32 %v561, %v665
      %s673 = scalar_lea.vmem %s3, 12
      %v674 = vld [vmem:[%s673] sm:$0xf]
      %675 = vrot.lane.b32.xlu0 %v366, 110
      %v676 = vpop.permute.xlu0 %675
      %677 = vrot.lane.b32.xlu0 %v367, 110
      %v678 = vpop.permute.xlu0 %677
      %679 = vrot.lane.b32.xlu0 %v368, 110
      %v680 = vpop.permute.xlu0 %679
      %vm681 = vcmask 900096
      %v682 = vsel %vm681, %v676, %v678
      %v683 = vsel %vm681, %v678, %v680
      %v685 = vsel %vm378, %v674, 0
      %v688 = vsel %vm382, %v682, 0
      %v691 = vsel %vm382, %v683, 0
      %v694 = vsel %vm382, %v680, 0
      %696 = vmatprep.subr.bf16.mxu0 %v691
      %697 = vmatpush1.bf16.msra.mxu0 %v688
      %698 = vmatprep.subr.bf16.mxu0 0
      %699 = vmatpush1.bf16.msra.mxu0 0
      %700 = vmatprep.subr.bf16.mxu0 0
      %701 = vmatpush1.bf16.msra.mxu0 0
      %702 = vmatprep.subr.bf16.mxu0 0
      %703 = vmatpush1.bf16.msra.mxu0 0
      %704 = vmatprep.subr.bf16.mxu0 0
      %705 = vmatpush1.bf16.msra.mxu0 0
      %706 = vmatprep.subr.bf16.mxu0 0
      %707 = vmatpush1.bf16.msra.mxu0 0
      %708 = vmatprep.subr.bf16.mxu0 0
      %709 = vmatpush1.bf16.msra.mxu0 0
      %710 = vmatprep.subr.bf16.mxu0 0
      %711 = vmatpush1.bf16.msra.mxu0 0
      %712 = vmatprep.subr.bf16.mxu0 0
      %713 = vmatpush1.bf16.msra.mxu0 0
      %714 = vmatprep.subr.bf16.mxu0 0
      %715 = vmatpush1.bf16.msra.mxu0 0
      %716 = vmatprep.subr.bf16.mxu0 0
      %717 = vmatpush1.bf16.msra.mxu0 0
      %718 = vmatprep.subr.bf16.mxu0 0
      %719 = vmatpush1.bf16.msra.mxu0 0
      %720 = vmatprep.subr.bf16.mxu0 0
      %721 = vmatpush1.bf16.msra.mxu0 0
      %722 = vmatprep.subr.bf16.mxu0 0
      %723 = vmatpush1.bf16.msra.mxu0 0
      %724 = vmatprep.subr.bf16.mxu0 0
      %725 = vmatpush1.bf16.msra.mxu0 0
      %726 = vmatprep.subr.bf16.mxu0 0
      %727 = vmatpush1.bf16.msra.mxu0 0
      %728 = vmatprep.mubr.bf16.mxu0 0
      %729 = vmatmul.mubr.bf16.gmra.mrb[0].mxu0 %v685
      %v730 = vpop.f32.mrb[0].mxu0
      %v731 = vadd.f32 0.0, %v730
      %v732 = vpop.f32.mrb[0].mxu0
      %v733 = vadd.f32 0.0, %v732
      %v734 = vpop.f32.mrb[0].mxu0
      %v735 = vpop.f32.mrb[0].mxu0
      %736 = vdwg.mxu0
      %737 = vmatprep.subr.bf16.mxu0 0
      %738 = vmatpush1.bf16.msra.mxu0 %v694
      %739 = vmatprep.subr.bf16.mxu0 0
      %740 = vmatpush1.bf16.msra.mxu0 0
      %741 = vmatprep.subr.bf16.mxu0 0
      %742 = vmatpush1.bf16.msra.mxu0 0
      %743 = vmatprep.subr.bf16.mxu0 0
      %744 = vmatpush1.bf16.msra.mxu0 0
      %745 = vmatprep.subr.bf16.mxu0 0
      %746 = vmatpush1.bf16.msra.mxu0 0
      %747 = vmatprep.subr.bf16.mxu0 0
      %748 = vmatpush1.bf16.msra.mxu0 0
      %749 = vmatprep.subr.bf16.mxu0 0
      %750 = vmatpush1.bf16.msra.mxu0 0
      %751 = vmatprep.subr.bf16.mxu0 0
      %752 = vmatpush1.bf16.msra.mxu0 0
      %753 = vmatprep.subr.bf16.mxu0 0
      %754 = vmatpush1.bf16.msra.mxu0 0
      %755 = vmatprep.subr.bf16.mxu0 0
      %756 = vmatpush1.bf16.msra.mxu0 0
      %757 = vmatprep.subr.bf16.mxu0 0
      %758 = vmatpush1.bf16.msra.mxu0 0
      %759 = vmatprep.subr.bf16.mxu0 0
      %760 = vmatpush1.bf16.msra.mxu0 0
      %761 = vmatprep.subr.bf16.mxu0 0
      %762 = vmatpush1.bf16.msra.mxu0 0
      %763 = vmatprep.subr.bf16.mxu0 0
      %764 = vmatpush1.bf16.msra.mxu0 0
      %765 = vmatprep.subr.bf16.mxu0 0
      %766 = vmatpush1.bf16.msra.mxu0 0
      %767 = vmatprep.subr.bf16.mxu0 0
      %768 = vmatpush1.bf16.msra.mxu0 0
      %769 = vmatprep.mubr.bf16.mxu0 0
      %770 = vmatmul.mubr.bf16.gmra.mrb[0].mxu0 %v685
      %v771 = vpop.f32.mrb[0].mxu0
      %v772 = vadd.f32 0.0, %v771
      %v773 = vpop.f32.mrb[0].mxu0
      %v774 = vpop.f32.mrb[0].mxu0
      %v775 = vpop.f32.mrb[0].mxu0
      %776 = vdwg.mxu0
      %v777 = vadd.f32 %v670, %v731
      %v778 = vadd.f32 %v671, %v733
      %v779 = vadd.f32 %v672, %v772
      %s780 = scalar_lea.vmem %s3, 16
      %v781 = vld [vmem:[%s780] sm:$0xf]
      %782 = vrot.lane.b32.xlu0 %v366, 109
      %v783 = vpop.permute.xlu0 %782
      %784 = vrot.lane.b32.xlu0 %v367, 109
      %v785 = vpop.permute.xlu0 %784
      %786 = vrot.lane.b32.xlu0 %v368, 109
      %v787 = vpop.permute.xlu0 %786
      %vm788 = vcmask 891904
      %v789 = vsel %vm788, %v783, %v785
      %v790 = vsel %vm788, %v785, %v787
      %v792 = vsel %vm378, %v781, 0
      %v795 = vsel %vm382, %v789, 0
      %v798 = vsel %vm382, %v790, 0
      %v801 = vsel %vm382, %v787, 0
      %803 = vmatprep.subr.bf16.mxu0 %v798
      %804 = vmatpush1.bf16.msra.mxu0 %v795
      %805 = vmatprep.subr.bf16.mxu0 0
      %806 = vmatpush1.bf16.msra.mxu0 0
      %807 = vmatprep.subr.bf16.mxu0 0
      %808 = vmatpush1.bf16.msra.mxu0 0
      %809 = vmatprep.subr.bf16.mxu0 0
      %810 = vmatpush1.bf16.msra.mxu0 0
      %811 = vmatprep.subr.bf16.mxu0 0
      %812 = vmatpush1.bf16.msra.mxu0 0
      %813 = vmatprep.subr.bf16.mxu0 0
      %814 = vmatpush1.bf16.msra.mxu0 0
      %815 = vmatprep.subr.bf16.mxu0 0
      %816 = vmatpush1.bf16.msra.mxu0 0
      %817 = vmatprep.subr.bf16.mxu0 0
      %818 = vmatpush1.bf16.msra.mxu0 0
      %819 = vmatprep.subr.bf16.mxu0 0
      %820 = vmatpush1.bf16.msra.mxu0 0
      %821 = vmatprep.subr.bf16.mxu0 0
      %822 = vmatpush1.bf16.msra.mxu0 0
      %823 = vmatprep.subr.bf16.mxu0 0
      %824 = vmatpush1.bf16.msra.mxu0 0
      %825 = vmatprep.subr.bf16.mxu0 0
      %826 = vmatpush1.bf16.msra.mxu0 0
      %827 = vmatprep.subr.bf16.mxu0 0
      %828 = vmatpush1.bf16.msra.mxu0 0
      %829 = vmatprep.subr.bf16.mxu0 0
      %830 = vmatpush1.bf16.msra.mxu0 0
      %831 = vmatprep.subr.bf16.mxu0 0
      %832 = vmatpush1.bf16.msra.mxu0 0
      %833 = vmatprep.subr.bf16.mxu0 0
      %834 = vmatpush1.bf16.msra.mxu0 0
      %835 = vmatprep.mubr.bf16.mxu0 0
      %836 = vmatmul.mubr.bf16.gmra.mrb[0].mxu0 %v792
      %v837 = vpop.f32.mrb[0].mxu0
      %v838 = vadd.f32 0.0, %v837
      %v839 = vpop.f32.mrb[0].mxu0
      %v840 = vadd.f32 0.0, %v839
      %v841 = vpop.f32.mrb[0].mxu0
      %v842 = vpop.f32.mrb[0].mxu0
      %843 = vdwg.mxu0
      %844 = vmatprep.subr.bf16.mxu0 0
      %845 = vmatpush1.bf16.msra.mxu0 %v801
      %846 = vmatprep.subr.bf16.mxu0 0
      %847 = vmatpush1.bf16.msra.mxu0 0
      %848 = vmatprep.subr.bf16.mxu0 0
      %849 = vmatpush1.bf16.msra.mxu0 0
      %850 = vmatprep.subr.bf16.mxu0 0
      %851 = vmatpush1.bf16.msra.mxu0 0
      %852 = vmatprep.subr.bf16.mxu0 0
      %853 = vmatpush1.bf16.msra.mxu0 0
      %854 = vmatprep.subr.bf16.mxu0 0
      %855 = vmatpush1.bf16.msra.mxu0 0
      %856 = vmatprep.subr.bf16.mxu0 0
      %857 = vmatpush1.bf16.msra.mxu0 0
      %858 = vmatprep.subr.bf16.mxu0 0
      %859 = vmatpush1.bf16.msra.mxu0 0
      %860 = vmatprep.subr.bf16.mxu0 0
      %861 = vmatpush1.bf16.msra.mxu0 0
      %862 = vmatprep.subr.bf16.mxu0 0
      %863 = vmatpush1.bf16.msra.mxu0 0
      %864 = vmatprep.subr.bf16.mxu0 0
      %865 = vmatpush1.bf16.msra.mxu0 0
      %866 = vmatprep.subr.bf16.mxu0 0
      %867 = vmatpush1.bf16.msra.mxu0 0
      %868 = vmatprep.subr.bf16.mxu0 0
      %869 = vmatpush1.bf16.msra.mxu0 0
      %870 = vmatprep.subr.bf16.mxu0 0
      %871 = vmatpush1.bf16.msra.mxu0 0
      %872 = vmatprep.subr.bf16.mxu0 0
      %873 = vmatpush1.bf16.msra.mxu0 0
      %874 = vmatprep.subr.bf16.mxu0 0
      %875 = vmatpush1.bf16.msra.mxu0 0
      %876 = vmatprep.mubr.bf16.mxu0 0
      %877 = vmatmul.mubr.bf16.gmra.mrb[0].mxu0 %v792
      %v878 = vpop.f32.mrb[0].mxu0
      %v879 = vadd.f32 0.0, %v878
      %v880 = vpop.f32.mrb[0].mxu0
      %v881 = vpop.f32.mrb[0].mxu0
      %v882 = vpop.f32.mrb[0].mxu0
      %883 = vdwg.mxu0
      %v884 = vadd.f32 %v777, %v838
      %v885 = vadd.f32 %v778, %v840
      %v886 = vadd.f32 %v779, %v879
      %s887 = scalar_lea.vmem %s3, 20
      %v888 = vld [vmem:[%s887] sm:$0xf]
      %889 = vrot.lane.b32.xlu0 %v366, 108
      %v890 = vpop.permute.xlu0 %889
      %891 = vrot.lane.b32.xlu0 %v367, 108
      %v892 = vpop.permute.xlu0 %891
      %893 = vrot.lane.b32.xlu0 %v368, 108
      %v894 = vpop.permute.xlu0 %893
      %vm895 = vcmask 883712
      %v896 = vsel %vm895, %v890, %v892
      %v897 = vsel %vm895, %v892, %v894
      %v899 = vsel %vm378, %v888, 0
      %v902 = vsel %vm382, %v896, 0
      %v905 = vsel %vm382, %v897, 0
      %v908 = vsel %vm382, %v894, 0
      %910 = vmatprep.subr.bf16.mxu0 %v905
      %911 = vmatpush1.bf16.msra.mxu0 %v902
      %912 = vmatprep.subr.bf16.mxu0 0
      %913 = vmatpush1.bf16.msra.mxu0 0
      %914 = vmatprep.subr.bf16.mxu0 0
      %915 = vmatpush1.bf16.msra.mxu0 0
      %916 = vmatprep.subr.bf16.mxu0 0
      %917 = vmatpush1.bf16.msra.mxu0 0
      %918 = vmatprep.subr.bf16.mxu0 0
      %919 = vmatpush1.bf16.msra.mxu0 0
      %920 = vmatprep.subr.bf16.mxu0 0
      %921 = vmatpush1.bf16.msra.mxu0 0
      %922 = vmatprep.subr.bf16.mxu0 0
      %923 = vmatpush1.bf16.msra.mxu0 0
      %924 = vmatprep.subr.bf16.mxu0 0
      %925 = vmatpush1.bf16.msra.mxu0 0
      %926 = vmatprep.subr.bf16.mxu0 0
      %927 = vmatpush1.bf16.msra.mxu0 0
      %928 = vmatprep.subr.bf16.mxu0 0
      %929 = vmatpush1.bf16.msra.mxu0 0
      %930 = vmatprep.subr.bf16.mxu0 0
      %931 = vmatpush1.bf16.msra.mxu0 0
      %932 = vmatprep.subr.bf16.mxu0 0
      %933 = vmatpush1.bf16.msra.mxu0 0
      %934 = vmatprep.subr.bf16.mxu0 0
      %935 = vmatpush1.bf16.msra.mxu0 0
      %936 = vmatprep.subr.bf16.mxu0 0
      %937 = vmatpush1.bf16.msra.mxu0 0
      %938 = vmatprep.subr.bf16.mxu0 0
      %939 = vmatpush1.bf16.msra.mxu0 0
      %940 = vmatprep.subr.bf16.mxu0 0
      %941 = vmatpush1.bf16.msra.mxu0 0
      %942 = vmatprep.mubr.bf16.mxu0 0
      %943 = vmatmul.mubr.bf16.gmra.mrb[0].mxu0 %v899
      %v944 = vpop.f32.mrb[0].mxu0
      %v945 = vadd.f32 0.0, %v944
      %v946 = vpop.f32.mrb[0].mxu0
      %v947 = vadd.f32 0.0, %v946
      %v948 = vpop.f32.mrb[0].mxu0
      %v949 = vpop.f32.mrb[0].mxu0
      %950 = vdwg.mxu0
      %951 = vmatprep.subr.bf16.mxu0 0
      %952 = vmatpush1.bf16.msra.mxu0 %v908
      %953 = vmatprep.subr.bf16.mxu0 0
      %954 = vmatpush1.bf16.msra.mxu0 0
      %955 = vmatprep.subr.bf16.mxu0 0
      %956 = vmatpush1.bf16.msra.mxu0 0
      %957 = vmatprep.subr.bf16.mxu0 0
      %958 = vmatpush1.bf16.msra.mxu0 0
      %959 = vmatprep.subr.bf16.mxu0 0
      %960 = vmatpush1.bf16.msra.mxu0 0
      %961 = vmatprep.subr.bf16.mxu0 0
      %962 = vmatpush1.bf16.msra.mxu0 0
      %963 = vmatprep.subr.bf16.mxu0 0
      %964 = vmatpush1.bf16.msra.mxu0 0
      %965 = vmatprep.subr.bf16.mxu0 0
      %966 = vmatpush1.bf16.msra.mxu0 0
      %967 = vmatprep.subr.bf16.mxu0 0
      %968 = vmatpush1.bf16.msra.mxu0 0
      %969 = vmatprep.subr.bf16.mxu0 0
      %970 = vmatpush1.bf16.msra.mxu0 0
      %971 = vmatprep.subr.bf16.mxu0 0
      %972 = vmatpush1.bf16.msra.mxu0 0
      %973 = vmatprep.subr.bf16.mxu0 0
      %974 = vmatpush1.bf16.msra.mxu0 0
      %975 = vmatprep.subr.bf16.mxu0 0
      %976 = vmatpush1.bf16.msra.mxu0 0
      %977 = vmatprep.subr.bf16.mxu0 0
      %978 = vmatpush1.bf16.msra.mxu0 0
      %979 = vmatprep.subr.bf16.mxu0 0
      %980 = vmatpush1.bf16.msra.mxu0 0
      %981 = vmatprep.subr.bf16.mxu0 0
      %982 = vmatpush1.bf16.msra.mxu0 0
      %983 = vmatprep.mubr.bf16.mxu0 0
      %984 = vmatmul.mubr.bf16.gmra.mrb[0].mxu0 %v899
      %v985 = vpop.f32.mrb[0].mxu0
      %v986 = vadd.f32 0.0, %v985
      %v987 = vpop.f32.mrb[0].mxu0
      %v988 = vpop.f32.mrb[0].mxu0
      %v989 = vpop.f32.mrb[0].mxu0
      %990 = vdwg.mxu0
      %v991 = vadd.f32 %v884, %v945
      %v992 = vadd.f32 %v885, %v947
      %v993 = vadd.f32 %v886, %v986
      %s994 = scalar_lea.vmem %s3, 24
      %v995 = vld [vmem:[%s994] sm:$0xf]
      %996 = vrot.lane.b32.xlu0 %v366, 92
      %v997 = vpop.permute.xlu0 %996
      %998 = vrot.lane.b32.xlu0 %v367, 92
      %v999 = vpop.permute.xlu0 %998
      %1000 = vrot.lane.b32.xlu0 %v368, 92
      %v1001 = vpop.permute.xlu0 %1000
      %vm1002 = vcmask 752640
      %v1003 = vsel %vm1002, %v997, %v999
      %v1004 = vsel %vm1002, %v999, %v1001
      %v1006 = vsel %vm378, %v995, 0
      %v1009 = vsel %vm382, %v1003, 0
      %v1012 = vsel %vm382, %v1004, 0
      %v1015 = vsel %vm382, %v1001, 0
      %1017 = vmatprep.subr.bf16.mxu0 %v1012
      %1018 = vmatpush1.bf16.msra.mxu0 %v1009
      %1019 = vmatprep.subr.bf16.mxu0 0
      %1020 = vmatpush1.bf16.msra.mxu0 0
      %1021 = vmatprep.subr.bf16.mxu0 0
      %1022 = vmatpush1.bf16.msra.mxu0 0
      %1023 = vmatprep.subr.bf16.mxu0 0
      %1024 = vmatpush1.bf16.msra.mxu0 0
      %1025 = vmatprep.subr.bf16.mxu0 0
      %1026 = vmatpush1.bf16.msra.mxu0 0
      %1027 = vmatprep.subr.bf16.mxu0 0
      %1028 = vmatpush1.bf16.msra.mxu0 0
      %1029 = vmatprep.subr.bf16.mxu0 0
      %1030 = vmatpush1.bf16.msra.mxu0 0
      %1031 = vmatprep.subr.bf16.mxu0 0
      %1032 = vmatpush1.bf16.msra.mxu0 0
      %1033 = vmatprep.subr.bf16.mxu0 0
      %1034 = vmatpush1.bf16.msra.mxu0 0
      %1035 = vmatprep.subr.bf16.mxu0 0
      %1036 = vmatpush1.bf16.msra.mxu0 0
      %1037 = vmatprep.subr.bf16.mxu0 0
      %1038 = vmatpush1.bf16.msra.mxu0 0
      %1039 = vmatprep.subr.bf16.mxu0 0
      %1040 = vmatpush1.bf16.msra.mxu0 0
      %1041 = vmatprep.subr.bf16.mxu0 0
      %1042 = vmatpush1.bf16.msra.mxu0 0
      %1043 = vmatprep.subr.bf16.mxu0 0
      %1044 = vmatpush1.bf16.msra.mxu0 0
      %1045 = vmatprep.subr.bf16.mxu0 0
      %1046 = vmatpush1.bf16.msra.mxu0 0
      %1047 = vmatprep.subr.bf16.mxu0 0
      %1048 = vmatpush1.bf16.msra.mxu0 0
      %1049 = vmatprep.mubr.bf16.mxu0 0
      %1050 = vmatmul.mubr.bf16.gmra.mrb[0].mxu0 %v1006
      %v1051 = vpop.f32.mrb[0].mxu0
      %v1052 = vadd.f32 0.0, %v1051
      %v1053 = vpop.f32.mrb[0].mxu0
      %v1054 = vadd.f32 0.0, %v1053
      %v1055 = vpop.f32.mrb[0].mxu0
      %v1056 = vpop.f32.mrb[0].mxu0
      %1057 = vdwg.mxu0
      %1058 = vmatprep.subr.bf16.mxu0 0
      %1059 = vmatpush1.bf16.msra.mxu0 %v1015
      %1060 = vmatprep.subr.bf16.mxu0 0
      %1061 = vmatpush1.bf16.msra.mxu0 0
      %1062 = vmatprep.subr.bf16.mxu0 0
      %1063 = vmatpush1.bf16.msra.mxu0 0
      %1064 = vmatprep.subr.bf16.mxu0 0
      %1065 = vmatpush1.bf16.msra.mxu0 0
      %1066 = vmatprep.subr.bf16.mxu0 0
      %1067 = vmatpush1.bf16.msra.mxu0 0
      %1068 = vmatprep.subr.bf16.mxu0 0
      %1069 = vmatpush1.bf16.msra.mxu0 0
      %1070 = vmatprep.subr.bf16.mxu0 0
      %1071 = vmatpush1.bf16.msra.mxu0 0
      %1072 = vmatprep.subr.bf16.mxu0 0
      %1073 = vmatpush1.bf16.msra.mxu0 0
      %1074 = vmatprep.subr.bf16.mxu0 0
      %1075 = vmatpush1.bf16.msra.mxu0 0
      %1076 = vmatprep.subr.bf16.mxu0 0
      %1077 = vmatpush1.bf16.msra.mxu0 0
      %1078 = vmatprep.subr.bf16.mxu0 0
      %1079 = vmatpush1.bf16.msra.mxu0 0
      %1080 = vmatprep.subr.bf16.mxu0 0
      %1081 = vmatpush1.bf16.msra.mxu0 0
      %1082 = vmatprep.subr.bf16.mxu0 0
      %1083 = vmatpush1.bf16.msra.mxu0 0
      %1084 = vmatprep.subr.bf16.mxu0 0
      %1085 = vmatpush1.bf16.msra.mxu0 0
      %1086 = vmatprep.subr.bf16.mxu0 0
      %1087 = vmatpush1.bf16.msra.mxu0 0
      %1088 = vmatprep.subr.bf16.mxu0 0
      %1089 = vmatpush1.bf16.msra.mxu0 0
      %1090 = vmatprep.mubr.bf16.mxu0 0
      %1091 = vmatmul.mubr.bf16.gmra.mrb[0].mxu0 %v1006
      %v1092 = vpop.f32.mrb[0].mxu0
      %v1093 = vadd.f32 0.0, %v1092
      %v1094 = vpop.f32.mrb[0].mxu0
      %v1095 = vpop.f32.mrb[0].mxu0
      %v1096 = vpop.f32.mrb[0].mxu0
      %1097 = vdwg.mxu0
      %v1098 = vadd.f32 %v991, %v1052
      %v1099 = vadd.f32 %v992, %v1054
      %v1100 = vadd.f32 %v993, %v1093
      %s1101 = scalar_lea.vmem %s3, 28
      %v1102 = vld [vmem:[%s1101] sm:$0xf]
      %1103 = vrot.lane.b32.xlu0 %v366, 91
      %v1104 = vpop.permute.xlu0 %1103
      %1105 = vrot.lane.b32.xlu0 %v367, 91
      %v1106 = vpop.permute.xlu0 %1105
      %1107 = vrot.lane.b32.xlu0 %v368, 91
      %v1108 = vpop.permute.xlu0 %1107
      %vm1109 = vcmask 744448
      %v1110 = vsel %vm1109, %v1104, %v1106
      %v1111 = vsel %vm1109, %v1106, %v1108
      %v1113 = vsel %vm378, %v1102, 0
      %v1116 = vsel %vm382, %v1110, 0
      %v1119 = vsel %vm382, %v1111, 0
      %v1122 = vsel %vm382, %v1108, 0
      %1124 = vmatprep.subr.bf16.mxu0 %v1119
      %1125 = vmatpush1.bf16.msra.mxu0 %v1116
      %1126 = vmatprep.subr.bf16.mxu0 0
      %1127 = vmatpush1.bf16.msra.mxu0 0
      %1128 = vmatprep.subr.bf16.mxu0 0
      %1129 = vmatpush1.bf16.msra.mxu0 0
      %1130 = vmatprep.subr.bf16.mxu0 0
      %1131 = vmatpush1.bf16.msra.mxu0 0
      %1132 = vmatprep.subr.bf16.mxu0 0
      %1133 = vmatpush1.bf16.msra.mxu0 0
      %1134 = vmatprep.subr.bf16.mxu0 0
      %1135 = vmatpush1.bf16.msra.mxu0 0
      %1136 = vmatprep.subr.bf16.mxu0 0
      %1137 = vmatpush1.bf16.msra.mxu0 0
      %1138 = vmatprep.subr.bf16.mxu0 0
      %1139 = vmatpush1.bf16.msra.mxu0 0
      %1140 = vmatprep.subr.bf16.mxu0 0
      %1141 = vmatpush1.bf16.msra.mxu0 0
      %1142 = vmatprep.subr.bf16.mxu0 0
      %1143 = vmatpush1.bf16.msra.mxu0 0
      %1144 = vmatprep.subr.bf16.mxu0 0
      %1145 = vmatpush1.bf16.msra.mxu0 0
      %1146 = vmatprep.subr.bf16.mxu0 0
      %1147 = vmatpush1.bf16.msra.mxu0 0
      %1148 = vmatprep.subr.bf16.mxu0 0
      %1149 = vmatpush1.bf16.msra.mxu0 0
      %1150 = vmatprep.subr.bf16.mxu0 0
      %1151 = vmatpush1.bf16.msra.mxu0 0
      %1152 = vmatprep.subr.bf16.mxu0 0
      %1153 = vmatpush1.bf16.msra.mxu0 0
      %1154 = vmatprep.subr.bf16.mxu0 0
      %1155 = vmatpush1.bf16.msra.mxu0 0
      %1156 = vmatprep.mubr.bf16.mxu0 0
      %1157 = vmatmul.mubr.bf16.gmra.mrb[0].mxu0 %v1113
      %v1158 = vpop.f32.mrb[0].mxu0
      %v1159 = vadd.f32 0.0, %v1158
      %v1160 = vpop.f32.mrb[0].mxu0
      %v1161 = vadd.f32 0.0, %v1160
      %v1162 = vpop.f32.mrb[0].mxu0
      %v1163 = vpop.f32.mrb[0].mxu0
      %1164 = vdwg.mxu0
      %1165 = vmatprep.subr.bf16.mxu0 0
      %1166 = vmatpush1.bf16.msra.mxu0 %v1122
      %1167 = vmatprep.subr.bf16.mxu0 0
      %1168 = vmatpush1.bf16.msra.mxu0 0
      %1169 = vmatprep.subr.bf16.mxu0 0
      %1170 = vmatpush1.bf16.msra.mxu0 0
      %1171 = vmatprep.subr.bf16.mxu0 0
      %1172 = vmatpush1.bf16.msra.mxu0 0
      %1173 = vmatprep.subr.bf16.mxu0 0
      %1174 = vmatpush1.bf16.msra.mxu0 0
      %1175 = vmatprep.subr.bf16.mxu0 0
      %1176 = vmatpush1.bf16.msra.mxu0 0
      %1177 = vmatprep.subr.bf16.mxu0 0
      %1178 = vmatpush1.bf16.msra.mxu0 0
      %1179 = vmatprep.subr.bf16.mxu0 0
      %1180 = vmatpush1.bf16.msra.mxu0 0
      %1181 = vmatprep.subr.bf16.mxu0 0
      %1182 = vmatpush1.bf16.msra.mxu0 0
      %1183 = vmatprep.subr.bf16.mxu0 0
      %1184 = vmatpush1.bf16.msra.mxu0 0
      %1185 = vmatprep.subr.bf16.mxu0 0
      %1186 = vmatpush1.bf16.msra.mxu0 0
      %1187 = vmatprep.subr.bf16.mxu0 0
      %1188 = vmatpush1.bf16.msra.mxu0 0
      %1189 = vmatprep.subr.bf16.mxu0 0
      %1190 = vmatpush1.bf16.msra.mxu0 0
      %1191 = vmatprep.subr.bf16.mxu0 0
      %1192 = vmatpush1.bf16.msra.mxu0 0
      %1193 = vmatprep.subr.bf16.mxu0 0
      %1194 = vmatpush1.bf16.msra.mxu0 0
      %1195 = vmatprep.subr.bf16.mxu0 0
      %1196 = vmatpush1.bf16.msra.mxu0 0
      %1197 = vmatprep.mubr.bf16.mxu0 0
      %1198 = vmatmul.mubr.bf16.gmra.mrb[0].mxu0 %v1113
      %v1199 = vpop.f32.mrb[0].mxu0
      %v1200 = vadd.f32 0.0, %v1199
      %v1201 = vpop.f32.mrb[0].mxu0
      %v1202 = vpop.f32.mrb[0].mxu0
      %v1203 = vpop.f32.mrb[0].mxu0
      %1204 = vdwg.mxu0
      %v1205 = vadd.f32 %v1098, %v1159
      %v1206 = vadd.f32 %v1099, %v1161
      %v1207 = vadd.f32 %v1100, %v1200
      %s1208 = scalar_lea.vmem %s3, 32
      %v1209 = vld [vmem:[%s1208] sm:$0xf]
      %1210 = vrot.lane.b32.xlu0 %v366, 90
      %v1211 = vpop.permute.xlu0 %1210
      %1212 = vrot.lane.b32.xlu0 %v367, 90
      %v1213 = vpop.permute.xlu0 %1212
      %1214 = vrot.lane.b32.xlu0 %v368, 90
      %v1215 = vpop.permute.xlu0 %1214
      %vm1216 = vcmask 736256
      %v1217 = vsel %vm1216, %v1211, %v1213
      %v1218 = vsel %vm1216, %v1213, %v1215
      %v1220 = vsel %vm378, %v1209, 0
      %v1223 = vsel %vm382, %v1217, 0
      %v1226 = vsel %vm382, %v1218, 0
      %v1229 = vsel %vm382, %v1215, 0
      %1231 = vmatprep.subr.bf16.mxu0 %v1226
      %1232 = vmatpush1.bf16.msra.mxu0 %v1223
      %1233 = vmatprep.subr.bf16.mxu0 0
      %1234 = vmatpush1.bf16.msra.mxu0 0
      %1235 = vmatprep.subr.bf16.mxu0 0
      %1236 = vmatpush1.bf16.msra.mxu0 0
      %1237 = vmatprep.subr.bf16.mxu0 0
      %1238 = vmatpush1.bf16.msra.mxu0 0
      %1239 = vmatprep.subr.bf16.mxu0 0
      %1240 = vmatpush1.bf16.msra.mxu0 0
      %1241 = vmatprep.subr.bf16.mxu0 0
      %1242 = vmatpush1.bf16.msra.mxu0 0
      %1243 = vmatprep.subr.bf16.mxu0 0
      %1244 = vmatpush1.bf16.msra.mxu0 0
      %1245 = vmatprep.subr.bf16.mxu0 0
      %1246 = vmatpush1.bf16.msra.mxu0 0
      %1247 = vmatprep.subr.bf16.mxu0 0
      %1248 = vmatpush1.bf16.msra.mxu0 0
      %1249 = vmatprep.subr.bf16.mxu0 0
      %1250 = vmatpush1.bf16.msra.mxu0 0
      %1251 = vmatprep.subr.bf16.mxu0 0
      %1252 = vmatpush1.bf16.msra.mxu0 0
      %1253 = vmatprep.subr.bf16.mxu0 0
      %1254 = vmatpush1.bf16.msra.mxu0 0
      %1255 = vmatprep.subr.bf16.mxu0 0
      %1256 = vmatpush1.bf16.msra.mxu0 0
      %1257 = vmatprep.subr.bf16.mxu0 0
      %1258 = vmatpush1.bf16.msra.mxu0 0
      %1259 = vmatprep.subr.bf16.mxu0 0
      %1260 = vmatpush1.bf16.msra.mxu0 0
      %1261 = vmatprep.subr.bf16.mxu0 0
      %1262 = vmatpush1.bf16.msra.mxu0 0
      %1263 = vmatprep.mubr.bf16.mxu0 0
      %1264 = vmatmul.mubr.bf16.gmra.mrb[0].mxu0 %v1220
      %v1265 = vpop.f32.mrb[0].mxu0
      %v1266 = vadd.f32 0.0, %v1265
      %v1267 = vpop.f32.mrb[0].mxu0
      %v1268 = vadd.f32 0.0, %v1267
      %v1269 = vpop.f32.mrb[0].mxu0
      %v1270 = vpop.f32.mrb[0].mxu0
      %1271 = vdwg.mxu0
      %1272 = vmatprep.subr.bf16.mxu0 0
      %1273 = vmatpush1.bf16.msra.mxu0 %v1229
      %1274 = vmatprep.subr.bf16.mxu0 0
      %1275 = vmatpush1.bf16.msra.mxu0 0
      %1276 = vmatprep.subr.bf16.mxu0 0
      %1277 = vmatpush1.bf16.msra.mxu0 0
      %1278 = vmatprep.subr.bf16.mxu0 0
      %1279 = vmatpush1.bf16.msra.mxu0 0
      %1280 = vmatprep.subr.bf16.mxu0 0
      %1281 = vmatpush1.bf16.msra.mxu0 0
      %1282 = vmatprep.subr.bf16.mxu0 0
      %1283 = vmatpush1.bf16.msra.mxu0 0
      %1284 = vmatprep.subr.bf16.mxu0 0
      %1285 = vmatpush1.bf16.msra.mxu0 0
      %1286 = vmatprep.subr.bf16.mxu0 0
      %1287 = vmatpush1.bf16.msra.mxu0 0
      %1288 = vmatprep.subr.bf16.mxu0 0
      %1289 = vmatpush1.bf16.msra.mxu0 0
      %1290 = vmatprep.subr.bf16.mxu0 0
      %1291 = vmatpush1.bf16.msra.mxu0 0
      %1292 = vmatprep.subr.bf16.mxu0 0
      %1293 = vmatpush1.bf16.msra.mxu0 0
      %1294 = vmatprep.subr.bf16.mxu0 0
      %1295 = vmatpush1.bf16.msra.mxu0 0
      %1296 = vmatprep.subr.bf16.mxu0 0
      %1297 = vmatpush1.bf16.msra.mxu0 0
      %1298 = vmatprep.subr.bf16.mxu0 0
      %1299 = vmatpush1.bf16.msra.mxu0 0
      %1300 = vmatprep.subr.bf16.mxu0 0
      %1301 = vmatpush1.bf16.msra.mxu0 0
      %1302 = vmatprep.subr.bf16.mxu0 0
      %1303 = vmatpush1.bf16.msra.mxu0 0
      %1304 = vmatprep.mubr.bf16.mxu0 0
      %1305 = vmatmul.mubr.bf16.gmra.mrb[0].mxu0 %v1220
      %v1306 = vpop.f32.mrb[0].mxu0
      %v1307 = vadd.f32 0.0, %v1306
      %v1308 = vpop.f32.mrb[0].mxu0
      %v1309 = vpop.f32.mrb[0].mxu0
      %v1310 = vpop.f32.mrb[0].mxu0
      %1311 = vdwg.mxu0
      %v1312 = vadd.f32 %v1205, %v1266
      %v1313 = vadd.f32 %v1206, %v1268
      %v1314 = vadd.f32 %v1207, %v1307
      %1315 = vst [vmem:[%s273] sm:$0xff] %v1312
      %1316 = vst [vmem:[%s273 + $0x8] sm:$0xff] %v1313
      %vm1317 = vcmask 261120
      %1318 = vst.msk [vmem:[%s273 + $0x10] sm:$0xff] %vm1317, %v1314
      %v1319 = vld [vmem:[%s4] sm:$0x7]
      %v1321 = vlaneseq
      %v1322 = vshrl.u32 %v1321, 7
      %v1323 = vsub.s32 0, %v1322
      %v1324 = vrot.slane %v1319, %v1323
      %v1325 = vlaneseq
      %v1326 = vshrl.u32 %v1325, 7
      %v1327 = vsub.s32 1, %v1326
      %v1328 = vrot.slane %v1319, %v1327
      %v1329 = vlaneseq
      %v1330 = vshrl.u32 %v1329, 7
      %v1331 = vsub.s32 2, %v1330
      %v1332 = vrot.slane %v1319, %v1331
      %v1336 = vmul.f32 %v1312, %v1324
      %v1337 = vmul.f32 %v1313, %v1328
      %v1338 = vmul.f32 %v1314, %v1332
      %v1339 = vld [vmem:[%s6] sm:$0xff]
      %v1340 = vadd.f32 %v1336, %v1337
      %v1341 = vsel %vm1317, %v1338, 0.0
      %v1342 = vadd.f32 %v1340, %v1341
      %1343 = vadd.xlane.f32.xlu0 %v1342
      %v1344 = vpop.xlane.xlu0 %1343
      %v1345 = vadd.f32 %v1339, %v1344
      %vm1346 = vcmask 7168
      %1347 = vst.msk [vmem:[%s6] sm:$0xff] %vm1346, %v1345
      %v1348 = vld [vmem:[%s7] sm:$0xff]
      %v1349 = vmul.f32 %v1336, %v1336
      %v1350 = vmul.f32 %v1337, %v1337
      %v1351 = vmul.f32 %v1338, %v1338
      %v1352 = vadd.f32 %v1349, %v1350
      %v1353 = vsel %vm1317, %v1351, 0.0
      %v1354 = vadd.f32 %v1352, %v1353
      %1355 = vadd.xlane.f32.xlu0 %v1354
      %v1356 = vpop.xlane.xlu0 %1355
      %v1357 = vadd.f32 %v1348, %v1356
      %1358 = vst.msk [vmem:[%s7] sm:$0xff] %vm1346, %v1357
      %p1359 = scmp.lt.s32.totalorder %s19, 1
      %s1360 = scalar_select %p1359, %s19, 1
      %s1361 = smul.addr %s1360, 3
      %s1362 = smul.addr %s1361, 8
      %s1363 = scalar_lea.vmem %s5, %s1362
      // Predicated region
      $region45: #{residual_block_forward.4} parent=39 // pred_check
        %p1364 = pneg %p147
      $region46: #{residual_block_forward.4} parent=39 // pred_check_branch
        %1366 = sbr.rel (%p1364) target = $region48
      $region47: #{residual_block_forward.4} parent=39 // pred_region
        _
      $region48: #{residual_block_forward.4} parent=39 // pred_fallthru
        _
      // Predicated region
      $region49: #{residual_block_forward.4} parent=39 // pred_check
        %p1367 = pneg %p168
      $region50: #{residual_block_forward.4} parent=39 // pred_check_branch
        %1369 = sbr.rel (%p1367) target = $region52
      $region51: #{residual_block_forward.4} parent=39 // pred_region
        _
      $region52: #{residual_block_forward.4} parent=39 // pred_fallthru
        _
      // Predicated region
      $region53: #{residual_block_forward.4} parent=39 // pred_check
        %p1370 = pneg %p189
      $region54: #{residual_block_forward.4} parent=39 // pred_check_branch
        %1372 = sbr.rel (%p1370) target = $region56
      $region55: #{residual_block_forward.4} parent=39 // pred_region
        _
      $region56: #{residual_block_forward.4} parent=39 // pred_fallthru
        _
      // Predicated region
      $region57: #{residual_block_forward.4} parent=39 // pred_check
        %p1373 = pneg %p168
      $region58: #{residual_block_forward.4} parent=39 // pred_check_branch
        %1375 = sbr.rel (%p1373) target = $region60
      $region59: #{residual_block_forward.4} parent=39 // pred_region
        _
      $region60: #{residual_block_forward.4} parent=39 // pred_fallthru
        _
      // Predicated region
      $region61: #{residual_block_forward.4} parent=39 // pred_check
        %p1376 = pneg %p189
      $region62: #{residual_block_forward.4} parent=39 // pred_check_branch
        %1378 = sbr.rel (%p1376) target = $region64
      $region63: #{residual_block_forward.4} parent=39 // pred_region
        _
      $region64: #{residual_block_forward.4} parent=39 // pred_fallthru
        _
    $region40: #{residual_block_forward.4} parent=5 // pred_fallthru
      _
    %p1379 = scmp.le.s32.totalorder 2, %s14
    // Predicated region
    $region65: #{residual_block_forward.4} parent=5 // pred_check
      %p1380 = pneg %p1379
    $region66: #{residual_block_forward.4} parent=5 // pred_check_branch
      %1382 = sbr.rel (%p1380) target = $region68
    $region67: #{residual_block_forward.4} parent=5 // pred_region
      %s1383 = ssub.s32 %s14, 2
      // Predicated region
      $region69: #{residual_block_forward.4} parent=67 // pred_check
        %p1384 = pneg %p153
      $region70: #{residual_block_forward.4} parent=67 // pred_check_branch
        %1386 = sbr.rel (%p1384) target = $region72
      $region71: #{residual_block_forward.4} parent=67 // pred_region
        %p1387 = scmp.lt.s32.totalorder %s20, 1
        %s1388 = scalar_select %p1387, %s20, 1
        %s1389 = smul.addr %s1388, 3
        %s1390 = smul.addr %s1389, 8
        %s1391 = scalar_lea.vmem %s5, %s1390
      $region72: #{residual_block_forward.4} parent=67 // pred_fallthru
        _
    $region68: #{residual_block_forward.4} parent=5 // pred_fallthru
      _
  $region6: #{residual_block_forward.4} parent=0 // loop_footer
    %s18 = sadd.s32 1, %s14
  $region7: #{residual_block_forward.4} parent=0 // loop_footer_branch
    %13 = sbr.rel target = $region3
  $region8: #{residual_block_forward.4} parent=0 // loop_exit
    _

// kernel: residual_block_forward.3
$region0: #{residual_block_forward.3}
  #allocation0 [shape = 'u32[]', space=smem, size = 0x4, offset = 0x4, fixed_abs, tag = 'smem constant byte address 0x4 - core index']
  #allocation1 [shape = 'u32[144,128]{1,0:T(1,128)}', space=vmem, size = 0x12000, scoped, tag = 'internal scratch']
  #allocation2 [shape = 'bf16[8,326]{1,0:T(8,128)(2,1)}', space=vmem, size = 0x1800, scoped, tag = 'scratch operand']
  %s0 = inlined_call_operand.vmem [shape: bf16[2,8,256], index: 0, kind: input, shape index: {}]
  %s1 = inlined_call_operand.vmem [shape: bf16[9,8,8], index: 1, kind: input, shape index: {}]
  %s2 = inlined_call_operand.vmem [shape: f32[1,288], index: 2, kind: input, shape index: {}]
  %s3 = inlined_call_operand.vmem [shape: f32[2,8,288], index: 3, kind: output, shape index: {0}]
  %s4 = inlined_call_operand.vmem [shape: f32[8,1], index: 4, kind: output, shape index: {1}]
  %s5 = inlined_call_operand.vmem [shape: f32[8,1], index: 5, kind: output, shape index: {2}]
  %6 = xla_tuple %s3, %s4, %s5
  %s7 = sld [smem:[#allocation0]]
  $region65: #{residual_block_forward.3} parent=0
    _
  %s9 = ssub.s32 1, %s7
  %s10 = scalar_select 0, %s9, %s7
  loop: start=0, step=1, limit=4
  $region2: #{residual_block_forward.3} parent=0 // loop_pre_header
    _
  $region3: #{residual_block_forward.3} parent=0 // loop_header
    %s12 = sphi 0, %s16
    %p13 = scmp.ge.s32.totalorder %s12, 4
    %s22 = sphi 0, %s24
    %s25 = sphi 0, %s22
    %s26 = sphi 0, %s25
    %s42 = sphi 0, %s26
    %s46 = sphi 0, %s46
    %s48 = sphi 0, %s46
    %s49 = sphi 0, %s48
    %s63 = sphi 0, %s49
    %s67 = sphi 0, %s67
    %s69 = sphi 0, %s67
    %s70 = sphi 0, %s69
    %s84 = sphi 0, %s70
    %s90 = sphi 0, %s92
    %s93 = sphi 0, %s90
    %s94 = sphi 0, %s93
    %s110 = sphi 0, %s94
    %s114 = sphi 0, %s114
    %s116 = sphi 0, %s114
    %s117 = sphi 0, %s116
    %s131 = sphi 0, %s117
    %s135 = sphi 0, %s135
    %s137 = sphi 0, %s135
    %s138 = sphi 0, %s137
    %s152 = sphi 0, %s138
  $region4: #{residual_block_forward.3} parent=0 // loop_header_branch
    %15 = sbr.rel (%p13) target = $region8
  $region5: #{residual_block_forward.3} parent=0 // loop_body
    %s17 = ssub.s32 %s12, 1
    %s18 = ssub.s32 %s12, 2
    %s19 = sadd.s32 %s12, 1
    %s20 = ssub.s32 %s12, %s19
    %p21 = scmp.eq.s32.totalorder %s20, 0
    %s23 = sadd.s32 %s22, 1
    %s24 = scalar_select %p21, %s22, %s23
    %p27 = pneg %p21
    %p28 = scmp.eq.s32.totalorder %s12, 1
    %p29 = por %p27, %p28
    %p30 = scmp.ne.s32.totalorder %s22, %s25
    %p31 = scmp.eq.s32.totalorder %s12, 0
    %p32 = por %p30, %p31
    %p33 = scmp.ne.s32.totalorder %s22, %s25
    %p34 = scmp.eq.s32.totalorder %s17, 1
    %p35 = por %p33, %p34
    %p36 = scmp.ne.s32.totalorder %s25, %s26
    %p37 = scmp.eq.s32.totalorder %s17, 0
    %p38 = por %p36, %p37
    %p39 = scmp.ne.s32.totalorder %s25, %s26
    %p40 = scmp.eq.s32.totalorder %s18, 1
    %p41 = por %p39, %p40
    %p43 = scmp.ne.s32.totalorder %s26, %s42
    %p44 = scmp.eq.s32.totalorder %s18, 0
    %p45 = por %p43, %p44
    %s47 = sadd.s32 %s46, 1
    %p50 = scmp.eq.s32.totalorder %s12, 1
    %p51 = scmp.ne.s32.totalorder %s46, %s48
    %p52 = scmp.eq.s32.totalorder %s12, 0
    %p53 = por %p51, %p52
    %p54 = scmp.ne.s32.totalorder %s46, %s48
    %p55 = scmp.eq.s32.totalorder %s17, 1
    %p56 = por %p54, %p55
    %p57 = scmp.ne.s32.totalorder %s48, %s49
    %p58 = scmp.eq.s32.totalorder %s17, 0
    %p59 = por %p57, %p58
    %p60 = scmp.ne.s32.totalorder %s48, %s49
    %p61 = scmp.eq.s32.totalorder %s18, 1
    %p62 = por %p60, %p61
    %p64 = scmp.ne.s32.totalorder %s49, %s63
    %p65 = scmp.eq.s32.totalorder %s18, 0
    %p66 = por %p64, %p65
    %s68 = sadd.s32 %s67, 1
    %p71 = scmp.eq.s32.totalorder %s12, 1
    %p72 = scmp.ne.s32.totalorder %s67, %s69
    %p73 = scmp.eq.s32.totalorder %s12, 0
    %p74 = por %p72, %p73
    %p75 = scmp.ne.s32.totalorder %s67, %s69
    %p76 = scmp.eq.s32.totalorder %s17, 1
    %p77 = por %p75, %p76
    %p78 = scmp.ne.s32.totalorder %s69, %s70
    %p79 = scmp.eq.s32.totalorder %s17, 0
    %p80 = por %p78, %p79
    %p81 = scmp.ne.s32.totalorder %s69, %s70
    %p82 = scmp.eq.s32.totalorder %s18, 1
    %p83 = por %p81, %p82
    %p85 = scmp.ne.s32.totalorder %s70, %s84
    %p86 = scmp.eq.s32.totalorder %s18, 0
    %p87 = por %p85, %p86
    %s88 = ssub.s32 %s12, %s19
    %p89 = scmp.eq.s32.totalorder %s88, 0
    %s91 = sadd.s32 %s90, 1
    %s92 = scalar_select %p89, %s90, %s91
    %p95 = pneg %p89
    %p96 = scmp.eq.s32.totalorder %s12, 1
    %p97 = por %p95, %p96
    %p98 = scmp.ne.s32.totalorder %s90, %s93
    %p99 = scmp.eq.s32.totalorder %s12, 0
    %p100 = por %p98, %p99
    %p101 = scmp.ne.s32.totalorder %s90, %s93
    %p102 = scmp.eq.s32.totalorder %s17, 1
    %p103 = por %p101, %p102
    %p104 = scmp.ne.s32.totalorder %s93, %s94
    %p105 = scmp.eq.s32.totalorder %s17, 0
    %p106 = por %p104, %p105
    %p107 = scmp.ne.s32.totalorder %s93, %s94
    %p108 = scmp.eq.s32.totalorder %s18, 1
    %p109 = por %p107, %p108
    %p111 = scmp.ne.s32.totalorder %s94, %s110
    %p112 = scmp.eq.s32.totalorder %s18, 0
    %p113 = por %p111, %p112
    %s115 = sadd.s32 %s114, 1
    %p118 = scmp.eq.s32.totalorder %s12, 1
    %p119 = scmp.ne.s32.totalorder %s114, %s116
    %p120 = scmp.eq.s32.totalorder %s12, 0
    %p121 = por %p119, %p120
    %p122 = scmp.ne.s32.totalorder %s114, %s116
    %p123 = scmp.eq.s32.totalorder %s17, 1
    %p124 = por %p122, %p123
    %p125 = scmp.ne.s32.totalorder %s116, %s117
    %p126 = scmp.eq.s32.totalorder %s17, 0
    %p127 = por %p125, %p126
    %p128 = scmp.ne.s32.totalorder %s116, %s117
    %p129 = scmp.eq.s32.totalorder %s18, 1
    %p130 = por %p128, %p129
    %p132 = scmp.ne.s32.totalorder %s117, %s131
    %p133 = scmp.eq.s32.totalorder %s18, 0
    %p134 = por %p132, %p133
    %s136 = sadd.s32 %s135, 1
    %p139 = scmp.eq.s32.totalorder %s12, 1
    %p140 = scmp.ne.s32.totalorder %s135, %s137
    %p141 = scmp.eq.s32.totalorder %s12, 0
    %p142 = por %p140, %p141
    %p143 = scmp.ne.s32.totalorder %s135, %s137
    %p144 = scmp.eq.s32.totalorder %s17, 1
    %p145 = por %p143, %p144
    %p146 = scmp.ne.s32.totalorder %s137, %s138
    %p147 = scmp.eq.s32.totalorder %s17, 0
    %p148 = por %p146, %p147
    %p149 = scmp.ne.s32.totalorder %s137, %s138
    %p150 = scmp.eq.s32.totalorder %s18, 1
    %p151 = por %p149, %p150
    %p153 = scmp.ne.s32.totalorder %s138, %s152
    %p154 = scmp.eq.s32.totalorder %s18, 0
    %p155 = por %p153, %p154
    %p156 = scmp.le.s32.totalorder 1, %s12
    %p157 = scmp.lt.s32.totalorder %s12, 3
    %p158 = pnand %p156, %p157
    %p159 = pneg %p158
    // Predicated region
    $region9: #{residual_block_forward.3} parent=5 // pred_check
      _
    $region10: #{residual_block_forward.3} parent=5 // pred_check_branch
      %161 = sbr.rel (%p158) target = $region12
    $region11: #{residual_block_forward.3} parent=5 // pred_region
      %s162 = ssub.s32 %s12, 1
      // Predicated region
      $region13: #{residual_block_forward.3} parent=11 // pred_check
        %p163 = pneg %p59
      $region14: #{residual_block_forward.3} parent=11 // pred_check_branch
        %165 = sbr.rel (%p163) target = $region16
      $region15: #{residual_block_forward.3} parent=11 // pred_region
        _
      $region16: #{residual_block_forward.3} parent=11 // pred_fallthru
        _
      // Predicated region
      $region17: #{residual_block_forward.3} parent=11 // pred_check
        %p166 = pneg %p80
      $region18: #{residual_block_forward.3} parent=11 // pred_check_branch
        %168 = sbr.rel (%p166) target = $region20
      $region19: #{residual_block_forward.3} parent=11 // pred_region
        _
      $region20: #{residual_block_forward.3} parent=11 // pred_fallthru
        _
    $region12: #{residual_block_forward.3} parent=5 // pred_fallthru
      _
    %p169 = scmp.lt.s32.totalorder %s12, 2
    // Predicated region
    $region21: #{residual_block_forward.3} parent=5 // pred_check
      %p170 = pneg %p169
    $region22: #{residual_block_forward.3} parent=5 // pred_check_branch
      %172 = sbr.rel (%p170) target = $region24
    $region23: #{residual_block_forward.3} parent=5 // pred_region
      // Predicated region
      $region25: #{residual_block_forward.3} parent=23 // pred_check
        %p173 = pneg %p32
      $region26: #{residual_block_forward.3} parent=23 // pred_check_branch
        %175 = sbr.rel (%p173) target = $region28
      $region27: #{residual_block_forward.3} parent=23 // pred_region
        %p176 = scmp.lt.s32.totalorder %s12, 1
        %s177 = scalar_select %p176, %s12, 1
        %s178 = smul.addr %s177, 2
        %s179 = smul.addr %s178, 4
        %s180 = scalar_lea.vmem %s0, %s179
      $region28: #{residual_block_forward.3} parent=23 // pred_fallthru
        _
    $region24: #{residual_block_forward.3} parent=5 // pred_fallthru
      _
    %p181 = scmp.le.s32.totalorder 1, %s12
    %p182 = scmp.lt.s32.totalorder %s12, 3
    %p183 = pnand %p181, %p182
    %p184 = pneg %p183
    // Predicated region
    $region29: #{residual_block_forward.3} parent=5 // pred_check
      _
    $region30: #{residual_block_forward.3} parent=5 // pred_check_branch
      %186 = sbr.rel (%p183) target = $region32
    $region31: #{residual_block_forward.3} parent=5 // pred_region
      %s187 = ssub.s32 %s12, 1
      %p188 = scmp.lt.s32.totalorder %s17, 1
      %s189 = scalar_select %p188, %s17, 1
      %s190 = smul.addr %s189, 2
      %s191 = smul.addr %s190, 4
      %s192 = scalar_lea.vmem %s0, %s191
      %p193 = pneg %p38
      %p194 = pneg %p35
      %p195 = pneg %p59
      %p196 = pneg %p56
      %p197 = pneg %p80
      %p198 = pneg %p77
      %p199 = pneg %p106
      %p200 = pneg %p103
      %p201 = scmp.lt.s32.totalorder %s17, 1
      %s202 = scalar_select %p201, %s17, 1
      %s203 = smul.addr %s202, 3
      %s204 = smul.addr %s203, 8
      %s205 = scalar_lea.vmem %s3, %s204
      %p206 = pneg %p127
      %p207 = pneg %p124
      %p208 = pneg %p148
      %p209 = pneg %p145
      %p210 = scmp.lt.s32.totalorder %s17, 1
      %s211 = scalar_select %p210, %s17, 1
      %s212 = smul.addr %s211, 2
      %s213 = smul.addr %s212, 4
      %s214 = scalar_lea.vmem %s0, %s213
      %p215 = scmp.lt.s32.totalorder %s17, 1
      %s216 = scalar_select %p215, %s17, 1
      %s217 = smul.addr %s216, 3
      %s218 = smul.addr %s217, 8
      %s219 = scalar_lea.vmem %s3, %s218
      %p221 = scmp.eq.s32.totalorder %s17, 0
      // Predicated region
      $region33: #{residual_block_forward.3} parent=31 // pred_check
        %p222 = pneg %p221
      $region34: #{residual_block_forward.3} parent=31 // pred_check_branch
        %224 = sbr.rel (%p222) target = $region36
      $region35: #{residual_block_forward.3} parent=31 // pred_region
        %225 = vst [vmem:[#allocation2] sm:$0xff] 0
        %vm226 = vcmask 568320
        %227 = vst.msk [vmem:[#allocation2 + $0x8] sm:$0xf] %vm226, 0
        %vm228 = vcmask 7168
        %229 = vst.msk [vmem:[%s4] sm:$0xff] %vm228, 0.0
        %230 = vst.msk [vmem:[%s5] sm:$0xff] %vm228, 0.0
      $region36: #{residual_block_forward.3} parent=31 // pred_fallthru
        _
      %v231 = vld [vmem:[%s214] sm:$0xf]
      %233 = vrot.lane.b32.xlu0 %v231, 19
      %v234 = vpop.permute.xlu0 %233
      %vm236 = vcmask 281752
      %237 = vst.msk [vmem:[#allocation2] sm:$0xf] %vm236, %v234
      %v238 = vld [vmem:[%s214] sm:$0xf]
      %240 = vrot.lane.b32.xlu0 %v238, 21
      %v241 = vpop.permute.xlu0 %240
      %vm243 = vcmask 429352
      %244 = vst.msk [vmem:[#allocation2] sm:$0xf] %vm243, %v241
      %v245 = vld [vmem:[%s214] sm:$0xf]
      %247 = vrot.lane.b32.xlu0 %v245, 23
      %v248 = vpop.permute.xlu0 %247
      %vm250 = vcmask 576952
      %251 = vst.msk [vmem:[#allocation2] sm:$0xf] %vm250, %v248
      %v252 = vld [vmem:[%s214] sm:$0xf]
      %254 = vrot.lane.b32.xlu0 %v252, 25
      %v255 = vpop.permute.xlu0 %254
      %vm257 = vcmask 724552
      %258 = vst.msk [vmem:[#allocation2] sm:$0xf] %vm257, %v255
      %v259 = vld [vmem:[%s214] sm:$0xf]
      %261 = vrot.lane.b32.xlu0 %v259, 27
      %v262 = vpop.permute.xlu0 %261
      %vm264 = vcmask 872152
      %265 = vst.msk [vmem:[#allocation2] sm:$0xf] %vm264, %v262
      %v266 = vld [vmem:[%s214] sm:$0xf]
      %268 = vrot.lane.b32.xlu0 %v266, 29
      %v269 = vpop.permute.xlu0 %268
      %vm271 = vcmask 1019752
      %272 = vst.msk [vmem:[#allocation2] sm:$0xf] %vm271, %v269
      %v273 = vld [vmem:[%s214] sm:$0xf]
      %275 = vrot.lane.b32.xlu0 %v273, 31
      %v276 = vpop.permute.xlu0 %275
      %v277 = vrot.slane %v276, 4
      %vm278 = vcmask 252928
      %v279 = vsel %vm278, %v277, %v276
      %vm281 = vcmask 1044472
      %vm282 = vcmask 121860
      %vm283 = vmor %vm282, %vm281
      %284 = vst.msk [vmem:[#allocation2] sm:$0xff] %vm283, %v279
      %v285 = vld [vmem:[%s214] sm:$0xf]
      %287 = vrot.lane.b32.xlu0 %v285, 33
      %v288 = vpop.permute.xlu0 %287
      %vm290 = vcmask 265352
      %291 = vst.msk [vmem:[#allocation2 + $0x4] sm:$0xf] %vm290, %v288
      %v292 = vld [vmem:[%s214 + $0x4] sm:$0xf]
      %294 = vrot.lane.b32.xlu0 %v292, 35
      %v295 = vpop.permute.xlu0 %294
      %vm297 = vcmask 412952
      %298 = vst.msk [vmem:[#allocation2 + $0x4] sm:$0xf] %vm297, %v295
      %v299 = vld [vmem:[%s214 + $0x4] sm:$0xf]
      %301 = vrot.lane.b32.xlu0 %v299, 37
      %v302 = vpop.permute.xlu0 %301
      %vm304 = vcmask 560552
      %305 = vst.msk [vmem:[#allocation2 + $0x4] sm:$0xf] %vm304, %v302
      %v306 = vld [vmem:[%s214 + $0x4] sm:$0xf]
      %308 = vrot.lane.b32.xlu0 %v306, 39
      %v309 = vpop.permute.xlu0 %308
      %vm311 = vcmask 708152
      %312 = vst.msk [vmem:[#allocation2 + $0x4] sm:$0xf] %vm311, %v309
      %v313 = vld [vmem:[%s214 + $0x4] sm:$0xf]
      %315 = vrot.lane.b32.xlu0 %v313, 41
      %v316 = vpop.permute.xlu0 %315
      %vm318 = vcmask 855752
      %319 = vst.msk [vmem:[#allocation2 + $0x4] sm:$0xf] %vm318, %v316
      %v320 = vld [vmem:[%s214 + $0x4] sm:$0xf]
      %322 = vrot.lane.b32.xlu0 %v320, 43
      %v323 = vpop.permute.xlu0 %322
      %vm325 = vcmask 1003352
      %326 = vst.msk [vmem:[#allocation2 + $0x4] sm:$0xf] %vm325, %v323
      %v327 = vld [vmem:[%s214 + $0x4] sm:$0xf]
      %329 = vrot.lane.b32.xlu0 %v327, 45
      %v330 = vpop.permute.xlu0 %329
      %v331 = vrot.slane %v330, 4
      %vm332 = vcmask 367616
      %v333 = vsel %vm332, %v331, %v330
      %vm335 = vcmask 1044456
      %vm336 = vcmask 105476
      %vm337 = vmor %vm336, %vm335
      %338 = vst.msk [vmem:[#allocation2 + $0x4] sm:$0xff] %vm337, %v333
      %v339 = vld [vmem:[%s214 + $0x4] sm:$0xf]
      %341 = vrot.lane.b32.xlu0 %v339, 47
      %v342 = vpop.permute.xlu0 %341
      %vm344 = vcmask 248952
      %345 = vst.msk [vmem:[#allocation2 + $0x8] sm:$0xf] %vm344, %v342
      %v346 = vld [vmem:[%s214 + $0x4] sm:$0xf]
      %348 = vrot.lane.b32.xlu0 %v346, 49
      %v349 = vpop.permute.xlu0 %348
      %vm351 = vcmask 396552
      %352 = vst.msk [vmem:[#allocation2 + $0x8] sm:$0xf] %vm351, %v349
      %v353 = vld [vmem:[%s1] sm:$0xf]
      %v354 = vld [vmem:[#allocation2] sm:$0xff]
      %v355 = vld [vmem:[#allocation2 + $0x8] sm:$0xf]
      %s356 = scalar_lea.vmem %s1, 4
      %v357 = vld [vmem:[%s356] sm:$0xf]
      %v360 = vunpack.c.l.b16 %v354
      %v361 = vunpack.c.h.b16 %v354
      %v362 = vunpack.c.l.b16 %v355
      %v363 = vpack.c.b16 %v360, %v360
      %v364 = vpack.c.b16 %v361, %v361
      %v365 = vpack.c.b16 %v362, %v362
      %366 = vrot.lane.b32.xlu0 %v363, 127
      %v367 = vpop.permute.xlu0 %366
      %368 = vrot.lane.b32.xlu0 %v364, 127
      %v369 = vpop.permute.xlu0 %368
      %370 = vrot.lane.b32.xlu0 %v365, 127
      %v371 = vpop.permute.xlu0 %370
      %vm372 = vcmask 1039360
      %v373 = vsel %vm372, %v367, %v369
      %v374 = vsel %vm372, %v369, %v371
      %vm375 = vcmask 64512
      %v377 = vsel %vm375, %v357, 0
      %vm379 = vcmask 1043456
      %v381 = vsel %vm379, %v373, 0
      %v384 = vsel %vm379, %v374, 0
      %v387 = vsel %vm379, %v371, 0
      %389 = vmatprep.subr.bf16.mxu0 %v384
      %390 = vmatpush1.bf16.msra.mxu0 %v381
      %391 = vmatprep.subr.bf16.mxu0 0
      %392 = vmatpush1.bf16.msra.mxu0 0
      %393 = vmatprep.subr.bf16.mxu0 0
      %394 = vmatpush1.bf16.msra.mxu0 0
      %395 = vmatprep.subr.bf16.mxu0 0
      %396 = vmatpush1.bf16.msra.mxu0 0
      %397 = vmatprep.subr.bf16.mxu0 0
      %398 = vmatpush1.bf16.msra.mxu0 0
      %399 = vmatprep.subr.bf16.mxu0 0
      %400 = vmatpush1.bf16.msra.mxu0 0
      %401 = vmatprep.subr.bf16.mxu0 0
      %402 = vmatpush1.bf16.msra.mxu0 0
      %403 = vmatprep.subr.bf16.mxu0 0
      %404 = vmatpush1.bf16.msra.mxu0 0
      %405 = vmatprep.subr.bf16.mxu0 0
      %406 = vmatpush1.bf16.msra.mxu0 0
      %407 = vmatprep.subr.bf16.mxu0 0
      %408 = vmatpush1.bf16.msra.mxu0 0
      %409 = vmatprep.subr.bf16.mxu0 0
      %410 = vmatpush1.bf16.msra.mxu0 0
      %411 = vmatprep.subr.bf16.mxu0 0
      %412 = vmatpush1.bf16.msra.mxu0 0
      %413 = vmatprep.subr.bf16.mxu0 0
      %414 = vmatpush1.bf16.msra.mxu0 0
      %415 = vmatprep.subr.bf16.mxu0 0
      %416 = vmatpush1.bf16.msra.mxu0 0
      %417 = vmatprep.subr.bf16.mxu0 0
      %418 = vmatpush1.bf16.msra.mxu0 0
      %419 = vmatprep.subr.bf16.mxu0 0
      %420 = vmatpush1.bf16.msra.mxu0 0
      %421 = vmatprep.mubr.bf16.mxu0 0
      %422 = vmatmul.mubr.bf16.gmra.mrb[0].mxu0 %v377
      %v423 = vpop.f32.mrb[0].mxu0
      %v424 = vadd.f32 0.0, %v423
      %v425 = vpop.f32.mrb[0].mxu0
      %v426 = vadd.f32 0.0, %v425
      %v427 = vpop.f32.mrb[0].mxu0
      %v428 = vpop.f32.mrb[0].mxu0
      %429 = vdwg.mxu0
      %430 = vmatprep.subr.bf16.mxu0 0
      %431 = vmatpush1.bf16.msra.mxu0 %v387
      %432 = vmatprep.subr.bf16.mxu0 0
      %433 = vmatpush1.bf16.msra.mxu0 0
      %434 = vmatprep.subr.bf16.mxu0 0
      %435 = vmatpush1.bf16.msra.mxu0 0
      %436 = vmatprep.subr.bf16.mxu0 0
      %437 = vmatpush1.bf16.msra.mxu0 0
      %438 = vmatprep.subr.bf16.mxu0 0
      %439 = vmatpush1.bf16.msra.mxu0 0
      %440 = vmatprep.subr.bf16.mxu0 0
      %441 = vmatpush1.bf16.msra.mxu0 0
      %442 = vmatprep.subr.bf16.mxu0 0
      %443 = vmatpush1.bf16.msra.mxu0 0
      %444 = vmatprep.subr.bf16.mxu0 0
      %445 = vmatpush1.bf16.msra.mxu0 0
      %446 = vmatprep.subr.bf16.mxu0 0
      %447 = vmatpush1.bf16.msra.mxu0 0
      %448 = vmatprep.subr.bf16.mxu0 0
      %449 = vmatpush1.bf16.msra.mxu0 0
      %450 = vmatprep.subr.bf16.mxu0 0
      %451 = vmatpush1.bf16.msra.mxu0 0
      %452 = vmatprep.subr.bf16.mxu0 0
      %453 = vmatpush1.bf16.msra.mxu0 0
      %454 = vmatprep.subr.bf16.mxu0 0
      %455 = vmatpush1.bf16.msra.mxu0 0
      %456 = vmatprep.subr.bf16.mxu0 0
      %457 = vmatpush1.bf16.msra.mxu0 0
      %458 = vmatprep.subr.bf16.mxu0 0
      %459 = vmatpush1.bf16.msra.mxu0 0
      %460 = vmatprep.subr.bf16.mxu0 0
      %461 = vmatpush1.bf16.msra.mxu0 0
      %462 = vmatprep.mubr.bf16.mxu0 0
      %463 = vmatmul.mubr.bf16.gmra.mrb[0].mxu0 %v377
      %v464 = vpop.f32.mrb[0].mxu0
      %v465 = vadd.f32 0.0, %v464
      %v466 = vpop.f32.mrb[0].mxu0
      %v467 = vpop.f32.mrb[0].mxu0
      %v468 = vpop.f32.mrb[0].mxu0
      %469 = vdwg.mxu0
      %v471 = vsel %vm375, %v353, 0
      %v474 = vsel %vm379, %v363, 0
      %v477 = vsel %vm379, %v364, 0
      %v480 = vsel %vm379, %v365, 0
      %482 = vmatprep.subr.bf16.mxu0 %v477
      %483 = vmatpush1.bf16.msra.mxu0 %v474
      %484 = vmatprep.subr.bf16.mxu0 0
      %485 = vmatpush1.bf16.msra.mxu0 0
      %486 = vmatprep.subr.bf16.mxu0 0
      %487 = vmatpush1.bf16.msra.mxu0 0
      %488 = vmatprep.subr.bf16.mxu0 0
      %489 = vmatpush1.bf16.msra.mxu0 0
      %490 = vmatprep.subr.bf16.mxu0 0
      %491 = vmatpush1.bf16.msra.mxu0 0
      %492 = vmatprep.subr.bf16.mxu0 0
      %493 = vmatpush1.bf16.msra.mxu0 0
      %494 = vmatprep.subr.bf16.mxu0 0
      %495 = vmatpush1.bf16.msra.mxu0 0
      %496 = vmatprep.subr.bf16.mxu0 0
      %497 = vmatpush1.bf16.msra.mxu0 0
      %498 = vmatprep.subr.bf16.mxu0 0
      %499 = vmatpush1.bf16.msra.mxu0 0
      %500 = vmatprep.subr.bf16.mxu0 0
      %501 = vmatpush1.bf16.msra.mxu0 0
      %502 = vmatprep.subr.bf16.mxu0 0
      %503 = vmatpush1.bf16.msra.mxu0 0
      %504 = vmatprep.subr.bf16.mxu0 0
      %505 = vmatpush1.bf16.msra.mxu0 0
      %506 = vmatprep.subr.bf16.mxu0 0
      %507 = vmatpush1.bf16.msra.mxu0 0
      %508 = vmatprep.subr.bf16.mxu0 0
      %509 = vmatpush1.bf16.msra.mxu0 0
      %510 = vmatprep.subr.bf16.mxu0 0
      %511 = vmatpush1.bf16.msra.mxu0 0
      %512 = vmatprep.subr.bf16.mxu0 0
      %513 = vmatpush1.bf16.msra.mxu0 0
      %514 = vmatprep.mubr.bf16.mxu0 0
      %515 = vmatmul.mubr.bf16.gmra.mrb[0].mxu0 %v471
      %v516 = vpop.f32.mrb[0].mxu0
      %v517 = vadd.f32 %v424, %v516
      %v518 = vpop.f32.mrb[0].mxu0
      %v519 = vadd.f32 %v426, %v518
      %v520 = vpop.f32.mrb[0].mxu0
      %v521 = vpop.f32.mrb[0].mxu0
      %522 = vdwg.mxu0
      %523 = vmatprep.subr.bf16.mxu0 0
      %524 = vmatpush1.bf16.msra.mxu0 %v480
      %525 = vmatprep.subr.bf16.mxu0 0
      %526 = vmatpush1.bf16.msra.mxu0 0
      %527 = vmatprep.subr.bf16.mxu0 0
      %528 = vmatpush1.bf16.msra.mxu0 0
      %529 = vmatprep.subr.bf16.mxu0 0
      %530 = vmatpush1.bf16.msra.mxu0 0
      %531 = vmatprep.subr.bf16.mxu0 0
      %532 = vmatpush1.bf16.msra.mxu0 0
      %533 = vmatprep.subr.bf16.mxu0 0
      %534 = vmatpush1.bf16.msra.mxu0 0
      %535 = vmatprep.subr.bf16.mxu0 0
      %536 = vmatpush1.bf16.msra.mxu0 0
      %537 = vmatprep.subr.bf16.mxu0 0
      %538 = vmatpush1.bf16.msra.mxu0 0
      %539 = vmatprep.subr.bf16.mxu0 0
      %540 = vmatpush1.bf16.msra.mxu0 0
      %541 = vmatprep.subr.bf16.mxu0 0
      %542 = vmatpush1.bf16.msra.mxu0 0
      %543 = vmatprep.subr.bf16.mxu0 0
      %544 = vmatpush1.bf16.msra.mxu0 0
      %545 = vmatprep.subr.bf16.mxu0 0
      %546 = vmatpush1.bf16.msra.mxu0 0
      %547 = vmatprep.subr.bf16.mxu0 0
      %548 = vmatpush1.bf16.msra.mxu0 0
      %549 = vmatprep.subr.bf16.mxu0 0
      %550 = vmatpush1.bf16.msra.mxu0 0
      %551 = vmatprep.subr.bf16.mxu0 0
      %552 = vmatpush1.bf16.msra.mxu0 0
      %553 = vmatprep.subr.bf16.mxu0 0
      %554 = vmatpush1.bf16.msra.mxu0 0
      %555 = vmatprep.mubr.bf16.mxu0 0
      %556 = vmatmul.mubr.bf16.gmra.mrb[0].mxu0 %v471
      %v557 = vpop.f32.mrb[0].mxu0
      %v558 = vadd.f32 %v465, %v557
      %v559 = vpop.f32.mrb[0].mxu0
      %v560 = vpop.f32.mrb[0].mxu0
      %v561 = vpop.f32.mrb[0].mxu0
      %562 = vdwg.mxu0
      %s563 = scalar_lea.vmem %s1, 8
      %v564 = vld [vmem:[%s563] sm:$0xf]
      %565 = vrot.lane.b32.xlu0 %v363, 126
      %v566 = vpop.permute.xlu0 %565
      %567 = vrot.lane.b32.xlu0 %v364, 126
      %v568 = vpop.permute.xlu0 %567
      %569 = vrot.lane.b32.xlu0 %v365, 126
      %v570 = vpop.permute.xlu0 %569
      %vm571 = vcmask 1031168
      %v572 = vsel %vm571, %v566, %v568
      %v573 = vsel %vm571, %v568, %v570
      %v575 = vsel %vm375, %v564, 0
      %v578 = vsel %vm379, %v572, 0
      %v581 = vsel %vm379, %v573, 0
      %v584 = vsel %vm379, %v570, 0
      %586 = vmatprep.subr.bf16.mxu0 %v581
      %587 = vmatpush1.bf16.msra.mxu0 %v578
      %588 = vmatprep.subr.bf16.mxu0 0
      %589 = vmatpush1.bf16.msra.mxu0 0
      %590 = vmatprep.subr.bf16.mxu0 0
      %591 = vmatpush1.bf16.msra.mxu0 0
      %592 = vmatprep.subr.bf16.mxu0 0
      %593 = vmatpush1.bf16.msra.mxu0 0
      %594 = vmatprep.subr.bf16.mxu0 0
      %595 = vmatpush1.bf16.msra.mxu0 0
      %596 = vmatprep.subr.bf16.mxu0 0
      %597 = vmatpush1.bf16.msra.mxu0 0
      %598 = vmatprep.subr.bf16.mxu0 0
      %599 = vmatpush1.bf16.msra.mxu0 0
      %600 = vmatprep.subr.bf16.mxu0 0
      %601 = vmatpush1.bf16.msra.mxu0 0
      %602 = vmatprep.subr.bf16.mxu0 0
      %603 = vmatpush1.bf16.msra.mxu0 0
      %604 = vmatprep.subr.bf16.mxu0 0
      %605 = vmatpush1.bf16.msra.mxu0 0
      %606 = vmatprep.subr.bf16.mxu0 0
      %607 = vmatpush1.bf16.msra.mxu0 0
      %608 = vmatprep.subr.bf16.mxu0 0
      %609 = vmatpush1.bf16.msra.mxu0 0
      %610 = vmatprep.subr.bf16.mxu0 0
      %611 = vmatpush1.bf16.msra.mxu0 0
      %612 = vmatprep.subr.bf16.mxu0 0
      %613 = vmatpush1.bf16.msra.mxu0 0
      %614 = vmatprep.subr.bf16.mxu0 0
      %615 = vmatpush1.bf16.msra.mxu0 0
      %616 = vmatprep.subr.bf16.mxu0 0
      %617 = vmatpush1.bf16.msra.mxu0 0
      %618 = vmatprep.mubr.bf16.mxu0 0
      %619 = vmatmul.mubr.bf16.gmra.mrb[0].mxu0 %v575
      %v620 = vpop.f32.mrb[0].mxu0
      %v621 = vadd.f32 0.0, %v620
      %v622 = vpop.f32.mrb[0].mxu0
      %v623 = vadd.f32 0.0, %v622
      %v624 = vpop.f32.mrb[0].mxu0
      %v625 = vpop.f32.mrb[0].mxu0
      %626 = vdwg.mxu0
      %627 = vmatprep.subr.bf16.mxu0 0
      %628 = vmatpush1.bf16.msra.mxu0 %v584
      %629 = vmatprep.subr.bf16.mxu0 0
      %630 = vmatpush1.bf16.msra.mxu0 0
      %631 = vmatprep.subr.bf16.mxu0 0
      %632 = vmatpush1.bf16.msra.mxu0 0
      %633 = vmatprep.subr.bf16.mxu0 0
      %634 = vmatpush1.bf16.msra.mxu0 0
      %635 = vmatprep.subr.bf16.mxu0 0
      %636 = vmatpush1.bf16.msra.mxu0 0
      %637 = vmatprep.subr.bf16.mxu0 0
      %638 = vmatpush1.bf16.msra.mxu0 0
      %639 = vmatprep.subr.bf16.mxu0 0
      %640 = vmatpush1.bf16.msra.mxu0 0
      %641 = vmatprep.subr.bf16.mxu0 0
      %642 = vmatpush1.bf16.msra.mxu0 0
      %643 = vmatprep.subr.bf16.mxu0 0
      %644 = vmatpush1.bf16.msra.mxu0 0
      %645 = vmatprep.subr.bf16.mxu0 0
      %646 = vmatpush1.bf16.msra.mxu0 0
      %647 = vmatprep.subr.bf16.mxu0 0
      %648 = vmatpush1.bf16.msra.mxu0 0
      %649 = vmatprep.subr.bf16.mxu0 0
      %650 = vmatpush1.bf16.msra.mxu0 0
      %651 = vmatprep.subr.bf16.mxu0 0
      %652 = vmatpush1.bf16.msra.mxu0 0
      %653 = vmatprep.subr.bf16.mxu0 0
      %654 = vmatpush1.bf16.msra.mxu0 0
      %655 = vmatprep.subr.bf16.mxu0 0
      %656 = vmatpush1.bf16.msra.mxu0 0
      %657 = vmatprep.subr.bf16.mxu0 0
      %658 = vmatpush1.bf16.msra.mxu0 0
      %659 = vmatprep.mubr.bf16.mxu0 0
      %660 = vmatmul.mubr.bf16.gmra.mrb[0].mxu0 %v575
      %v661 = vpop.f32.mrb[0].mxu0
      %v662 = vadd.f32 0.0, %v661
      %v663 = vpop.f32.mrb[0].mxu0
      %v664 = vpop.f32.mrb[0].mxu0
      %v665 = vpop.f32.mrb[0].mxu0
      %666 = vdwg.mxu0
      %v667 = vadd.f32 %v517, %v621
      %v668 = vadd.f32 %v519, %v623
      %v669 = vadd.f32 %v558, %v662
      %s670 = scalar_lea.vmem %s1, 12
      %v671 = vld [vmem:[%s670] sm:$0xf]
      %672 = vrot.lane.b32.xlu0 %v363, 110
      %v673 = vpop.permute.xlu0 %672
      %674 = vrot.lane.b32.xlu0 %v364, 110
      %v675 = vpop.permute.xlu0 %674
      %676 = vrot.lane.b32.xlu0 %v365, 110
      %v677 = vpop.permute.xlu0 %676
      %vm678 = vcmask 900096
      %v679 = vsel %vm678, %v673, %v675
      %v680 = vsel %vm678, %v675, %v677
      %v682 = vsel %vm375, %v671, 0
      %v685 = vsel %vm379, %v679, 0
      %v688 = vsel %vm379, %v680, 0
      %v691 = vsel %vm379, %v677, 0
      %693 = vmatprep.subr.bf16.mxu0 %v688
      %694 = vmatpush1.bf16.msra.mxu0 %v685
      %695 = vmatprep.subr.bf16.mxu0 0
      %696 = vmatpush1.bf16.msra.mxu0 0
      %697 = vmatprep.subr.bf16.mxu0 0
      %698 = vmatpush1.bf16.msra.mxu0 0
      %699 = vmatprep.subr.bf16.mxu0 0
      %700 = vmatpush1.bf16.msra.mxu0 0
      %701 = vmatprep.subr.bf16.mxu0 0
      %702 = vmatpush1.bf16.msra.mxu0 0
      %703 = vmatprep.subr.bf16.mxu0 0
      %704 = vmatpush1.bf16.msra.mxu0 0
      %705 = vmatprep.subr.bf16.mxu0 0
      %706 = vmatpush1.bf16.msra.mxu0 0
      %707 = vmatprep.subr.bf16.mxu0 0
      %708 = vmatpush1.bf16.msra.mxu0 0
      %709 = vmatprep.subr.bf16.mxu0 0
      %710 = vmatpush1.bf16.msra.mxu0 0
      %711 = vmatprep.subr.bf16.mxu0 0
      %712 = vmatpush1.bf16.msra.mxu0 0
      %713 = vmatprep.subr.bf16.mxu0 0
      %714 = vmatpush1.bf16.msra.mxu0 0
      %715 = vmatprep.subr.bf16.mxu0 0
      %716 = vmatpush1.bf16.msra.mxu0 0
      %717 = vmatprep.subr.bf16.mxu0 0
      %718 = vmatpush1.bf16.msra.mxu0 0
      %719 = vmatprep.subr.bf16.mxu0 0
      %720 = vmatpush1.bf16.msra.mxu0 0
      %721 = vmatprep.subr.bf16.mxu0 0
      %722 = vmatpush1.bf16.msra.mxu0 0
      %723 = vmatprep.subr.bf16.mxu0 0
      %724 = vmatpush1.bf16.msra.mxu0 0
      %725 = vmatprep.mubr.bf16.mxu0 0
      %726 = vmatmul.mubr.bf16.gmra.mrb[0].mxu0 %v682
      %v727 = vpop.f32.mrb[0].mxu0
      %v728 = vadd.f32 0.0, %v727
      %v729 = vpop.f32.mrb[0].mxu0
      %v730 = vadd.f32 0.0, %v729
      %v731 = vpop.f32.mrb[0].mxu0
      %v732 = vpop.f32.mrb[0].mxu0
      %733 = vdwg.mxu0
      %734 = vmatprep.subr.bf16.mxu0 0
      %735 = vmatpush1.bf16.msra.mxu0 %v691
      %736 = vmatprep.subr.bf16.mxu0 0
      %737 = vmatpush1.bf16.msra.mxu0 0
      %738 = vmatprep.subr.bf16.mxu0 0
      %739 = vmatpush1.bf16.msra.mxu0 0
      %740 = vmatprep.subr.bf16.mxu0 0
      %741 = vmatpush1.bf16.msra.mxu0 0
      %742 = vmatprep.subr.bf16.mxu0 0
      %743 = vmatpush1.bf16.msra.mxu0 0
      %744 = vmatprep.subr.bf16.mxu0 0
      %745 = vmatpush1.bf16.msra.mxu0 0
      %746 = vmatprep.subr.bf16.mxu0 0
      %747 = vmatpush1.bf16.msra.mxu0 0
      %748 = vmatprep.subr.bf16.mxu0 0
      %749 = vmatpush1.bf16.msra.mxu0 0
      %750 = vmatprep.subr.bf16.mxu0 0
      %751 = vmatpush1.bf16.msra.mxu0 0
      %752 = vmatprep.subr.bf16.mxu0 0
      %753 = vmatpush1.bf16.msra.mxu0 0
      %754 = vmatprep.subr.bf16.mxu0 0
      %755 = vmatpush1.bf16.msra.mxu0 0
      %756 = vmatprep.subr.bf16.mxu0 0
      %757 = vmatpush1.bf16.msra.mxu0 0
      %758 = vmatprep.subr.bf16.mxu0 0
      %759 = vmatpush1.bf16.msra.mxu0 0
      %760 = vmatprep.subr.bf16.mxu0 0
      %761 = vmatpush1.bf16.msra.mxu0 0
      %762 = vmatprep.subr.bf16.mxu0 0
      %763 = vmatpush1.bf16.msra.mxu0 0
      %764 = vmatprep.subr.bf16.mxu0 0
      %765 = vmatpush1.bf16.msra.mxu0 0
      %766 = vmatprep.mubr.bf16.mxu0 0
      %767 = vmatmul.mubr.bf16.gmra.mrb[0].mxu0 %v682
      %v768 = vpop.f32.mrb[0].mxu0
      %v769 = vadd.f32 0.0, %v768
      %v770 = vpop.f32.mrb[0].mxu0
      %v771 = vpop.f32.mrb[0].mxu0
      %v772 = vpop.f32.mrb[0].mxu0
      %773 = vdwg.mxu0
      %v774 = vadd.f32 %v667, %v728
      %v775 = vadd.f32 %v668, %v730
      %v776 = vadd.f32 %v669, %v769
      %s777 = scalar_lea.vmem %s1, 16
      %v778 = vld [vmem:[%s777] sm:$0xf]
      %779 = vrot.lane.b32.xlu0 %v363, 109
      %v780 = vpop.permute.xlu0 %779
      %781 = vrot.lane.b32.xlu0 %v364, 109
      %v782 = vpop.permute.xlu0 %781
      %783 = vrot.lane.b32.xlu0 %v365, 109
      %v784 = vpop.permute.xlu0 %783
      %vm785 = vcmask 891904
      %v786 = vsel %vm785, %v780, %v782
      %v787 = vsel %vm785, %v782, %v784
      %v789 = vsel %vm375, %v778, 0
      %v792 = vsel %vm379, %v786, 0
      %v795 = vsel %vm379, %v787, 0
      %v798 = vsel %vm379, %v784, 0
      %800 = vmatprep.subr.bf16.mxu0 %v795
      %801 = vmatpush1.bf16.msra.mxu0 %v792
      %802 = vmatprep.subr.bf16.mxu0 0
      %803 = vmatpush1.bf16.msra.mxu0 0
      %804 = vmatprep.subr.bf16.mxu0 0
      %805 = vmatpush1.bf16.msra.mxu0 0
      %806 = vmatprep.subr.bf16.mxu0 0
      %807 = vmatpush1.bf16.msra.mxu0 0
      %808 = vmatprep.subr.bf16.mxu0 0
      %809 = vmatpush1.bf16.msra.mxu0 0
      %810 = vmatprep.subr.bf16.mxu0 0
      %811 = vmatpush1.bf16.msra.mxu0 0
      %812 = vmatprep.subr.bf16.mxu0 0
      %813 = vmatpush1.bf16.msra.mxu0 0
      %814 = vmatprep.subr.bf16.mxu0 0
      %815 = vmatpush1.bf16.msra.mxu0 0
      %816 = vmatprep.subr.bf16.mxu0 0
      %817 = vmatpush1.bf16.msra.mxu0 0
      %818 = vmatprep.subr.bf16.mxu0 0
      %819 = vmatpush1.bf16.msra.mxu0 0
      %820 = vmatprep.subr.bf16.mxu0 0
      %821 = vmatpush1.bf16.msra.mxu0 0
      %822 = vmatprep.subr.bf16.mxu0 0
      %823 = vmatpush1.bf16.msra.mxu0 0
      %824 = vmatprep.subr.bf16.mxu0 0
      %825 = vmatpush1.bf16.msra.mxu0 0
      %826 = vmatprep.subr.bf16.mxu0 0
      %827 = vmatpush1.bf16.msra.mxu0 0
      %828 = vmatprep.subr.bf16.mxu0 0
      %829 = vmatpush1.bf16.msra.mxu0 0
      %830 = vmatprep.subr.bf16.mxu0 0
      %831 = vmatpush1.bf16.msra.mxu0 0
      %832 = vmatprep.mubr.bf16.mxu0 0
      %833 = vmatmul.mubr.bf16.gmra.mrb[0].mxu0 %v789
      %v834 = vpop.f32.mrb[0].mxu0
      %v835 = vadd.f32 0.0, %v834
      %v836 = vpop.f32.mrb[0].mxu0
      %v837 = vadd.f32 0.0, %v836
      %v838 = vpop.f32.mrb[0].mxu0
      %v839 = vpop.f32.mrb[0].mxu0
      %840 = vdwg.mxu0
      %841 = vmatprep.subr.bf16.mxu0 0
      %842 = vmatpush1.bf16.msra.mxu0 %v798
      %843 = vmatprep.subr.bf16.mxu0 0
      %844 = vmatpush1.bf16.msra.mxu0 0
      %845 = vmatprep.subr.bf16.mxu0 0
      %846 = vmatpush1.bf16.msra.mxu0 0
      %847 = vmatprep.subr.bf16.mxu0 0
      %848 = vmatpush1.bf16.msra.mxu0 0
      %849 = vmatprep.subr.bf16.mxu0 0
      %850 = vmatpush1.bf16.msra.mxu0 0
      %851 = vmatprep.subr.bf16.mxu0 0
      %852 = vmatpush1.bf16.msra.mxu0 0
      %853 = vmatprep.subr.bf16.mxu0 0
      %854 = vmatpush1.bf16.msra.mxu0 0
      %855 = vmatprep.subr.bf16.mxu0 0
      %856 = vmatpush1.bf16.msra.mxu0 0
      %857 = vmatprep.subr.bf16.mxu0 0
      %858 = vmatpush1.bf16.msra.mxu0 0
      %859 = vmatprep.subr.bf16.mxu0 0
      %860 = vmatpush1.bf16.msra.mxu0 0
      %861 = vmatprep.subr.bf16.mxu0 0
      %862 = vmatpush1.bf16.msra.mxu0 0
      %863 = vmatprep.subr.bf16.mxu0 0
      %864 = vmatpush1.bf16.msra.mxu0 0
      %865 = vmatprep.subr.bf16.mxu0 0
      %866 = vmatpush1.bf16.msra.mxu0 0
      %867 = vmatprep.subr.bf16.mxu0 0
      %868 = vmatpush1.bf16.msra.mxu0 0
      %869 = vmatprep.subr.bf16.mxu0 0
      %870 = vmatpush1.bf16.msra.mxu0 0
      %871 = vmatprep.subr.bf16.mxu0 0
      %872 = vmatpush1.bf16.msra.mxu0 0
      %873 = vmatprep.mubr.bf16.mxu0 0
      %874 = vmatmul.mubr.bf16.gmra.mrb[0].mxu0 %v789
      %v875 = vpop.f32.mrb[0].mxu0
      %v876 = vadd.f32 0.0, %v875
      %v877 = vpop.f32.mrb[0].mxu0
      %v878 = vpop.f32.mrb[0].mxu0
      %v879 = vpop.f32.mrb[0].mxu0
      %880 = vdwg.mxu0
      %v881 = vadd.f32 %v774, %v835
      %v882 = vadd.f32 %v775, %v837
      %v883 = vadd.f32 %v776, %v876
      %s884 = scalar_lea.vmem %s1, 20
      %v885 = vld [vmem:[%s884] sm:$0xf]
      %886 = vrot.lane.b32.xlu0 %v363, 108
      %v887 = vpop.permute.xlu0 %886
      %888 = vrot.lane.b32.xlu0 %v364, 108
      %v889 = vpop.permute.xlu0 %888
      %890 = vrot.lane.b32.xlu0 %v365, 108
      %v891 = vpop.permute.xlu0 %890
      %vm892 = vcmask 883712
      %v893 = vsel %vm892, %v887, %v889
      %v894 = vsel %vm892, %v889, %v891
      %v896 = vsel %vm375, %v885, 0
      %v899 = vsel %vm379, %v893, 0
      %v902 = vsel %vm379, %v894, 0
      %v905 = vsel %vm379, %v891, 0
      %907 = vmatprep.subr.bf16.mxu0 %v902
      %908 = vmatpush1.bf16.msra.mxu0 %v899
      %909 = vmatprep.subr.bf16.mxu0 0
      %910 = vmatpush1.bf16.msra.mxu0 0
      %911 = vmatprep.subr.bf16.mxu0 0
      %912 = vmatpush1.bf16.msra.mxu0 0
      %913 = vmatprep.subr.bf16.mxu0 0
      %914 = vmatpush1.bf16.msra.mxu0 0
      %915 = vmatprep.subr.bf16.mxu0 0
      %916 = vmatpush1.bf16.msra.mxu0 0
      %917 = vmatprep.subr.bf16.mxu0 0
      %918 = vmatpush1.bf16.msra.mxu0 0
      %919 = vmatprep.subr.bf16.mxu0 0
      %920 = vmatpush1.bf16.msra.mxu0 0
      %921 = vmatprep.subr.bf16.mxu0 0
      %922 = vmatpush1.bf16.msra.mxu0 0
      %923 = vmatprep.subr.bf16.mxu0 0
      %924 = vmatpush1.bf16.msra.mxu0 0
      %925 = vmatprep.subr.bf16.mxu0 0
      %926 = vmatpush1.bf16.msra.mxu0 0
      %927 = vmatprep.subr.bf16.mxu0 0
      %928 = vmatpush1.bf16.msra.mxu0 0
      %929 = vmatprep.subr.bf16.mxu0 0
      %930 = vmatpush1.bf16.msra.mxu0 0
      %931 = vmatprep.subr.bf16.mxu0 0
      %932 = vmatpush1.bf16.msra.mxu0 0
      %933 = vmatprep.subr.bf16.mxu0 0
      %934 = vmatpush1.bf16.msra.mxu0 0
      %935 = vmatprep.subr.bf16.mxu0 0
      %936 = vmatpush1.bf16.msra.mxu0 0
      %937 = vmatprep.subr.bf16.mxu0 0
      %938 = vmatpush1.bf16.msra.mxu0 0
      %939 = vmatprep.mubr.bf16.mxu0 0
      %940 = vmatmul.mubr.bf16.gmra.mrb[0].mxu0 %v896
      %v941 = vpop.f32.mrb[0].mxu0
      %v942 = vadd.f32 0.0, %v941
      %v943 = vpop.f32.mrb[0].mxu0
      %v944 = vadd.f32 0.0, %v943
      %v945 = vpop.f32.mrb[0].mxu0
      %v946 = vpop.f32.mrb[0].mxu0
      %947 = vdwg.mxu0
      %948 = vmatprep.subr.bf16.mxu0 0
      %949 = vmatpush1.bf16.msra.mxu0 %v905
      %950 = vmatprep.subr.bf16.mxu0 0
      %951 = vmatpush1.bf16.msra.mxu0 0
      %952 = vmatprep.subr.bf16.mxu0 0
      %953 = vmatpush1.bf16.msra.mxu0 0
      %954 = vmatprep.subr.bf16.mxu0 0
      %955 = vmatpush1.bf16.msra.mxu0 0
      %956 = vmatprep.subr.bf16.mxu0 0
      %957 = vmatpush1.bf16.msra.mxu0 0
      %958 = vmatprep.subr.bf16.mxu0 0
      %959 = vmatpush1.bf16.msra.mxu0 0
      %960 = vmatprep.subr.bf16.mxu0 0
      %961 = vmatpush1.bf16.msra.mxu0 0
      %962 = vmatprep.subr.bf16.mxu0 0
      %963 = vmatpush1.bf16.msra.mxu0 0
      %964 = vmatprep.subr.bf16.mxu0 0
      %965 = vmatpush1.bf16.msra.mxu0 0
      %966 = vmatprep.subr.bf16.mxu0 0
      %967 = vmatpush1.bf16.msra.mxu0 0
      %968 = vmatprep.subr.bf16.mxu0 0
      %969 = vmatpush1.bf16.msra.mxu0 0
      %970 = vmatprep.subr.bf16.mxu0 0
      %971 = vmatpush1.bf16.msra.mxu0 0
      %972 = vmatprep.subr.bf16.mxu0 0
      %973 = vmatpush1.bf16.msra.mxu0 0
      %974 = vmatprep.subr.bf16.mxu0 0
      %975 = vmatpush1.bf16.msra.mxu0 0
      %976 = vmatprep.subr.bf16.mxu0 0
      %977 = vmatpush1.bf16.msra.mxu0 0
      %978 = vmatprep.subr.bf16.mxu0 0
      %979 = vmatpush1.bf16.msra.mxu0 0
      %980 = vmatprep.mubr.bf16.mxu0 0
      %981 = vmatmul.mubr.bf16.gmra.mrb[0].mxu0 %v896
      %v982 = vpop.f32.mrb[0].mxu0
      %v983 = vadd.f32 0.0, %v982
      %v984 = vpop.f32.mrb[0].mxu0
      %v985 = vpop.f32.mrb[0].mxu0
      %v986 = vpop.f32.mrb[0].mxu0
      %987 = vdwg.mxu0
      %v988 = vadd.f32 %v881, %v942
      %v989 = vadd.f32 %v882, %v944
      %v990 = vadd.f32 %v883, %v983
      %s991 = scalar_lea.vmem %s1, 24
      %v992 = vld [vmem:[%s991] sm:$0xf]
      %993 = vrot.lane.b32.xlu0 %v363, 92
      %v994 = vpop.permute.xlu0 %993
      %995 = vrot.lane.b32.xlu0 %v364, 92
      %v996 = vpop.permute.xlu0 %995
      %997 = vrot.lane.b32.xlu0 %v365, 92
      %v998 = vpop.permute.xlu0 %997
      %vm999 = vcmask 752640
      %v1000 = vsel %vm999, %v994, %v996
      %v1001 = vsel %vm999, %v996, %v998
      %v1003 = vsel %vm375, %v992, 0
      %v1006 = vsel %vm379, %v1000, 0
      %v1009 = vsel %vm379, %v1001, 0
      %v1012 = vsel %vm379, %v998, 0
      %1014 = vmatprep.subr.bf16.mxu0 %v1009
      %1015 = vmatpush1.bf16.msra.mxu0 %v1006
      %1016 = vmatprep.subr.bf16.mxu0 0
      %1017 = vmatpush1.bf16.msra.mxu0 0
      %1018 = vmatprep.subr.bf16.mxu0 0
      %1019 = vmatpush1.bf16.msra.mxu0 0
      %1020 = vmatprep.subr.bf16.mxu0 0
      %1021 = vmatpush1.bf16.msra.mxu0 0
      %1022 = vmatprep.subr.bf16.mxu0 0
      %1023 = vmatpush1.bf16.msra.mxu0 0
      %1024 = vmatprep.subr.bf16.mxu0 0
      %1025 = vmatpush1.bf16.msra.mxu0 0
      %1026 = vmatprep.subr.bf16.mxu0 0
      %1027 = vmatpush1.bf16.msra.mxu0 0
      %1028 = vmatprep.subr.bf16.mxu0 0
      %1029 = vmatpush1.bf16.msra.mxu0 0
      %1030 = vmatprep.subr.bf16.mxu0 0
      %1031 = vmatpush1.bf16.msra.mxu0 0
      %1032 = vmatprep.subr.bf16.mxu0 0
      %1033 = vmatpush1.bf16.msra.mxu0 0
      %1034 = vmatprep.subr.bf16.mxu0 0
      %1035 = vmatpush1.bf16.msra.mxu0 0
      %1036 = vmatprep.subr.bf16.mxu0 0
      %1037 = vmatpush1.bf16.msra.mxu0 0
      %1038 = vmatprep.subr.bf16.mxu0 0
      %1039 = vmatpush1.bf16.msra.mxu0 0
      %1040 = vmatprep.subr.bf16.mxu0 0
      %1041 = vmatpush1.bf16.msra.mxu0 0
      %1042 = vmatprep.subr.bf16.mxu0 0
      %1043 = vmatpush1.bf16.msra.mxu0 0
      %1044 = vmatprep.subr.bf16.mxu0 0
      %1045 = vmatpush1.bf16.msra.mxu0 0
      %1046 = vmatprep.mubr.bf16.mxu0 0
      %1047 = vmatmul.mubr.bf16.gmra.mrb[0].mxu0 %v1003
      %v1048 = vpop.f32.mrb[0].mxu0
      %v1049 = vadd.f32 0.0, %v1048
      %v1050 = vpop.f32.mrb[0].mxu0
      %v1051 = vadd.f32 0.0, %v1050
      %v1052 = vpop.f32.mrb[0].mxu0
      %v1053 = vpop.f32.mrb[0].mxu0
      %1054 = vdwg.mxu0
      %1055 = vmatprep.subr.bf16.mxu0 0
      %1056 = vmatpush1.bf16.msra.mxu0 %v1012
      %1057 = vmatprep.subr.bf16.mxu0 0
      %1058 = vmatpush1.bf16.msra.mxu0 0
      %1059 = vmatprep.subr.bf16.mxu0 0
      %1060 = vmatpush1.bf16.msra.mxu0 0
      %1061 = vmatprep.subr.bf16.mxu0 0
      %1062 = vmatpush1.bf16.msra.mxu0 0
      %1063 = vmatprep.subr.bf16.mxu0 0
      %1064 = vmatpush1.bf16.msra.mxu0 0
      %1065 = vmatprep.subr.bf16.mxu0 0
      %1066 = vmatpush1.bf16.msra.mxu0 0
      %1067 = vmatprep.subr.bf16.mxu0 0
      %1068 = vmatpush1.bf16.msra.mxu0 0
      %1069 = vmatprep.subr.bf16.mxu0 0
      %1070 = vmatpush1.bf16.msra.mxu0 0
      %1071 = vmatprep.subr.bf16.mxu0 0
      %1072 = vmatpush1.bf16.msra.mxu0 0
      %1073 = vmatprep.subr.bf16.mxu0 0
      %1074 = vmatpush1.bf16.msra.mxu0 0
      %1075 = vmatprep.subr.bf16.mxu0 0
      %1076 = vmatpush1.bf16.msra.mxu0 0
      %1077 = vmatprep.subr.bf16.mxu0 0
      %1078 = vmatpush1.bf16.msra.mxu0 0
      %1079 = vmatprep.subr.bf16.mxu0 0
      %1080 = vmatpush1.bf16.msra.mxu0 0
      %1081 = vmatprep.subr.bf16.mxu0 0
      %1082 = vmatpush1.bf16.msra.mxu0 0
      %1083 = vmatprep.subr.bf16.mxu0 0
      %1084 = vmatpush1.bf16.msra.mxu0 0
      %1085 = vmatprep.subr.bf16.mxu0 0
      %1086 = vmatpush1.bf16.msra.mxu0 0
      %1087 = vmatprep.mubr.bf16.mxu0 0
      %1088 = vmatmul.mubr.bf16.gmra.mrb[0].mxu0 %v1003
      %v1089 = vpop.f32.mrb[0].mxu0
      %v1090 = vadd.f32 0.0, %v1089
      %v1091 = vpop.f32.mrb[0].mxu0
      %v1092 = vpop.f32.mrb[0].mxu0
      %v1093 = vpop.f32.mrb[0].mxu0
      %1094 = vdwg.mxu0
      %v1095 = vadd.f32 %v988, %v1049
      %v1096 = vadd.f32 %v989, %v1051
      %v1097 = vadd.f32 %v990, %v1090
      %s1098 = scalar_lea.vmem %s1, 28
      %v1099 = vld [vmem:[%s1098] sm:$0xf]
      %1100 = vrot.lane.b32.xlu0 %v363, 91
      %v1101 = vpop.permute.xlu0 %1100
      %1102 = vrot.lane.b32.xlu0 %v364, 91
      %v1103 = vpop.permute.xlu0 %1102
      %1104 = vrot.lane.b32.xlu0 %v365, 91
      %v1105 = vpop.permute.xlu0 %1104
      %vm1106 = vcmask 744448
      %v1107 = vsel %vm1106, %v1101, %v1103
      %v1108 = vsel %vm1106, %v1103, %v1105
      %v1110 = vsel %vm375, %v1099, 0
      %v1113 = vsel %vm379, %v1107, 0
      %v1116 = vsel %vm379, %v1108, 0
      %v1119 = vsel %vm379, %v1105, 0
      %1121 = vmatprep.subr.bf16.mxu0 %v1116
      %1122 = vmatpush1.bf16.msra.mxu0 %v1113
      %1123 = vmatprep.subr.bf16.mxu0 0
      %1124 = vmatpush1.bf16.msra.mxu0 0
      %1125 = vmatprep.subr.bf16.mxu0 0
      %1126 = vmatpush1.bf16.msra.mxu0 0
      %1127 = vmatprep.subr.bf16.mxu0 0
      %1128 = vmatpush1.bf16.msra.mxu0 0
      %1129 = vmatprep.subr.bf16.mxu0 0
      %1130 = vmatpush1.bf16.msra.mxu0 0
      %1131 = vmatprep.subr.bf16.mxu0 0
      %1132 = vmatpush1.bf16.msra.mxu0 0
      %1133 = vmatprep.subr.bf16.mxu0 0
      %1134 = vmatpush1.bf16.msra.mxu0 0
      %1135 = vmatprep.subr.bf16.mxu0 0
      %1136 = vmatpush1.bf16.msra.mxu0 0
      %1137 = vmatprep.subr.bf16.mxu0 0
      %1138 = vmatpush1.bf16.msra.mxu0 0
      %1139 = vmatprep.subr.bf16.mxu0 0
      %1140 = vmatpush1.bf16.msra.mxu0 0
      %1141 = vmatprep.subr.bf16.mxu0 0
      %1142 = vmatpush1.bf16.msra.mxu0 0
      %1143 = vmatprep.subr.bf16.mxu0 0
      %1144 = vmatpush1.bf16.msra.mxu0 0
      %1145 = vmatprep.subr.bf16.mxu0 0
      %1146 = vmatpush1.bf16.msra.mxu0 0
      %1147 = vmatprep.subr.bf16.mxu0 0
      %1148 = vmatpush1.bf16.msra.mxu0 0
      %1149 = vmatprep.subr.bf16.mxu0 0
      %1150 = vmatpush1.bf16.msra.mxu0 0
      %1151 = vmatprep.subr.bf16.mxu0 0
      %1152 = vmatpush1.bf16.msra.mxu0 0
      %1153 = vmatprep.mubr.bf16.mxu0 0
      %1154 = vmatmul.mubr.bf16.gmra.mrb[0].mxu0 %v1110
      %v1155 = vpop.f32.mrb[0].mxu0
      %v1156 = vadd.f32 0.0, %v1155
      %v1157 = vpop.f32.mrb[0].mxu0
      %v1158 = vadd.f32 0.0, %v1157
      %v1159 = vpop.f32.mrb[0].mxu0
      %v1160 = vpop.f32.mrb[0].mxu0
      %1161 = vdwg.mxu0
      %1162 = vmatprep.subr.bf16.mxu0 0
      %1163 = vmatpush1.bf16.msra.mxu0 %v1119
      %1164 = vmatprep.subr.bf16.mxu0 0
      %1165 = vmatpush1.bf16.msra.mxu0 0
      %1166 = vmatprep.subr.bf16.mxu0 0
      %1167 = vmatpush1.bf16.msra.mxu0 0
      %1168 = vmatprep.subr.bf16.mxu0 0
      %1169 = vmatpush1.bf16.msra.mxu0 0
      %1170 = vmatprep.subr.bf16.mxu0 0
      %1171 = vmatpush1.bf16.msra.mxu0 0
      %1172 = vmatprep.subr.bf16.mxu0 0
      %1173 = vmatpush1.bf16.msra.mxu0 0
      %1174 = vmatprep.subr.bf16.mxu0 0
      %1175 = vmatpush1.bf16.msra.mxu0 0
      %1176 = vmatprep.subr.bf16.mxu0 0
      %1177 = vmatpush1.bf16.msra.mxu0 0
      %1178 = vmatprep.subr.bf16.mxu0 0
      %1179 = vmatpush1.bf16.msra.mxu0 0
      %1180 = vmatprep.subr.bf16.mxu0 0
      %1181 = vmatpush1.bf16.msra.mxu0 0
      %1182 = vmatprep.subr.bf16.mxu0 0
      %1183 = vmatpush1.bf16.msra.mxu0 0
      %1184 = vmatprep.subr.bf16.mxu0 0
      %1185 = vmatpush1.bf16.msra.mxu0 0
      %1186 = vmatprep.subr.bf16.mxu0 0
      %1187 = vmatpush1.bf16.msra.mxu0 0
      %1188 = vmatprep.subr.bf16.mxu0 0
      %1189 = vmatpush1.bf16.msra.mxu0 0
      %1190 = vmatprep.subr.bf16.mxu0 0
      %1191 = vmatpush1.bf16.msra.mxu0 0
      %1192 = vmatprep.subr.bf16.mxu0 0
      %1193 = vmatpush1.bf16.msra.mxu0 0
      %1194 = vmatprep.mubr.bf16.mxu0 0
      %1195 = vmatmul.mubr.bf16.gmra.mrb[0].mxu0 %v1110
      %v1196 = vpop.f32.mrb[0].mxu0
      %v1197 = vadd.f32 0.0, %v1196
      %v1198 = vpop.f32.mrb[0].mxu0
      %v1199 = vpop.f32.mrb[0].mxu0
      %v1200 = vpop.f32.mrb[0].mxu0
      %1201 = vdwg.mxu0
      %v1202 = vadd.f32 %v1095, %v1156
      %v1203 = vadd.f32 %v1096, %v1158
      %v1204 = vadd.f32 %v1097, %v1197
      %s1205 = scalar_lea.vmem %s1, 32
      %v1206 = vld [vmem:[%s1205] sm:$0xf]
      %1207 = vrot.lane.b32.xlu0 %v363, 90
      %v1208 = vpop.permute.xlu0 %1207
      %1209 = vrot.lane.b32.xlu0 %v364, 90
      %v1210 = vpop.permute.xlu0 %1209
      %1211 = vrot.lane.b32.xlu0 %v365, 90
      %v1212 = vpop.permute.xlu0 %1211
      %vm1213 = vcmask 736256
      %v1214 = vsel %vm1213, %v1208, %v1210
      %v1215 = vsel %vm1213, %v1210, %v1212
      %v1217 = vsel %vm375, %v1206, 0
      %v1220 = vsel %vm379, %v1214, 0
      %v1223 = vsel %vm379, %v1215, 0
      %v1226 = vsel %vm379, %v1212, 0
      %1228 = vmatprep.subr.bf16.mxu0 %v1223
      %1229 = vmatpush1.bf16.msra.mxu0 %v1220
      %1230 = vmatprep.subr.bf16.mxu0 0
      %1231 = vmatpush1.bf16.msra.mxu0 0
      %1232 = vmatprep.subr.bf16.mxu0 0
      %1233 = vmatpush1.bf16.msra.mxu0 0
      %1234 = vmatprep.subr.bf16.mxu0 0
      %1235 = vmatpush1.bf16.msra.mxu0 0
      %1236 = vmatprep.subr.bf16.mxu0 0
      %1237 = vmatpush1.bf16.msra.mxu0 0
      %1238 = vmatprep.subr.bf16.mxu0 0
      %1239 = vmatpush1.bf16.msra.mxu0 0
      %1240 = vmatprep.subr.bf16.mxu0 0
      %1241 = vmatpush1.bf16.msra.mxu0 0
      %1242 = vmatprep.subr.bf16.mxu0 0
      %1243 = vmatpush1.bf16.msra.mxu0 0
      %1244 = vmatprep.subr.bf16.mxu0 0
      %1245 = vmatpush1.bf16.msra.mxu0 0
      %1246 = vmatprep.subr.bf16.mxu0 0
      %1247 = vmatpush1.bf16.msra.mxu0 0
      %1248 = vmatprep.subr.bf16.mxu0 0
      %1249 = vmatpush1.bf16.msra.mxu0 0
      %1250 = vmatprep.subr.bf16.mxu0 0
      %1251 = vmatpush1.bf16.msra.mxu0 0
      %1252 = vmatprep.subr.bf16.mxu0 0
      %1253 = vmatpush1.bf16.msra.mxu0 0
      %1254 = vmatprep.subr.bf16.mxu0 0
      %1255 = vmatpush1.bf16.msra.mxu0 0
      %1256 = vmatprep.subr.bf16.mxu0 0
      %1257 = vmatpush1.bf16.msra.mxu0 0
      %1258 = vmatprep.subr.bf16.mxu0 0
      %1259 = vmatpush1.bf16.msra.mxu0 0
      %1260 = vmatprep.mubr.bf16.mxu0 0
      %1261 = vmatmul.mubr.bf16.gmra.mrb[0].mxu0 %v1217
      %v1262 = vpop.f32.mrb[0].mxu0
      %v1263 = vadd.f32 0.0, %v1262
      %v1264 = vpop.f32.mrb[0].mxu0
      %v1265 = vadd.f32 0.0, %v1264
      %v1266 = vpop.f32.mrb[0].mxu0
      %v1267 = vpop.f32.mrb[0].mxu0
      %1268 = vdwg.mxu0
      %1269 = vmatprep.subr.bf16.mxu0 0
      %1270 = vmatpush1.bf16.msra.mxu0 %v1226
      %1271 = vmatprep.subr.bf16.mxu0 0
      %1272 = vmatpush1.bf16.msra.mxu0 0
      %1273 = vmatprep.subr.bf16.mxu0 0
      %1274 = vmatpush1.bf16.msra.mxu0 0
      %1275 = vmatprep.subr.bf16.mxu0 0
      %1276 = vmatpush1.bf16.msra.mxu0 0
      %1277 = vmatprep.subr.bf16.mxu0 0
      %1278 = vmatpush1.bf16.msra.mxu0 0
      %1279 = vmatprep.subr.bf16.mxu0 0
      %1280 = vmatpush1.bf16.msra.mxu0 0
      %1281 = vmatprep.subr.bf16.mxu0 0
      %1282 = vmatpush1.bf16.msra.mxu0 0
      %1283 = vmatprep.subr.bf16.mxu0 0
      %1284 = vmatpush1.bf16.msra.mxu0 0
      %1285 = vmatprep.subr.bf16.mxu0 0
      %1286 = vmatpush1.bf16.msra.mxu0 0
      %1287 = vmatprep.subr.bf16.mxu0 0
      %1288 = vmatpush1.bf16.msra.mxu0 0
      %1289 = vmatprep.subr.bf16.mxu0 0
      %1290 = vmatpush1.bf16.msra.mxu0 0
      %1291 = vmatprep.subr.bf16.mxu0 0
      %1292 = vmatpush1.bf16.msra.mxu0 0
      %1293 = vmatprep.subr.bf16.mxu0 0
      %1294 = vmatpush1.bf16.msra.mxu0 0
      %1295 = vmatprep.subr.bf16.mxu0 0
      %1296 = vmatpush1.bf16.msra.mxu0 0
      %1297 = vmatprep.subr.bf16.mxu0 0
      %1298 = vmatpush1.bf16.msra.mxu0 0
      %1299 = vmatprep.subr.bf16.mxu0 0
      %1300 = vmatpush1.bf16.msra.mxu0 0
      %1301 = vmatprep.mubr.bf16.mxu0 0
      %1302 = vmatmul.mubr.bf16.gmra.mrb[0].mxu0 %v1217
      %v1303 = vpop.f32.mrb[0].mxu0
      %v1304 = vadd.f32 0.0, %v1303
      %v1305 = vpop.f32.mrb[0].mxu0
      %v1306 = vpop.f32.mrb[0].mxu0
      %v1307 = vpop.f32.mrb[0].mxu0
      %1308 = vdwg.mxu0
      %v1309 = vadd.f32 %v1202, %v1263
      %v1310 = vadd.f32 %v1203, %v1265
      %v1311 = vadd.f32 %v1204, %v1304
      %1312 = vst [vmem:[%s219] sm:$0xff] %v1309
      %1313 = vst [vmem:[%s219 + $0x8] sm:$0xff] %v1310
      %vm1314 = vcmask 261120
      %1315 = vst.msk [vmem:[%s219 + $0x10] sm:$0xff] %vm1314, %v1311
      %v1316 = vld [vmem:[%s2] sm:$0x7]
      %v1318 = vlaneseq
      %v1319 = vshrl.u32 %v1318, 7
      %v1320 = vsub.s32 0, %v1319
      %v1321 = vrot.slane %v1316, %v1320
      %v1322 = vlaneseq
      %v1323 = vshrl.u32 %v1322, 7
      %v1324 = vsub.s32 1, %v1323
      %v1325 = vrot.slane %v1316, %v1324
      %v1326 = vlaneseq
      %v1327 = vshrl.u32 %v1326, 7
      %v1328 = vsub.s32 2, %v1327
      %v1329 = vrot.slane %v1316, %v1328
      %v1333 = vmul.f32 %v1309, %v1321
      %v1334 = vmul.f32 %v1310, %v1325
      %v1335 = vmul.f32 %v1311, %v1329
      %v1336 = vld [vmem:[%s4] sm:$0xff]
      %v1337 = vadd.f32 %v1333, %v1334
      %v1338 = vsel %vm1314, %v1335, 0.0
      %v1339 = vadd.f32 %v1337, %v1338
      %1340 = vadd.xlane.f32.xlu0 %v1339
      %v1341 = vpop.xlane.xlu0 %1340
      %v1342 = vadd.f32 %v1336, %v1341
      %vm1343 = vcmask 7168
      %1344 = vst.msk [vmem:[%s4] sm:$0xff] %vm1343, %v1342
      %v1345 = vld [vmem:[%s5] sm:$0xff]
      %v1346 = vmul.f32 %v1333, %v1333
      %v1347 = vmul.f32 %v1334, %v1334
      %v1348 = vmul.f32 %v1335, %v1335
      %v1349 = vadd.f32 %v1346, %v1347
      %v1350 = vsel %vm1314, %v1348, 0.0
      %v1351 = vadd.f32 %v1349, %v1350
      %1352 = vadd.xlane.f32.xlu0 %v1351
      %v1353 = vpop.xlane.xlu0 %1352
      %v1354 = vadd.f32 %v1345, %v1353
      %1355 = vst.msk [vmem:[%s5] sm:$0xff] %vm1343, %v1354
      %p1356 = scmp.lt.s32.totalorder %s17, 1
      %s1357 = scalar_select %p1356, %s17, 1
      %s1358 = smul.addr %s1357, 3
      %s1359 = smul.addr %s1358, 8
      %s1360 = scalar_lea.vmem %s3, %s1359
      // Predicated region
      $region37: #{residual_block_forward.3} parent=31 // pred_check
        %p1361 = pneg %p103
      $region38: #{residual_block_forward.3} parent=31 // pred_check_branch
        %1363 = sbr.rel (%p1361) target = $region40
      $region39: #{residual_block_forward.3} parent=31 // pred_region
        _
      $region40: #{residual_block_forward.3} parent=31 // pred_fallthru
        _
      // Predicated region
      $region41: #{residual_block_forward.3} parent=31 // pred_check
        %p1364 = pneg %p124
      $region42: #{residual_block_forward.3} parent=31 // pred_check_branch
        %1366 = sbr.rel (%p1364) target = $region44
      $region43: #{residual_block_forward.3} parent=31 // pred_region
        _
      $region44: #{residual_block_forward.3} parent=31 // pred_fallthru
        _
      // Predicated region
      $region45: #{residual_block_forward.3} parent=31 // pred_check
        %p1367 = pneg %p145
      $region46: #{residual_block_forward.3} parent=31 // pred_check_branch
        %1369 = sbr.rel (%p1367) target = $region48
      $region47: #{residual_block_forward.3} parent=31 // pred_region
        _
      $region48: #{residual_block_forward.3} parent=31 // pred_fallthru
        _
      // Predicated region
      $region49: #{residual_block_forward.3} parent=31 // pred_check
        %p1370 = pneg %p124
      $region50: #{residual_block_forward.3} parent=31 // pred_check_branch
        %1372 = sbr.rel (%p1370) target = $region52
      $region51: #{residual_block_forward.3} parent=31 // pred_region
        _
      $region52: #{residual_block_forward.3} parent=31 // pred_fallthru
        _
      // Predicated region
      $region53: #{residual_block_forward.3} parent=31 // pred_check
        %p1373 = pneg %p145
      $region54: #{residual_block_forward.3} parent=31 // pred_check_branch
        %1375 = sbr.rel (%p1373) target = $region56
      $region55: #{residual_block_forward.3} parent=31 // pred_region
        _
      $region56: #{residual_block_forward.3} parent=31 // pred_fallthru
        _
    $region32: #{residual_block_forward.3} parent=5 // pred_fallthru
      _
    %p1376 = scmp.le.s32.totalorder 2, %s12
    // Predicated region
    $region57: #{residual_block_forward.3} parent=5 // pred_check
      %p1377 = pneg %p1376
    $region58: #{residual_block_forward.3} parent=5 // pred_check_branch
      %1379 = sbr.rel (%p1377) target = $region60
    $region59: #{residual_block_forward.3} parent=5 // pred_region
      %s1380 = ssub.s32 %s12, 2
      // Predicated region
      $region61: #{residual_block_forward.3} parent=59 // pred_check
        %p1381 = pneg %p109
      $region62: #{residual_block_forward.3} parent=59 // pred_check_branch
        %1383 = sbr.rel (%p1381) target = $region64
      $region63: #{residual_block_forward.3} parent=59 // pred_region
        %p1384 = scmp.lt.s32.totalorder %s18, 1
        %s1385 = scalar_select %p1384, %s18, 1
        %s1386 = smul.addr %s1385, 3
        %s1387 = smul.addr %s1386, 8
        %s1388 = scalar_lea.vmem %s3, %s1387
      $region64: #{residual_block_forward.3} parent=59 // pred_fallthru
        _
    $region60: #{residual_block_forward.3} parent=5 // pred_fallthru
      _
  $region6: #{residual_block_forward.3} parent=0 // loop_footer
    %s16 = sadd.s32 1, %s12
  $region7: #{residual_block_forward.3} parent=0 // loop_footer_branch
    %11 = sbr.rel target = $region3
  $region8: #{residual_block_forward.3} parent=0 // loop_exit
    _

</llo_original>
